<compile_context>
chip_gen: v6e
topology: v6e:2x2x1
jax: 0.10.0
libtpu: 0.0.40
codegen_flags: <defaults>
</compile_context>

<pallas_src>
import functools
import math

import jax
import jax.numpy as jnp
from jax.experimental import pallas as pl
from jax.experimental.pallas import tpu as pltpu

# ----------------- small-BERT config (shapes implied by the module) ---------
VOCAB = 128
MAX_POS = 32
HIDDEN = 32
HEADS = 4
HEAD_DIM = HIDDEN // HEADS
INTERMEDIATE = 64
LAYERS = 2
NUM_CLASSES = 8
EPS = 1e-12

BATCH = 2
SEQ = 8


def _vmem():
    return pl.BlockSpec(memory_space=pltpu.MemorySpace.VMEM)


# ----------------------------- fused Pallas kernel ----------------------------
def _bert_fused_kernel(emb_ref, mask_ref,
                       emb_g_ref, emb_b_ref,
                       wqkv_ref, bqkv_ref, wo_ref, bo_ref,
                       ln1g_ref, ln1b_ref,
                       w1_ref, b1_ref, w2_ref, b2_ref,
                       ln2g_ref, ln2b_ref,
                       poolw_ref, poolb_ref, clsw_ref, clsb_ref,
                       out_ref, *, batch, seq):
    scale = 1.0 / math.sqrt(HEAD_DIM)

    def mm(a, w):
        # bf16 MXU operands, f32 accumulation.
        return jnp.dot(a.astype(jnp.bfloat16), w.astype(jnp.bfloat16),
                       preferred_element_type=jnp.float32)

    def ln(x, g, b):
        mean = jnp.mean(x, axis=-1, keepdims=True)
        xc = x - mean
        var = jnp.mean(xc * xc, axis=-1, keepdims=True)
        return xc * jax.lax.rsqrt(var + EPS) * g + b

    def gelu(x):
        # TODO(synk): HF BERT uses exact erf-GELU; tanh approximation used here.
        c = math.sqrt(2.0 / math.pi)
        return 0.5 * x * (1.0 + jnp.tanh(c * (x + 0.044715 * x * x * x)))

    # additive attention mask built in-kernel: [B, S] f32
    mask_add = (1.0 - mask_ref[...]) * -10000.0

    # embedding layernorm
    x = ln(emb_ref[...], emb_g_ref[...], emb_b_ref[...])          # [B*S, H] f32

    for l in range(LAYERS):
        # ---- fused Q/K/V projection: one [B*S, 3H] matmul ----
        qkv = mm(x, wqkv_ref[l]) + bqkv_ref[l]                    # [B*S, 3H]

        # ---- multi-head attention, all in VMEM/vregs ----
        ctx_rows = []
        for b in range(batch):
            r0, r1 = b * seq, (b + 1) * seq
            m_b = mask_add[b:b + 1, :]                            # [1, S]
            heads = []
            for h in range(HEADS):
                c0 = h * HEAD_DIM
                q = qkv[r0:r1, c0:c0 + HEAD_DIM]                  # [S, Dh]
                k = qkv[r0:r1, HIDDEN + c0:HIDDEN + c0 + HEAD_DIM]
                v = qkv[r0:r1, 2 * HIDDEN + c0:2 * HIDDEN + c0 + HEAD_DIM]
                # scores: contract q/k over head_dim (q @ k^T), f32
                s = jax.lax.dot_general(
                    q, k, (((1,), (1,)), ((), ())),
                    preferred_element_type=jnp.float32) * scale   # [S, S]
                s = s + m_b
                s = s - jnp.max(s, axis=-1, keepdims=True)
                p = jnp.exp(s)
                denom = jnp.sum(p, axis=-1, keepdims=True)
                p = p * pl.reciprocal(denom, approx=True)
                heads.append(jnp.dot(p, v,
                                     preferred_element_type=jnp.float32))
            ctx_rows.append(jnp.concatenate(heads, axis=-1))      # [S, H]
        ctx = jnp.concatenate(ctx_rows, axis=0)                   # [B*S, H]

        # ---- output projection + residual + LN (fused) ----
        attn_out = mm(ctx, wo_ref[l]) + bo_ref[l]
        x = ln(attn_out + x, ln1g_ref[l], ln1b_ref[l])

        # ---- FFN + residual + LN (fused) ----
        ffn = gelu(mm(x, w1_ref[l]) + b1_ref[l])
        ffn = mm(ffn, w2_ref[l]) + b2_ref[l]
        x = ln(ffn + x, ln2g_ref[l], ln2b_ref[l])

    # ---- pooler on the [CLS] (first) token of each sequence, in VMEM ----
    cls_rows = jnp.concatenate(
        [x[b * seq:b * seq + 1, :] for b in range(batch)], axis=0)  # [B, H]
    pooled = jnp.tanh(mm(cls_rows, poolw_ref[...]) + poolb_ref[...])

    # ---- classification head ----
    logits = mm(pooled, clsw_ref[...]) + clsb_ref[...]              # [B, C]
    out_ref[...] = logits.astype(out_ref.dtype)


# ----------------------------- parameters ------------------------------------
def init_params(key):
    def nrm(k, shape):
        return 0.02 * jax.random.normal(k, shape, jnp.float32)

    keys = iter(jax.random.split(key, 32))
    L = LAYERS
    p = {
        "word_emb": nrm(next(keys), (VOCAB, HIDDEN)),
        "pos_emb": nrm(next(keys), (MAX_POS, HIDDEN)),
        "type_emb": nrm(next(keys), (2, HIDDEN)),
        "emb_ln_g": jnp.ones((HIDDEN,), jnp.float32),
        "emb_ln_b": jnp.zeros((HIDDEN,), jnp.float32),
        # stacked per-layer params; matmul weights stored bf16 (MXU operands)
        "wqkv": nrm(next(keys), (L, HIDDEN, 3 * HIDDEN)).astype(jnp.bfloat16),
        "bqkv": jnp.zeros((L, 1, 3 * HIDDEN), jnp.float32),
        "wo": nrm(next(keys), (L, HIDDEN, HIDDEN)).astype(jnp.bfloat16),
        "bo": jnp.zeros((L, 1, HIDDEN), jnp.float32),
        "ln1_g": jnp.ones((L, 1, HIDDEN), jnp.float32),
        "ln1_b": jnp.zeros((L, 1, HIDDEN), jnp.float32),
        "w1": nrm(next(keys), (L, HIDDEN, INTERMEDIATE)).astype(jnp.bfloat16),
        "b1": jnp.zeros((L, 1, INTERMEDIATE), jnp.float32),
        "w2": nrm(next(keys), (L, INTERMEDIATE, HIDDEN)).astype(jnp.bfloat16),
        "b2": jnp.zeros((L, 1, HIDDEN), jnp.float32),
        "ln2_g": jnp.ones((L, 1, HIDDEN), jnp.float32),
        "ln2_b": jnp.zeros((L, 1, HIDDEN), jnp.float32),
        "pool_w": nrm(next(keys), (HIDDEN, HIDDEN)).astype(jnp.bfloat16),
        "pool_b": jnp.zeros((HIDDEN,), jnp.float32),
        "cls_w": nrm(next(keys), (HIDDEN, NUM_CLASSES)).astype(jnp.bfloat16),
        "cls_b": jnp.zeros((NUM_CLASSES,), jnp.float32),
    }
    return p


# ----------------------------- model forward ---------------------------------
def classification_model(params, input_ids, attention_mask):
    B, S = input_ids.shape
    # ---- embeddings (gather = plain-JAX glue) ----
    # TODO(synk): token_type hard-coded to type 0 (matches default BertModel call).
    emb = (jnp.take(params["word_emb"], input_ids, axis=0)
           + params["pos_emb"][:S][None, :, :]
           + params["type_emb"][0][None, None, :]).reshape(B * S, HIDDEN)
    mask_f = attention_mask.astype(jnp.float32)

    kernel = functools.partial(_bert_fused_kernel, batch=B, seq=S)
    return pl.pallas_call(
        kernel,
        out_shape=jax.ShapeDtypeStruct((B, NUM_CLASSES), jnp.float32),
        in_specs=[_vmem()] * 20,
        out_specs=_vmem(),
    )(emb, mask_f,
      params["emb_ln_g"].reshape(1, HIDDEN), params["emb_ln_b"].reshape(1, HIDDEN),
      params["wqkv"], params["bqkv"], params["wo"], params["bo"],
      params["ln1_g"], params["ln1_b"],
      params["w1"], params["b1"], params["w2"], params["b2"],
      params["ln2_g"], params["ln2_b"],
      params["pool_w"], params["pool_b"].reshape(1, HIDDEN),
      params["cls_w"], params["cls_b"].reshape(1, NUM_CLASSES))


# ----------------------------- main -------------------------------------------
if __name__ == "__main__":
    key = jax.random.PRNGKey(0)
    k_param, k_ids = jax.random.split(key)
    params = init_params(k_param)

    input_ids = jax.random.randint(k_ids, (BATCH, SEQ), 0, VOCAB, jnp.int32)
    attention_mask = jnp.ones((BATCH, SEQ), jnp.int32)

    logits = jax.jit(classification_model)(params, input_ids, attention_mask)
    logits = jax.block_until_ready(logits)
    assert logits.shape == (BATCH, NUM_CLASSES)
    assert bool(jnp.all(jnp.isfinite(logits)))
    print("KERNEL_OK")
</pallas_src>

<mosaic_0001>
module attributes {stable_mosaic.version = 11 : i64} {
  func.func @_bert_fused_kernel(%arg0: memref<16x32xf32, #tpu.memory_space<vmem>>, %arg1: memref<2x8xf32, #tpu.memory_space<vmem>>, %arg2: memref<1x32xf32, #tpu.memory_space<vmem>>, %arg3: memref<1x32xf32, #tpu.memory_space<vmem>>, %arg4: memref<2x32x96xbf16, #tpu.memory_space<vmem>>, %arg5: memref<2x1x96xf32, #tpu.memory_space<vmem>>, %arg6: memref<2x32x32xbf16, #tpu.memory_space<vmem>>, %arg7: memref<2x1x32xf32, #tpu.memory_space<vmem>>, %arg8: memref<2x1x32xf32, #tpu.memory_space<vmem>>, %arg9: memref<2x1x32xf32, #tpu.memory_space<vmem>>, %arg10: memref<2x32x64xbf16, #tpu.memory_space<vmem>>, %arg11: memref<2x1x64xf32, #tpu.memory_space<vmem>>, %arg12: memref<2x64x32xbf16, #tpu.memory_space<vmem>>, %arg13: memref<2x1x32xf32, #tpu.memory_space<vmem>>, %arg14: memref<2x1x32xf32, #tpu.memory_space<vmem>>, %arg15: memref<2x1x32xf32, #tpu.memory_space<vmem>>, %arg16: memref<32x32xbf16, #tpu.memory_space<vmem>>, %arg17: memref<1x32xf32, #tpu.memory_space<vmem>>, %arg18: memref<32x8xbf16, #tpu.memory_space<vmem>>, %arg19: memref<1x8xf32, #tpu.memory_space<vmem>>, %arg20: memref<2x8xf32, #tpu.memory_space<vmem>>) attributes {dimension_semantics = [], scalar_prefetch = 0 : i64, scratch_operands = 0 : i64, tpu.core_type = #tpu.core_type<tc>} {
    %c0 = arith.constant 0 : index
    %c0_0 = arith.constant 0 : index
    %0 = vector.load %arg1[%c0, %c0_0] : memref<2x8xf32, #tpu.memory_space<vmem>>, vector<2x8xf32>
    %cst = arith.constant 1.000000e+00 : f32
    %1 = vector.broadcast %cst : f32 to vector<2x8xf32>
    %2 = arith.subf %1, %0 : vector<2x8xf32>
    %cst_1 = arith.constant -1.000000e+04 : f32
    %3 = vector.broadcast %cst_1 : f32 to vector<2x8xf32>
    %4 = arith.mulf %2, %3 : vector<2x8xf32>
    %c0_2 = arith.constant 0 : index
    %c0_3 = arith.constant 0 : index
    %5 = vector.load %arg0[%c0_2, %c0_3] : memref<16x32xf32, #tpu.memory_space<vmem>>, vector<16x32xf32>
    %c0_4 = arith.constant 0 : index
    %c0_5 = arith.constant 0 : index
    %6 = vector.load %arg2[%c0_4, %c0_5] : memref<1x32xf32, #tpu.memory_space<vmem>>, vector<1x32xf32>
    %c0_6 = arith.constant 0 : index
    %c0_7 = arith.constant 0 : index
    %7 = vector.load %arg3[%c0_6, %c0_7] : memref<1x32xf32, #tpu.memory_space<vmem>>, vector<1x32xf32>
    %cst_8 = arith.constant dense<0.000000e+00> : vector<16xf32>
    %8 = vector.multi_reduction <add>, %5, %cst_8 [1] : vector<16x32xf32> to vector<16xf32>
    %9 = vector.shape_cast %8 : vector<16xf32> to vector<16x1xf32>
    %cst_9 = arith.constant 3.200000e+01 : f32
    %10 = vector.broadcast %cst_9 : f32 to vector<16x1xf32>
    %11 = arith.divf %9, %10 : vector<16x1xf32>
    %12 = vector.broadcast %11 : vector<16x1xf32> to vector<16x32xf32>
    %13 = arith.subf %5, %12 : vector<16x32xf32>
    %14 = arith.mulf %13, %13 : vector<16x32xf32>
    %cst_10 = arith.constant dense<0.000000e+00> : vector<16xf32>
    %15 = vector.multi_reduction <add>, %14, %cst_10 [1] : vector<16x32xf32> to vector<16xf32>
    %16 = vector.shape_cast %15 : vector<16xf32> to vector<16x1xf32>
    %cst_11 = arith.constant 3.200000e+01 : f32
    %17 = vector.broadcast %cst_11 : f32 to vector<16x1xf32>
    %18 = arith.divf %16, %17 : vector<16x1xf32>
    %cst_12 = arith.constant 9.99999996E-13 : f32
    %19 = vector.broadcast %cst_12 : f32 to vector<16x1xf32>
    %20 = arith.addf %18, %19 : vector<16x1xf32>
    %21 = math.rsqrt %20 : vector<16x1xf32>
    %22 = vector.broadcast %21 : vector<16x1xf32> to vector<16x32xf32>
    %23 = arith.mulf %13, %22 : vector<16x32xf32>
    %24 = vector.broadcast %6 : vector<1x32xf32> to vector<16x32xf32>
    %25 = arith.mulf %23, %24 : vector<16x32xf32>
    %26 = vector.broadcast %7 : vector<1x32xf32> to vector<16x32xf32>
    %27 = arith.addf %25, %26 : vector<16x32xf32>
    %c0_13 = arith.constant 0 : index
    %c0_14 = arith.constant 0 : index
    %c0_15 = arith.constant 0 : index
    %28 = vector.load %arg4[%c0_13, %c0_14, %c0_15] : memref<2x32x96xbf16, #tpu.memory_space<vmem>>, vector<1x32x96xbf16>
    %29 = vector.shape_cast %28 : vector<1x32x96xbf16> to vector<32x96xbf16>
    %30 = arith.truncf %27 : vector<16x32xf32> to vector<16x32xbf16>
    %cst_16 = arith.constant dense<0.000000e+00> : vector<16x96xf32>
    %31 = tpu.matmul %30, %29, %cst_16 {dimension_numbers = #tpu.dot_dimension_numbers<[1], [0], [0], [1], [0, 0, 1, 1], [], []>} : vector<16x32xbf16>, vector<32x96xbf16>, vector<16x96xf32> -> vector<16x96xf32>
    %c0_17 = arith.constant 0 : index
    %c0_18 = arith.constant 0 : index
    %c0_19 = arith.constant 0 : index
    %32 = vector.load %arg5[%c0_17, %c0_18, %c0_19] : memref<2x1x96xf32, #tpu.memory_space<vmem>>, vector<1x1x96xf32>
    %33 = vector.shape_cast %32 : vector<1x1x96xf32> to vector<1x96xf32>
    %34 = vector.broadcast %33 : vector<1x96xf32> to vector<16x96xf32>
    %35 = arith.addf %31, %34 : vector<16x96xf32>
    %36 = vector.extract_strided_slice %4 {offsets = [0, 0], sizes = [1, 8], strides = [1, 1]} : vector<2x8xf32> to vector<1x8xf32>
    %37 = vector.extract_strided_slice %35 {offsets = [0, 0], sizes = [8, 8], strides = [1, 1]} : vector<16x96xf32> to vector<8x8xf32>
    %38 = vector.extract_strided_slice %35 {offsets = [0, 32], sizes = [8, 8], strides = [1, 1]} : vector<16x96xf32> to vector<8x8xf32>
    %39 = vector.extract_strided_slice %35 {offsets = [0, 64], sizes = [8, 8], strides = [1, 1]} : vector<16x96xf32> to vector<8x8xf32>
    %cst_20 = arith.constant dense<0.000000e+00> : vector<8x8xf32>
    %40 = tpu.matmul %37, %38, %cst_20 {dimension_numbers = #tpu.dot_dimension_numbers<[1], [1], [0], [0], [0, 0, 1, 0], [], []>} : vector<8x8xf32>, vector<8x8xf32>, vector<8x8xf32> -> vector<8x8xf32>
    %cst_21 = arith.constant 0.353553385 : f32
    %41 = vector.broadcast %cst_21 : f32 to vector<8x8xf32>
    %42 = arith.mulf %40, %41 : vector<8x8xf32>
    %43 = vector.broadcast %36 : vector<1x8xf32> to vector<8x8xf32>
    %44 = arith.addf %42, %43 : vector<8x8xf32>
    %cst_22 = arith.constant dense<0xFF800000> : vector<8xf32>
    %45 = vector.multi_reduction <maximumf>, %44, %cst_22 [1] : vector<8x8xf32> to vector<8xf32>
    %46 = vector.shape_cast %45 : vector<8xf32> to vector<8x1xf32>
    %47 = vector.broadcast %46 : vector<8x1xf32> to vector<8x8xf32>
    %48 = arith.subf %44, %47 : vector<8x8xf32>
    %49 = math.exp %48 : vector<8x8xf32>
    %cst_23 = arith.constant dense<0.000000e+00> : vector<8xf32>
    %50 = vector.multi_reduction <add>, %49, %cst_23 [1] : vector<8x8xf32> to vector<8xf32>
    %51 = vector.shape_cast %50 : vector<8xf32> to vector<8x1xf32>
    %52 = tpu.reciprocal %51 {approx = true} : vector<8x1xf32> -> vector<8x1xf32>
    %53 = vector.broadcast %52 : vector<8x1xf32> to vector<8x8xf32>
    %54 = arith.mulf %49, %53 : vector<8x8xf32>
    %cst_24 = arith.constant dense<0.000000e+00> : vector<8x8xf32>
    %55 = tpu.matmul %54, %39, %cst_24 {dimension_numbers = #tpu.dot_dimension_numbers<[1], [0], [0], [1], [0, 0, 1, 1], [], []>} : vector<8x8xf32>, vector<8x8xf32>, vector<8x8xf32> -> vector<8x8xf32>
    %56 = vector.extract_strided_slice %35 {offsets = [0, 8], sizes = [8, 8], strides = [1, 1]} : vector<16x96xf32> to vector<8x8xf32>
    %57 = vector.extract_strided_slice %35 {offsets = [0, 40], sizes = [8, 8], strides = [1, 1]} : vector<16x96xf32> to vector<8x8xf32>
    %58 = vector.extract_strided_slice %35 {offsets = [0, 72], sizes = [8, 8], strides = [1, 1]} : vector<16x96xf32> to vector<8x8xf32>
    %cst_25 = arith.constant dense<0.000000e+00> : vector<8x8xf32>
    %59 = tpu.matmul %56, %57, %cst_25 {dimension_numbers = #tpu.dot_dimension_numbers<[1], [1], [0], [0], [0, 0, 1, 0], [], []>} : vector<8x8xf32>, vector<8x8xf32>, vector<8x8xf32> -> vector<8x8xf32>
    %cst_26 = arith.constant 0.353553385 : f32
    %60 = vector.broadcast %cst_26 : f32 to vector<8x8xf32>
    %61 = arith.mulf %59, %60 : vector<8x8xf32>
    %62 = vector.broadcast %36 : vector<1x8xf32> to vector<8x8xf32>
    %63 = arith.addf %61, %62 : vector<8x8xf32>
    %cst_27 = arith.constant dense<0xFF800000> : vector<8xf32>
    %64 = vector.multi_reduction <maximumf>, %63, %cst_27 [1] : vector<8x8xf32> to vector<8xf32>
    %65 = vector.shape_cast %64 : vector<8xf32> to vector<8x1xf32>
    %66 = vector.broadcast %65 : vector<8x1xf32> to vector<8x8xf32>
    %67 = arith.subf %63, %66 : vector<8x8xf32>
    %68 = math.exp %67 : vector<8x8xf32>
    %cst_28 = arith.constant dense<0.000000e+00> : vector<8xf32>
    %69 = vector.multi_reduction <add>, %68, %cst_28 [1] : vector<8x8xf32> to vector<8xf32>
    %70 = vector.shape_cast %69 : vector<8xf32> to vector<8x1xf32>
    %71 = tpu.reciprocal %70 {approx = true} : vector<8x1xf32> -> vector<8x1xf32>
    %72 = vector.broadcast %71 : vector<8x1xf32> to vector<8x8xf32>
    %73 = arith.mulf %68, %72 : vector<8x8xf32>
    %cst_29 = arith.constant dense<0.000000e+00> : vector<8x8xf32>
    %74 = tpu.matmul %73, %58, %cst_29 {dimension_numbers = #tpu.dot_dimension_numbers<[1], [0], [0], [1], [0, 0, 1, 1], [], []>} : vector<8x8xf32>, vector<8x8xf32>, vector<8x8xf32> -> vector<8x8xf32>
    %75 = vector.extract_strided_slice %35 {offsets = [0, 16], sizes = [8, 8], strides = [1, 1]} : vector<16x96xf32> to vector<8x8xf32>
    %76 = vector.extract_strided_slice %35 {offsets = [0, 48], sizes = [8, 8], strides = [1, 1]} : vector<16x96xf32> to vector<8x8xf32>
    %77 = vector.extract_strided_slice %35 {offsets = [0, 80], sizes = [8, 8], strides = [1, 1]} : vector<16x96xf32> to vector<8x8xf32>
    %cst_30 = arith.constant dense<0.000000e+00> : vector<8x8xf32>
    %78 = tpu.matmul %75, %76, %cst_30 {dimension_numbers = #tpu.dot_dimension_numbers<[1], [1], [0], [0], [0, 0, 1, 0], [], []>} : vector<8x8xf32>, vector<8x8xf32>, vector<8x8xf32> -> vector<8x8xf32>
    %cst_31 = arith.constant 0.353553385 : f32
    %79 = vector.broadcast %cst_31 : f32 to vector<8x8xf32>
    %80 = arith.mulf %78, %79 : vector<8x8xf32>
    %81 = vector.broadcast %36 : vector<1x8xf32> to vector<8x8xf32>
    %82 = arith.addf %80, %81 : vector<8x8xf32>
    %cst_32 = arith.constant dense<0xFF800000> : vector<8xf32>
    %83 = vector.multi_reduction <maximumf>, %82, %cst_32 [1] : vector<8x8xf32> to vector<8xf32>
    %84 = vector.shape_cast %83 : vector<8xf32> to vector<8x1xf32>
    %85 = vector.broadcast %84 : vector<8x1xf32> to vector<8x8xf32>
    %86 = arith.subf %82, %85 : vector<8x8xf32>
    %87 = math.exp %86 : vector<8x8xf32>
    %cst_33 = arith.constant dense<0.000000e+00> : vector<8xf32>
    %88 = vector.multi_reduction <add>, %87, %cst_33 [1] : vector<8x8xf32> to vector<8xf32>
    %89 = vector.shape_cast %88 : vector<8xf32> to vector<8x1xf32>
    %90 = tpu.reciprocal %89 {approx = true} : vector<8x1xf32> -> vector<8x1xf32>
    %91 = vector.broadcast %90 : vector<8x1xf32> to vector<8x8xf32>
    %92 = arith.mulf %87, %91 : vector<8x8xf32>
    %cst_34 = arith.constant dense<0.000000e+00> : vector<8x8xf32>
    %93 = tpu.matmul %92, %77, %cst_34 {dimension_numbers = #tpu.dot_dimension_numbers<[1], [0], [0], [1], [0, 0, 1, 1], [], []>} : vector<8x8xf32>, vector<8x8xf32>, vector<8x8xf32> -> vector<8x8xf32>
    %94 = vector.extract_strided_slice %35 {offsets = [0, 24], sizes = [8, 8], strides = [1, 1]} : vector<16x96xf32> to vector<8x8xf32>
    %95 = vector.extract_strided_slice %35 {offsets = [0, 56], sizes = [8, 8], strides = [1, 1]} : vector<16x96xf32> to vector<8x8xf32>
    %96 = vector.extract_strided_slice %35 {offsets = [0, 88], sizes = [8, 8], strides = [1, 1]} : vector<16x96xf32> to vector<8x8xf32>
    %cst_35 = arith.constant dense<0.000000e+00> : vector<8x8xf32>
    %97 = tpu.matmul %94, %95, %cst_35 {dimension_numbers = #tpu.dot_dimension_numbers<[1], [1], [0], [0], [0, 0, 1, 0], [], []>} : vector<8x8xf32>, vector<8x8xf32>, vector<8x8xf32> -> vector<8x8xf32>
    %cst_36 = arith.constant 0.353553385 : f32
    %98 = vector.broadcast %cst_36 : f32 to vector<8x8xf32>
    %99 = arith.mulf %97, %98 : vector<8x8xf32>
    %100 = vector.broadcast %36 : vector<1x8xf32> to vector<8x8xf32>
    %101 = arith.addf %99, %100 : vector<8x8xf32>
    %cst_37 = arith.constant dense<0xFF800000> : vector<8xf32>
    %102 = vector.multi_reduction <maximumf>, %101, %cst_37 [1] : vector<8x8xf32> to vector<8xf32>
    %103 = vector.shape_cast %102 : vector<8xf32> to vector<8x1xf32>
    %104 = vector.broadcast %103 : vector<8x1xf32> to vector<8x8xf32>
    %105 = arith.subf %101, %104 : vector<8x8xf32>
    %106 = math.exp %105 : vector<8x8xf32>
    %cst_38 = arith.constant dense<0.000000e+00> : vector<8xf32>
    %107 = vector.multi_reduction <add>, %106, %cst_38 [1] : vector<8x8xf32> to vector<8xf32>
    %108 = vector.shape_cast %107 : vector<8xf32> to vector<8x1xf32>
    %109 = tpu.reciprocal %108 {approx = true} : vector<8x1xf32> -> vector<8x1xf32>
    %110 = vector.broadcast %109 : vector<8x1xf32> to vector<8x8xf32>
    %111 = arith.mulf %106, %110 : vector<8x8xf32>
    %cst_39 = arith.constant dense<0.000000e+00> : vector<8x8xf32>
    %112 = tpu.matmul %111, %96, %cst_39 {dimension_numbers = #tpu.dot_dimension_numbers<[1], [0], [0], [1], [0, 0, 1, 1], [], []>} : vector<8x8xf32>, vector<8x8xf32>, vector<8x8xf32> -> vector<8x8xf32>
    %113 = tpu.concatenate %55, %74, %93, %112 in 1 : vector<8x8xf32>, vector<8x8xf32>, vector<8x8xf32>, vector<8x8xf32> -> vector<8x32xf32>
    %114 = vector.extract_strided_slice %4 {offsets = [1, 0], sizes = [1, 8], strides = [1, 1]} : vector<2x8xf32> to vector<1x8xf32>
    %115 = vector.extract_strided_slice %35 {offsets = [8, 0], sizes = [8, 8], strides = [1, 1]} : vector<16x96xf32> to vector<8x8xf32>
    %116 = vector.extract_strided_slice %35 {offsets = [8, 32], sizes = [8, 8], strides = [1, 1]} : vector<16x96xf32> to vector<8x8xf32>
    %117 = vector.extract_strided_slice %35 {offsets = [8, 64], sizes = [8, 8], strides = [1, 1]} : vector<16x96xf32> to vector<8x8xf32>
    %cst_40 = arith.constant dense<0.000000e+00> : vector<8x8xf32>
    %118 = tpu.matmul %115, %116, %cst_40 {dimension_numbers = #tpu.dot_dimension_numbers<[1], [1], [0], [0], [0, 0, 1, 0], [], []>} : vector<8x8xf32>, vector<8x8xf32>, vector<8x8xf32> -> vector<8x8xf32>
    %cst_41 = arith.constant 0.353553385 : f32
    %119 = vector.broadcast %cst_41 : f32 to vector<8x8xf32>
    %120 = arith.mulf %118, %119 : vector<8x8xf32>
    %121 = vector.broadcast %114 : vector<1x8xf32> to vector<8x8xf32>
    %122 = arith.addf %120, %121 : vector<8x8xf32>
    %cst_42 = arith.constant dense<0xFF800000> : vector<8xf32>
    %123 = vector.multi_reduction <maximumf>, %122, %cst_42 [1] : vector<8x8xf32> to vector<8xf32>
    %124 = vector.shape_cast %123 : vector<8xf32> to vector<8x1xf32>
    %125 = vector.broadcast %124 : vector<8x1xf32> to vector<8x8xf32>
    %126 = arith.subf %122, %125 : vector<8x8xf32>
    %127 = math.exp %126 : vector<8x8xf32>
    %cst_43 = arith.constant dense<0.000000e+00> : vector<8xf32>
    %128 = vector.multi_reduction <add>, %127, %cst_43 [1] : vector<8x8xf32> to vector<8xf32>
    %129 = vector.shape_cast %128 : vector<8xf32> to vector<8x1xf32>
    %130 = tpu.reciprocal %129 {approx = true} : vector<8x1xf32> -> vector<8x1xf32>
    %131 = vector.broadcast %130 : vector<8x1xf32> to vector<8x8xf32>
    %132 = arith.mulf %127, %131 : vector<8x8xf32>
    %cst_44 = arith.constant dense<0.000000e+00> : vector<8x8xf32>
    %133 = tpu.matmul %132, %117, %cst_44 {dimension_numbers = #tpu.dot_dimension_numbers<[1], [0], [0], [1], [0, 0, 1, 1], [], []>} : vector<8x8xf32>, vector<8x8xf32>, vector<8x8xf32> -> vector<8x8xf32>
    %134 = vector.extract_strided_slice %35 {offsets = [8, 8], sizes = [8, 8], strides = [1, 1]} : vector<16x96xf32> to vector<8x8xf32>
    %135 = vector.extract_strided_slice %35 {offsets = [8, 40], sizes = [8, 8], strides = [1, 1]} : vector<16x96xf32> to vector<8x8xf32>
    %136 = vector.extract_strided_slice %35 {offsets = [8, 72], sizes = [8, 8], strides = [1, 1]} : vector<16x96xf32> to vector<8x8xf32>
    %cst_45 = arith.constant dense<0.000000e+00> : vector<8x8xf32>
    %137 = tpu.matmul %134, %135, %cst_45 {dimension_numbers = #tpu.dot_dimension_numbers<[1], [1], [0], [0], [0, 0, 1, 0], [], []>} : vector<8x8xf32>, vector<8x8xf32>, vector<8x8xf32> -> vector<8x8xf32>
    %cst_46 = arith.constant 0.353553385 : f32
    %138 = vector.broadcast %cst_46 : f32 to vector<8x8xf32>
    %139 = arith.mulf %137, %138 : vector<8x8xf32>
    %140 = vector.broadcast %114 : vector<1x8xf32> to vector<8x8xf32>
    %141 = arith.addf %139, %140 : vector<8x8xf32>
    %cst_47 = arith.constant dense<0xFF800000> : vector<8xf32>
    %142 = vector.multi_reduction <maximumf>, %141, %cst_47 [1] : vector<8x8xf32> to vector<8xf32>
    %143 = vector.shape_cast %142 : vector<8xf32> to vector<8x1xf32>
    %144 = vector.broadcast %143 : vector<8x1xf32> to vector<8x8xf32>
    %145 = arith.subf %141, %144 : vector<8x8xf32>
    %146 = math.exp %145 : vector<8x8xf32>
    %cst_48 = arith.constant dense<0.000000e+00> : vector<8xf32>
    %147 = vector.multi_reduction <add>, %146, %cst_48 [1] : vector<8x8xf32> to vector<8xf32>
    %148 = vector.shape_cast %147 : vector<8xf32> to vector<8x1xf32>
    %149 = tpu.reciprocal %148 {approx = true} : vector<8x1xf32> -> vector<8x1xf32>
    %150 = vector.broadcast %149 : vector<8x1xf32> to vector<8x8xf32>
    %151 = arith.mulf %146, %150 : vector<8x8xf32>
    %cst_49 = arith.constant dense<0.000000e+00> : vector<8x8xf32>
    %152 = tpu.matmul %151, %136, %cst_49 {dimension_numbers = #tpu.dot_dimension_numbers<[1], [0], [0], [1], [0, 0, 1, 1], [], []>} : vector<8x8xf32>, vector<8x8xf32>, vector<8x8xf32> -> vector<8x8xf32>
    %153 = vector.extract_strided_slice %35 {offsets = [8, 16], sizes = [8, 8], strides = [1, 1]} : vector<16x96xf32> to vector<8x8xf32>
    %154 = vector.extract_strided_slice %35 {offsets = [8, 48], sizes = [8, 8], strides = [1, 1]} : vector<16x96xf32> to vector<8x8xf32>
    %155 = vector.extract_strided_slice %35 {offsets = [8, 80], sizes = [8, 8], strides = [1, 1]} : vector<16x96xf32> to vector<8x8xf32>
    %cst_50 = arith.constant dense<0.000000e+00> : vector<8x8xf32>
    %156 = tpu.matmul %153, %154, %cst_50 {dimension_numbers = #tpu.dot_dimension_numbers<[1], [1], [0], [0], [0, 0, 1, 0], [], []>} : vector<8x8xf32>, vector<8x8xf32>, vector<8x8xf32> -> vector<8x8xf32>
    %cst_51 = arith.constant 0.353553385 : f32
    %157 = vector.broadcast %cst_51 : f32 to vector<8x8xf32>
    %158 = arith.mulf %156, %157 : vector<8x8xf32>
    %159 = vector.broadcast %114 : vector<1x8xf32> to vector<8x8xf32>
    %160 = arith.addf %158, %159 : vector<8x8xf32>
    %cst_52 = arith.constant dense<0xFF800000> : vector<8xf32>
    %161 = vector.multi_reduction <maximumf>, %160, %cst_52 [1] : vector<8x8xf32> to vector<8xf32>
    %162 = vector.shape_cast %161 : vector<8xf32> to vector<8x1xf32>
    %163 = vector.broadcast %162 : vector<8x1xf32> to vector<8x8xf32>
    %164 = arith.subf %160, %163 : vector<8x8xf32>
    %165 = math.exp %164 : vector<8x8xf32>
    %cst_53 = arith.constant dense<0.000000e+00> : vector<8xf32>
    %166 = vector.multi_reduction <add>, %165, %cst_53 [1] : vector<8x8xf32> to vector<8xf32>
    %167 = vector.shape_cast %166 : vector<8xf32> to vector<8x1xf32>
    %168 = tpu.reciprocal %167 {approx = true} : vector<8x1xf32> -> vector<8x1xf32>
    %169 = vector.broadcast %168 : vector<8x1xf32> to vector<8x8xf32>
    %170 = arith.mulf %165, %169 : vector<8x8xf32>
    %cst_54 = arith.constant dense<0.000000e+00> : vector<8x8xf32>
    %171 = tpu.matmul %170, %155, %cst_54 {dimension_numbers = #tpu.dot_dimension_numbers<[1], [0], [0], [1], [0, 0, 1, 1], [], []>} : vector<8x8xf32>, vector<8x8xf32>, vector<8x8xf32> -> vector<8x8xf32>
    %172 = vector.extract_strided_slice %35 {offsets = [8, 24], sizes = [8, 8], strides = [1, 1]} : vector<16x96xf32> to vector<8x8xf32>
    %173 = vector.extract_strided_slice %35 {offsets = [8, 56], sizes = [8, 8], strides = [1, 1]} : vector<16x96xf32> to vector<8x8xf32>
    %174 = vector.extract_strided_slice %35 {offsets = [8, 88], sizes = [8, 8], strides = [1, 1]} : vector<16x96xf32> to vector<8x8xf32>
    %cst_55 = arith.constant dense<0.000000e+00> : vector<8x8xf32>
    %175 = tpu.matmul %172, %173, %cst_55 {dimension_numbers = #tpu.dot_dimension_numbers<[1], [1], [0], [0], [0, 0, 1, 0], [], []>} : vector<8x8xf32>, vector<8x8xf32>, vector<8x8xf32> -> vector<8x8xf32>
    %cst_56 = arith.constant 0.353553385 : f32
    %176 = vector.broadcast %cst_56 : f32 to vector<8x8xf32>
    %177 = arith.mulf %175, %176 : vector<8x8xf32>
    %178 = vector.broadcast %114 : vector<1x8xf32> to vector<8x8xf32>
    %179 = arith.addf %177, %178 : vector<8x8xf32>
    %cst_57 = arith.constant dense<0xFF800000> : vector<8xf32>
    %180 = vector.multi_reduction <maximumf>, %179, %cst_57 [1] : vector<8x8xf32> to vector<8xf32>
    %181 = vector.shape_cast %180 : vector<8xf32> to vector<8x1xf32>
    %182 = vector.broadcast %181 : vector<8x1xf32> to vector<8x8xf32>
    %183 = arith.subf %179, %182 : vector<8x8xf32>
    %184 = math.exp %183 : vector<8x8xf32>
    %cst_58 = arith.constant dense<0.000000e+00> : vector<8xf32>
    %185 = vector.multi_reduction <add>, %184, %cst_58 [1] : vector<8x8xf32> to vector<8xf32>
    %186 = vector.shape_cast %185 : vector<8xf32> to vector<8x1xf32>
    %187 = tpu.reciprocal %186 {approx = true} : vector<8x1xf32> -> vector<8x1xf32>
    %188 = vector.broadcast %187 : vector<8x1xf32> to vector<8x8xf32>
    %189 = arith.mulf %184, %188 : vector<8x8xf32>
    %cst_59 = arith.constant dense<0.000000e+00> : vector<8x8xf32>
    %190 = tpu.matmul %189, %174, %cst_59 {dimension_numbers = #tpu.dot_dimension_numbers<[1], [0], [0], [1], [0, 0, 1, 1], [], []>} : vector<8x8xf32>, vector<8x8xf32>, vector<8x8xf32> -> vector<8x8xf32>
    %191 = tpu.concatenate %133, %152, %171, %190 in 1 : vector<8x8xf32>, vector<8x8xf32>, vector<8x8xf32>, vector<8x8xf32> -> vector<8x32xf32>
    %192 = tpu.concatenate %113, %191 in 0 : vector<8x32xf32>, vector<8x32xf32> -> vector<16x32xf32>
    %c0_60 = arith.constant 0 : index
    %c0_61 = arith.constant 0 : index
    %c0_62 = arith.constant 0 : index
    %193 = vector.load %arg6[%c0_60, %c0_61, %c0_62] : memref<2x32x32xbf16, #tpu.memory_space<vmem>>, vector<1x32x32xbf16>
    %194 = vector.shape_cast %193 : vector<1x32x32xbf16> to vector<32x32xbf16>
    %195 = arith.truncf %192 : vector<16x32xf32> to vector<16x32xbf16>
    %cst_63 = arith.constant dense<0.000000e+00> : vector<16x32xf32>
    %196 = tpu.matmul %195, %194, %cst_63 {dimension_numbers = #tpu.dot_dimension_numbers<[1], [0], [0], [1], [0, 0, 1, 1], [], []>} : vector<16x32xbf16>, vector<32x32xbf16>, vector<16x32xf32> -> vector<16x32xf32>
    %c0_64 = arith.constant 0 : index
    %c0_65 = arith.constant 0 : index
    %c0_66 = arith.constant 0 : index
    %197 = vector.load %arg7[%c0_64, %c0_65, %c0_66] : memref<2x1x32xf32, #tpu.memory_space<vmem>>, vector<1x1x32xf32>
    %198 = vector.shape_cast %197 : vector<1x1x32xf32> to vector<1x32xf32>
    %199 = vector.broadcast %198 : vector<1x32xf32> to vector<16x32xf32>
    %200 = arith.addf %196, %199 : vector<16x32xf32>
    %201 = arith.addf %200, %27 : vector<16x32xf32>
    %c0_67 = arith.constant 0 : index
    %c0_68 = arith.constant 0 : index
    %c0_69 = arith.constant 0 : index
    %202 = vector.load %arg8[%c0_67, %c0_68, %c0_69] : memref<2x1x32xf32, #tpu.memory_space<vmem>>, vector<1x1x32xf32>
    %203 = vector.shape_cast %202 : vector<1x1x32xf32> to vector<1x32xf32>
    %c0_70 = arith.constant 0 : index
    %c0_71 = arith.constant 0 : index
    %c0_72 = arith.constant 0 : index
    %204 = vector.load %arg9[%c0_70, %c0_71, %c0_72] : memref<2x1x32xf32, #tpu.memory_space<vmem>>, vector<1x1x32xf32>
    %205 = vector.shape_cast %204 : vector<1x1x32xf32> to vector<1x32xf32>
    %cst_73 = arith.constant dense<0.000000e+00> : vector<16xf32>
    %206 = vector.multi_reduction <add>, %201, %cst_73 [1] : vector<16x32xf32> to vector<16xf32>
    %207 = vector.shape_cast %206 : vector<16xf32> to vector<16x1xf32>
    %cst_74 = arith.constant 3.200000e+01 : f32
    %208 = vector.broadcast %cst_74 : f32 to vector<16x1xf32>
    %209 = arith.divf %207, %208 : vector<16x1xf32>
    %210 = vector.broadcast %209 : vector<16x1xf32> to vector<16x32xf32>
    %211 = arith.subf %201, %210 : vector<16x32xf32>
    %212 = arith.mulf %211, %211 : vector<16x32xf32>
    %cst_75 = arith.constant dense<0.000000e+00> : vector<16xf32>
    %213 = vector.multi_reduction <add>, %212, %cst_75 [1] : vector<16x32xf32> to vector<16xf32>
    %214 = vector.shape_cast %213 : vector<16xf32> to vector<16x1xf32>
    %cst_76 = arith.constant 3.200000e+01 : f32
    %215 = vector.broadcast %cst_76 : f32 to vector<16x1xf32>
    %216 = arith.divf %214, %215 : vector<16x1xf32>
    %cst_77 = arith.constant 9.99999996E-13 : f32
    %217 = vector.broadcast %cst_77 : f32 to vector<16x1xf32>
    %218 = arith.addf %216, %217 : vector<16x1xf32>
    %219 = math.rsqrt %218 : vector<16x1xf32>
    %220 = vector.broadcast %219 : vector<16x1xf32> to vector<16x32xf32>
    %221 = arith.mulf %211, %220 : vector<16x32xf32>
    %222 = vector.broadcast %203 : vector<1x32xf32> to vector<16x32xf32>
    %223 = arith.mulf %221, %222 : vector<16x32xf32>
    %224 = vector.broadcast %205 : vector<1x32xf32> to vector<16x32xf32>
    %225 = arith.addf %223, %224 : vector<16x32xf32>
    %c0_78 = arith.constant 0 : index
    %c0_79 = arith.constant 0 : index
    %c0_80 = arith.constant 0 : index
    %226 = vector.load %arg10[%c0_78, %c0_79, %c0_80] : memref<2x32x64xbf16, #tpu.memory_space<vmem>>, vector<1x32x64xbf16>
    %227 = vector.shape_cast %226 : vector<1x32x64xbf16> to vector<32x64xbf16>
    %228 = arith.truncf %225 : vector<16x32xf32> to vector<16x32xbf16>
    %cst_81 = arith.constant dense<0.000000e+00> : vector<16x64xf32>
    %229 = tpu.matmul %228, %227, %cst_81 {dimension_numbers = #tpu.dot_dimension_numbers<[1], [0], [0], [1], [0, 0, 1, 1], [], []>} : vector<16x32xbf16>, vector<32x64xbf16>, vector<16x64xf32> -> vector<16x64xf32>
    %c0_82 = arith.constant 0 : index
    %c0_83 = arith.constant 0 : index
    %c0_84 = arith.constant 0 : index
    %230 = vector.load %arg11[%c0_82, %c0_83, %c0_84] : memref<2x1x64xf32, #tpu.memory_space<vmem>>, vector<1x1x64xf32>
    %231 = vector.shape_cast %230 : vector<1x1x64xf32> to vector<1x64xf32>
    %232 = vector.broadcast %231 : vector<1x64xf32> to vector<16x64xf32>
    %233 = arith.addf %229, %232 : vector<16x64xf32>
    %cst_85 = arith.constant 5.000000e-01 : f32
    %234 = vector.broadcast %cst_85 : f32 to vector<16x64xf32>
    %235 = arith.mulf %234, %233 : vector<16x64xf32>
    %cst_86 = arith.constant 4.471500e-02 : f32
    %236 = vector.broadcast %cst_86 : f32 to vector<16x64xf32>
    %237 = arith.mulf %236, %233 : vector<16x64xf32>
    %238 = arith.mulf %237, %233 : vector<16x64xf32>
    %239 = arith.mulf %238, %233 : vector<16x64xf32>
    %240 = arith.addf %233, %239 : vector<16x64xf32>
    %cst_87 = arith.constant 0.797884583 : f32
    %241 = vector.broadcast %cst_87 : f32 to vector<16x64xf32>
    %242 = arith.mulf %241, %240 : vector<16x64xf32>
    %243 = math.tanh %242 : vector<16x64xf32>
    %cst_88 = arith.constant 1.000000e+00 : f32
    %244 = vector.broadcast %cst_88 : f32 to vector<16x64xf32>
    %245 = arith.addf %244, %243 : vector<16x64xf32>
    %246 = arith.mulf %235, %245 : vector<16x64xf32>
    %c0_89 = arith.constant 0 : index
    %c0_90 = arith.constant 0 : index
    %c0_91 = arith.constant 0 : index
    %247 = vector.load %arg12[%c0_89, %c0_90, %c0_91] : memref<2x64x32xbf16, #tpu.memory_space<vmem>>, vector<1x64x32xbf16>
    %248 = vector.shape_cast %247 : vector<1x64x32xbf16> to vector<64x32xbf16>
    %249 = arith.truncf %246 : vector<16x64xf32> to vector<16x64xbf16>
    %cst_92 = arith.constant dense<0.000000e+00> : vector<16x32xf32>
    %250 = tpu.matmul %249, %248, %cst_92 {dimension_numbers = #tpu.dot_dimension_numbers<[1], [0], [0], [1], [0, 0, 1, 1], [], []>} : vector<16x64xbf16>, vector<64x32xbf16>, vector<16x32xf32> -> vector<16x32xf32>
    %c0_93 = arith.constant 0 : index
    %c0_94 = arith.constant 0 : index
    %c0_95 = arith.constant 0 : index
    %251 = vector.load %arg13[%c0_93, %c0_94, %c0_95] : memref<2x1x32xf32, #tpu.memory_space<vmem>>, vector<1x1x32xf32>
    %252 = vector.shape_cast %251 : vector<1x1x32xf32> to vector<1x32xf32>
    %253 = vector.broadcast %252 : vector<1x32xf32> to vector<16x32xf32>
    %254 = arith.addf %250, %253 : vector<16x32xf32>
    %255 = arith.addf %254, %225 : vector<16x32xf32>
    %c0_96 = arith.constant 0 : index
    %c0_97 = arith.constant 0 : index
    %c0_98 = arith.constant 0 : index
    %256 = vector.load %arg14[%c0_96, %c0_97, %c0_98] : memref<2x1x32xf32, #tpu.memory_space<vmem>>, vector<1x1x32xf32>
    %257 = vector.shape_cast %256 : vector<1x1x32xf32> to vector<1x32xf32>
    %c0_99 = arith.constant 0 : index
    %c0_100 = arith.constant 0 : index
    %c0_101 = arith.constant 0 : index
    %258 = vector.load %arg15[%c0_99, %c0_100, %c0_101] : memref<2x1x32xf32, #tpu.memory_space<vmem>>, vector<1x1x32xf32>
    %259 = vector.shape_cast %258 : vector<1x1x32xf32> to vector<1x32xf32>
    %cst_102 = arith.constant dense<0.000000e+00> : vector<16xf32>
    %260 = vector.multi_reduction <add>, %255, %cst_102 [1] : vector<16x32xf32> to vector<16xf32>
    %261 = vector.shape_cast %260 : vector<16xf32> to vector<16x1xf32>
    %cst_103 = arith.constant 3.200000e+01 : f32
    %262 = vector.broadcast %cst_103 : f32 to vector<16x1xf32>
    %263 = arith.divf %261, %262 : vector<16x1xf32>
    %264 = vector.broadcast %263 : vector<16x1xf32> to vector<16x32xf32>
    %265 = arith.subf %255, %264 : vector<16x32xf32>
    %266 = arith.mulf %265, %265 : vector<16x32xf32>
    %cst_104 = arith.constant dense<0.000000e+00> : vector<16xf32>
    %267 = vector.multi_reduction <add>, %266, %cst_104 [1] : vector<16x32xf32> to vector<16xf32>
    %268 = vector.shape_cast %267 : vector<16xf32> to vector<16x1xf32>
    %cst_105 = arith.constant 3.200000e+01 : f32
    %269 = vector.broadcast %cst_105 : f32 to vector<16x1xf32>
    %270 = arith.divf %268, %269 : vector<16x1xf32>
    %cst_106 = arith.constant 9.99999996E-13 : f32
    %271 = vector.broadcast %cst_106 : f32 to vector<16x1xf32>
    %272 = arith.addf %270, %271 : vector<16x1xf32>
    %273 = math.rsqrt %272 : vector<16x1xf32>
    %274 = vector.broadcast %273 : vector<16x1xf32> to vector<16x32xf32>
    %275 = arith.mulf %265, %274 : vector<16x32xf32>
    %276 = vector.broadcast %257 : vector<1x32xf32> to vector<16x32xf32>
    %277 = arith.mulf %275, %276 : vector<16x32xf32>
    %278 = vector.broadcast %259 : vector<1x32xf32> to vector<16x32xf32>
    %279 = arith.addf %277, %278 : vector<16x32xf32>
    %c1 = arith.constant 1 : index
    %c0_107 = arith.constant 0 : index
    %c0_108 = arith.constant 0 : index
    %280 = vector.load %arg4[%c1, %c0_107, %c0_108] : memref<2x32x96xbf16, #tpu.memory_space<vmem>>, vector<1x32x96xbf16>
    %281 = vector.shape_cast %280 : vector<1x32x96xbf16> to vector<32x96xbf16>
    %282 = arith.truncf %279 : vector<16x32xf32> to vector<16x32xbf16>
    %cst_109 = arith.constant dense<0.000000e+00> : vector<16x96xf32>
    %283 = tpu.matmul %282, %281, %cst_109 {dimension_numbers = #tpu.dot_dimension_numbers<[1], [0], [0], [1], [0, 0, 1, 1], [], []>} : vector<16x32xbf16>, vector<32x96xbf16>, vector<16x96xf32> -> vector<16x96xf32>
    %c1_110 = arith.constant 1 : index
    %c0_111 = arith.constant 0 : index
    %c0_112 = arith.constant 0 : index
    %284 = vector.load %arg5[%c1_110, %c0_111, %c0_112] : memref<2x1x96xf32, #tpu.memory_space<vmem>>, vector<1x1x96xf32>
    %285 = vector.shape_cast %284 : vector<1x1x96xf32> to vector<1x96xf32>
    %286 = vector.broadcast %285 : vector<1x96xf32> to vector<16x96xf32>
    %287 = arith.addf %283, %286 : vector<16x96xf32>
    %288 = vector.extract_strided_slice %4 {offsets = [0, 0], sizes = [1, 8], strides = [1, 1]} : vector<2x8xf32> to vector<1x8xf32>
    %289 = vector.extract_strided_slice %287 {offsets = [0, 0], sizes = [8, 8], strides = [1, 1]} : vector<16x96xf32> to vector<8x8xf32>
    %290 = vector.extract_strided_slice %287 {offsets = [0, 32], sizes = [8, 8], strides = [1, 1]} : vector<16x96xf32> to vector<8x8xf32>
    %291 = vector.extract_strided_slice %287 {offsets = [0, 64], sizes = [8, 8], strides = [1, 1]} : vector<16x96xf32> to vector<8x8xf32>
    %cst_113 = arith.constant dense<0.000000e+00> : vector<8x8xf32>
    %292 = tpu.matmul %289, %290, %cst_113 {dimension_numbers = #tpu.dot_dimension_numbers<[1], [1], [0], [0], [0, 0, 1, 0], [], []>} : vector<8x8xf32>, vector<8x8xf32>, vector<8x8xf32> -> vector<8x8xf32>
    %cst_114 = arith.constant 0.353553385 : f32
    %293 = vector.broadcast %cst_114 : f32 to vector<8x8xf32>
    %294 = arith.mulf %292, %293 : vector<8x8xf32>
    %295 = vector.broadcast %288 : vector<1x8xf32> to vector<8x8xf32>
    %296 = arith.addf %294, %295 : vector<8x8xf32>
    %cst_115 = arith.constant dense<0xFF800000> : vector<8xf32>
    %297 = vector.multi_reduction <maximumf>, %296, %cst_115 [1] : vector<8x8xf32> to vector<8xf32>
    %298 = vector.shape_cast %297 : vector<8xf32> to vector<8x1xf32>
    %299 = vector.broadcast %298 : vector<8x1xf32> to vector<8x8xf32>
    %300 = arith.subf %296, %299 : vector<8x8xf32>
    %301 = math.exp %300 : vector<8x8xf32>
    %cst_116 = arith.constant dense<0.000000e+00> : vector<8xf32>
    %302 = vector.multi_reduction <add>, %301, %cst_116 [1] : vector<8x8xf32> to vector<8xf32>
    %303 = vector.shape_cast %302 : vector<8xf32> to vector<8x1xf32>
    %304 = tpu.reciprocal %303 {approx = true} : vector<8x1xf32> -> vector<8x1xf32>
    %305 = vector.broadcast %304 : vector<8x1xf32> to vector<8x8xf32>
    %306 = arith.mulf %301, %305 : vector<8x8xf32>
    %cst_117 = arith.constant dense<0.000000e+00> : vector<8x8xf32>
    %307 = tpu.matmul %306, %291, %cst_117 {dimension_numbers = #tpu.dot_dimension_numbers<[1], [0], [0], [1], [0, 0, 1, 1], [], []>} : vector<8x8xf32>, vector<8x8xf32>, vector<8x8xf32> -> vector<8x8xf32>
    %308 = vector.extract_strided_slice %287 {offsets = [0, 8], sizes = [8, 8], strides = [1, 1]} : vector<16x96xf32> to vector<8x8xf32>
    %309 = vector.extract_strided_slice %287 {offsets = [0, 40], sizes = [8, 8], strides = [1, 1]} : vector<16x96xf32> to vector<8x8xf32>
    %310 = vector.extract_strided_slice %287 {offsets = [0, 72], sizes = [8, 8], strides = [1, 1]} : vector<16x96xf32> to vector<8x8xf32>
    %cst_118 = arith.constant dense<0.000000e+00> : vector<8x8xf32>
    %311 = tpu.matmul %308, %309, %cst_118 {dimension_numbers = #tpu.dot_dimension_numbers<[1], [1], [0], [0], [0, 0, 1, 0], [], []>} : vector<8x8xf32>, vector<8x8xf32>, vector<8x8xf32> -> vector<8x8xf32>
    %cst_119 = arith.constant 0.353553385 : f32
    %312 = vector.broadcast %cst_119 : f32 to vector<8x8xf32>
    %313 = arith.mulf %311, %312 : vector<8x8xf32>
    %314 = vector.broadcast %288 : vector<1x8xf32> to vector<8x8xf32>
    %315 = arith.addf %313, %314 : vector<8x8xf32>
    %cst_120 = arith.constant dense<0xFF800000> : vector<8xf32>
    %316 = vector.multi_reduction <maximumf>, %315, %cst_120 [1] : vector<8x8xf32> to vector<8xf32>
    %317 = vector.shape_cast %316 : vector<8xf32> to vector<8x1xf32>
    %318 = vector.broadcast %317 : vector<8x1xf32> to vector<8x8xf32>
    %319 = arith.subf %315, %318 : vector<8x8xf32>
    %320 = math.exp %319 : vector<8x8xf32>
    %cst_121 = arith.constant dense<0.000000e+00> : vector<8xf32>
    %321 = vector.multi_reduction <add>, %320, %cst_121 [1] : vector<8x8xf32> to vector<8xf32>
    %322 = vector.shape_cast %321 : vector<8xf32> to vector<8x1xf32>
    %323 = tpu.reciprocal %322 {approx = true} : vector<8x1xf32> -> vector<8x1xf32>
    %324 = vector.broadcast %323 : vector<8x1xf32> to vector<8x8xf32>
    %325 = arith.mulf %320, %324 : vector<8x8xf32>
    %cst_122 = arith.constant dense<0.000000e+00> : vector<8x8xf32>
    %326 = tpu.matmul %325, %310, %cst_122 {dimension_numbers = #tpu.dot_dimension_numbers<[1], [0], [0], [1], [0, 0, 1, 1], [], []>} : vector<8x8xf32>, vector<8x8xf32>, vector<8x8xf32> -> vector<8x8xf32>
    %327 = vector.extract_strided_slice %287 {offsets = [0, 16], sizes = [8, 8], strides = [1, 1]} : vector<16x96xf32> to vector<8x8xf32>
    %328 = vector.extract_strided_slice %287 {offsets = [0, 48], sizes = [8, 8], strides = [1, 1]} : vector<16x96xf32> to vector<8x8xf32>
    %329 = vector.extract_strided_slice %287 {offsets = [0, 80], sizes = [8, 8], strides = [1, 1]} : vector<16x96xf32> to vector<8x8xf32>
    %cst_123 = arith.constant dense<0.000000e+00> : vector<8x8xf32>
    %330 = tpu.matmul %327, %328, %cst_123 {dimension_numbers = #tpu.dot_dimension_numbers<[1], [1], [0], [0], [0, 0, 1, 0], [], []>} : vector<8x8xf32>, vector<8x8xf32>, vector<8x8xf32> -> vector<8x8xf32>
    %cst_124 = arith.constant 0.353553385 : f32
    %331 = vector.broadcast %cst_124 : f32 to vector<8x8xf32>
    %332 = arith.mulf %330, %331 : vector<8x8xf32>
    %333 = vector.broadcast %288 : vector<1x8xf32> to vector<8x8xf32>
    %334 = arith.addf %332, %333 : vector<8x8xf32>
    %cst_125 = arith.constant dense<0xFF800000> : vector<8xf32>
    %335 = vector.multi_reduction <maximumf>, %334, %cst_125 [1] : vector<8x8xf32> to vector<8xf32>
    %336 = vector.shape_cast %335 : vector<8xf32> to vector<8x1xf32>
    %337 = vector.broadcast %336 : vector<8x1xf32> to vector<8x8xf32>
    %338 = arith.subf %334, %337 : vector<8x8xf32>
    %339 = math.exp %338 : vector<8x8xf32>
    %cst_126 = arith.constant dense<0.000000e+00> : vector<8xf32>
    %340 = vector.multi_reduction <add>, %339, %cst_126 [1] : vector<8x8xf32> to vector<8xf32>
    %341 = vector.shape_cast %340 : vector<8xf32> to vector<8x1xf32>
    %342 = tpu.reciprocal %341 {approx = true} : vector<8x1xf32> -> vector<8x1xf32>
    %343 = vector.broadcast %342 : vector<8x1xf32> to vector<8x8xf32>
    %344 = arith.mulf %339, %343 : vector<8x8xf32>
    %cst_127 = arith.constant dense<0.000000e+00> : vector<8x8xf32>
    %345 = tpu.matmul %344, %329, %cst_127 {dimension_numbers = #tpu.dot_dimension_numbers<[1], [0], [0], [1], [0, 0, 1, 1], [], []>} : vector<8x8xf32>, vector<8x8xf32>, vector<8x8xf32> -> vector<8x8xf32>
    %346 = vector.extract_strided_slice %287 {offsets = [0, 24], sizes = [8, 8], strides = [1, 1]} : vector<16x96xf32> to vector<8x8xf32>
    %347 = vector.extract_strided_slice %287 {offsets = [0, 56], sizes = [8, 8], strides = [1, 1]} : vector<16x96xf32> to vector<8x8xf32>
    %348 = vector.extract_strided_slice %287 {offsets = [0, 88], sizes = [8, 8], strides = [1, 1]} : vector<16x96xf32> to vector<8x8xf32>
    %cst_128 = arith.constant dense<0.000000e+00> : vector<8x8xf32>
    %349 = tpu.matmul %346, %347, %cst_128 {dimension_numbers = #tpu.dot_dimension_numbers<[1], [1], [0], [0], [0, 0, 1, 0], [], []>} : vector<8x8xf32>, vector<8x8xf32>, vector<8x8xf32> -> vector<8x8xf32>
    %cst_129 = arith.constant 0.353553385 : f32
    %350 = vector.broadcast %cst_129 : f32 to vector<8x8xf32>
    %351 = arith.mulf %349, %350 : vector<8x8xf32>
    %352 = vector.broadcast %288 : vector<1x8xf32> to vector<8x8xf32>
    %353 = arith.addf %351, %352 : vector<8x8xf32>
    %cst_130 = arith.constant dense<0xFF800000> : vector<8xf32>
    %354 = vector.multi_reduction <maximumf>, %353, %cst_130 [1] : vector<8x8xf32> to vector<8xf32>
    %355 = vector.shape_cast %354 : vector<8xf32> to vector<8x1xf32>
    %356 = vector.broadcast %355 : vector<8x1xf32> to vector<8x8xf32>
    %357 = arith.subf %353, %356 : vector<8x8xf32>
    %358 = math.exp %357 : vector<8x8xf32>
    %cst_131 = arith.constant dense<0.000000e+00> : vector<8xf32>
    %359 = vector.multi_reduction <add>, %358, %cst_131 [1] : vector<8x8xf32> to vector<8xf32>
    %360 = vector.shape_cast %359 : vector<8xf32> to vector<8x1xf32>
    %361 = tpu.reciprocal %360 {approx = true} : vector<8x1xf32> -> vector<8x1xf32>
    %362 = vector.broadcast %361 : vector<8x1xf32> to vector<8x8xf32>
    %363 = arith.mulf %358, %362 : vector<8x8xf32>
    %cst_132 = arith.constant dense<0.000000e+00> : vector<8x8xf32>
    %364 = tpu.matmul %363, %348, %cst_132 {dimension_numbers = #tpu.dot_dimension_numbers<[1], [0], [0], [1], [0, 0, 1, 1], [], []>} : vector<8x8xf32>, vector<8x8xf32>, vector<8x8xf32> -> vector<8x8xf32>
    %365 = tpu.concatenate %307, %326, %345, %364 in 1 : vector<8x8xf32>, vector<8x8xf32>, vector<8x8xf32>, vector<8x8xf32> -> vector<8x32xf32>
    %366 = vector.extract_strided_slice %4 {offsets = [1, 0], sizes = [1, 8], strides = [1, 1]} : vector<2x8xf32> to vector<1x8xf32>
    %367 = vector.extract_strided_slice %287 {offsets = [8, 0], sizes = [8, 8], strides = [1, 1]} : vector<16x96xf32> to vector<8x8xf32>
    %368 = vector.extract_strided_slice %287 {offsets = [8, 32], sizes = [8, 8], strides = [1, 1]} : vector<16x96xf32> to vector<8x8xf32>
    %369 = vector.extract_strided_slice %287 {offsets = [8, 64], sizes = [8, 8], strides = [1, 1]} : vector<16x96xf32> to vector<8x8xf32>
    %cst_133 = arith.constant dense<0.000000e+00> : vector<8x8xf32>
    %370 = tpu.matmul %367, %368, %cst_133 {dimension_numbers = #tpu.dot_dimension_numbers<[1], [1], [0], [0], [0, 0, 1, 0], [], []>} : vector<8x8xf32>, vector<8x8xf32>, vector<8x8xf32> -> vector<8x8xf32>
    %cst_134 = arith.constant 0.353553385 : f32
    %371 = vector.broadcast %cst_134 : f32 to vector<8x8xf32>
    %372 = arith.mulf %370, %371 : vector<8x8xf32>
    %373 = vector.broadcast %366 : vector<1x8xf32> to vector<8x8xf32>
    %374 = arith.addf %372, %373 : vector<8x8xf32>
    %cst_135 = arith.constant dense<0xFF800000> : vector<8xf32>
    %375 = vector.multi_reduction <maximumf>, %374, %cst_135 [1] : vector<8x8xf32> to vector<8xf32>
    %376 = vector.shape_cast %375 : vector<8xf32> to vector<8x1xf32>
    %377 = vector.broadcast %376 : vector<8x1xf32> to vector<8x8xf32>
    %378 = arith.subf %374, %377 : vector<8x8xf32>
    %379 = math.exp %378 : vector<8x8xf32>
    %cst_136 = arith.constant dense<0.000000e+00> : vector<8xf32>
    %380 = vector.multi_reduction <add>, %379, %cst_136 [1] : vector<8x8xf32> to vector<8xf32>
    %381 = vector.shape_cast %380 : vector<8xf32> to vector<8x1xf32>
    %382 = tpu.reciprocal %381 {approx = true} : vector<8x1xf32> -> vector<8x1xf32>
    %383 = vector.broadcast %382 : vector<8x1xf32> to vector<8x8xf32>
    %384 = arith.mulf %379, %383 : vector<8x8xf32>
    %cst_137 = arith.constant dense<0.000000e+00> : vector<8x8xf32>
    %385 = tpu.matmul %384, %369, %cst_137 {dimension_numbers = #tpu.dot_dimension_numbers<[1], [0], [0], [1], [0, 0, 1, 1], [], []>} : vector<8x8xf32>, vector<8x8xf32>, vector<8x8xf32> -> vector<8x8xf32>
    %386 = vector.extract_strided_slice %287 {offsets = [8, 8], sizes = [8, 8], strides = [1, 1]} : vector<16x96xf32> to vector<8x8xf32>
    %387 = vector.extract_strided_slice %287 {offsets = [8, 40], sizes = [8, 8], strides = [1, 1]} : vector<16x96xf32> to vector<8x8xf32>
    %388 = vector.extract_strided_slice %287 {offsets = [8, 72], sizes = [8, 8], strides = [1, 1]} : vector<16x96xf32> to vector<8x8xf32>
    %cst_138 = arith.constant dense<0.000000e+00> : vector<8x8xf32>
    %389 = tpu.matmul %386, %387, %cst_138 {dimension_numbers = #tpu.dot_dimension_numbers<[1], [1], [0], [0], [0, 0, 1, 0], [], []>} : vector<8x8xf32>, vector<8x8xf32>, vector<8x8xf32> -> vector<8x8xf32>
    %cst_139 = arith.constant 0.353553385 : f32
    %390 = vector.broadcast %cst_139 : f32 to vector<8x8xf32>
    %391 = arith.mulf %389, %390 : vector<8x8xf32>
    %392 = vector.broadcast %366 : vector<1x8xf32> to vector<8x8xf32>
    %393 = arith.addf %391, %392 : vector<8x8xf32>
    %cst_140 = arith.constant dense<0xFF800000> : vector<8xf32>
    %394 = vector.multi_reduction <maximumf>, %393, %cst_140 [1] : vector<8x8xf32> to vector<8xf32>
    %395 = vector.shape_cast %394 : vector<8xf32> to vector<8x1xf32>
    %396 = vector.broadcast %395 : vector<8x1xf32> to vector<8x8xf32>
    %397 = arith.subf %393, %396 : vector<8x8xf32>
    %398 = math.exp %397 : vector<8x8xf32>
    %cst_141 = arith.constant dense<0.000000e+00> : vector<8xf32>
    %399 = vector.multi_reduction <add>, %398, %cst_141 [1] : vector<8x8xf32> to vector<8xf32>
    %400 = vector.shape_cast %399 : vector<8xf32> to vector<8x1xf32>
    %401 = tpu.reciprocal %400 {approx = true} : vector<8x1xf32> -> vector<8x1xf32>
    %402 = vector.broadcast %401 : vector<8x1xf32> to vector<8x8xf32>
    %403 = arith.mulf %398, %402 : vector<8x8xf32>
    %cst_142 = arith.constant dense<0.000000e+00> : vector<8x8xf32>
    %404 = tpu.matmul %403, %388, %cst_142 {dimension_numbers = #tpu.dot_dimension_numbers<[1], [0], [0], [1], [0, 0, 1, 1], [], []>} : vector<8x8xf32>, vector<8x8xf32>, vector<8x8xf32> -> vector<8x8xf32>
    %405 = vector.extract_strided_slice %287 {offsets = [8, 16], sizes = [8, 8], strides = [1, 1]} : vector<16x96xf32> to vector<8x8xf32>
    %406 = vector.extract_strided_slice %287 {offsets = [8, 48], sizes = [8, 8], strides = [1, 1]} : vector<16x96xf32> to vector<8x8xf32>
    %407 = vector.extract_strided_slice %287 {offsets = [8, 80], sizes = [8, 8], strides = [1, 1]} : vector<16x96xf32> to vector<8x8xf32>
    %cst_143 = arith.constant dense<0.000000e+00> : vector<8x8xf32>
    %408 = tpu.matmul %405, %406, %cst_143 {dimension_numbers = #tpu.dot_dimension_numbers<[1], [1], [0], [0], [0, 0, 1, 0], [], []>} : vector<8x8xf32>, vector<8x8xf32>, vector<8x8xf32> -> vector<8x8xf32>
    %cst_144 = arith.constant 0.353553385 : f32
    %409 = vector.broadcast %cst_144 : f32 to vector<8x8xf32>
    %410 = arith.mulf %408, %409 : vector<8x8xf32>
    %411 = vector.broadcast %366 : vector<1x8xf32> to vector<8x8xf32>
    %412 = arith.addf %410, %411 : vector<8x8xf32>
    %cst_145 = arith.constant dense<0xFF800000> : vector<8xf32>
    %413 = vector.multi_reduction <maximumf>, %412, %cst_145 [1] : vector<8x8xf32> to vector<8xf32>
    %414 = vector.shape_cast %413 : vector<8xf32> to vector<8x1xf32>
    %415 = vector.broadcast %414 : vector<8x1xf32> to vector<8x8xf32>
    %416 = arith.subf %412, %415 : vector<8x8xf32>
    %417 = math.exp %416 : vector<8x8xf32>
    %cst_146 = arith.constant dense<0.000000e+00> : vector<8xf32>
    %418 = vector.multi_reduction <add>, %417, %cst_146 [1] : vector<8x8xf32> to vector<8xf32>
    %419 = vector.shape_cast %418 : vector<8xf32> to vector<8x1xf32>
    %420 = tpu.reciprocal %419 {approx = true} : vector<8x1xf32> -> vector<8x1xf32>
    %421 = vector.broadcast %420 : vector<8x1xf32> to vector<8x8xf32>
    %422 = arith.mulf %417, %421 : vector<8x8xf32>
    %cst_147 = arith.constant dense<0.000000e+00> : vector<8x8xf32>
    %423 = tpu.matmul %422, %407, %cst_147 {dimension_numbers = #tpu.dot_dimension_numbers<[1], [0], [0], [1], [0, 0, 1, 1], [], []>} : vector<8x8xf32>, vector<8x8xf32>, vector<8x8xf32> -> vector<8x8xf32>
    %424 = vector.extract_strided_slice %287 {offsets = [8, 24], sizes = [8, 8], strides = [1, 1]} : vector<16x96xf32> to vector<8x8xf32>
    %425 = vector.extract_strided_slice %287 {offsets = [8, 56], sizes = [8, 8], strides = [1, 1]} : vector<16x96xf32> to vector<8x8xf32>
    %426 = vector.extract_strided_slice %287 {offsets = [8, 88], sizes = [8, 8], strides = [1, 1]} : vector<16x96xf32> to vector<8x8xf32>
    %cst_148 = arith.constant dense<0.000000e+00> : vector<8x8xf32>
    %427 = tpu.matmul %424, %425, %cst_148 {dimension_numbers = #tpu.dot_dimension_numbers<[1], [1], [0], [0], [0, 0, 1, 0], [], []>} : vector<8x8xf32>, vector<8x8xf32>, vector<8x8xf32> -> vector<8x8xf32>
    %cst_149 = arith.constant 0.353553385 : f32
    %428 = vector.broadcast %cst_149 : f32 to vector<8x8xf32>
    %429 = arith.mulf %427, %428 : vector<8x8xf32>
    %430 = vector.broadcast %366 : vector<1x8xf32> to vector<8x8xf32>
    %431 = arith.addf %429, %430 : vector<8x8xf32>
    %cst_150 = arith.constant dense<0xFF800000> : vector<8xf32>
    %432 = vector.multi_reduction <maximumf>, %431, %cst_150 [1] : vector<8x8xf32> to vector<8xf32>
    %433 = vector.shape_cast %432 : vector<8xf32> to vector<8x1xf32>
    %434 = vector.broadcast %433 : vector<8x1xf32> to vector<8x8xf32>
    %435 = arith.subf %431, %434 : vector<8x8xf32>
    %436 = math.exp %435 : vector<8x8xf32>
    %cst_151 = arith.constant dense<0.000000e+00> : vector<8xf32>
    %437 = vector.multi_reduction <add>, %436, %cst_151 [1] : vector<8x8xf32> to vector<8xf32>
    %438 = vector.shape_cast %437 : vector<8xf32> to vector<8x1xf32>
    %439 = tpu.reciprocal %438 {approx = true} : vector<8x1xf32> -> vector<8x1xf32>
    %440 = vector.broadcast %439 : vector<8x1xf32> to vector<8x8xf32>
    %441 = arith.mulf %436, %440 : vector<8x8xf32>
    %cst_152 = arith.constant dense<0.000000e+00> : vector<8x8xf32>
    %442 = tpu.matmul %441, %426, %cst_152 {dimension_numbers = #tpu.dot_dimension_numbers<[1], [0], [0], [1], [0, 0, 1, 1], [], []>} : vector<8x8xf32>, vector<8x8xf32>, vector<8x8xf32> -> vector<8x8xf32>
    %443 = tpu.concatenate %385, %404, %423, %442 in 1 : vector<8x8xf32>, vector<8x8xf32>, vector<8x8xf32>, vector<8x8xf32> -> vector<8x32xf32>
    %444 = tpu.concatenate %365, %443 in 0 : vector<8x32xf32>, vector<8x32xf32> -> vector<16x32xf32>
    %c1_153 = arith.constant 1 : index
    %c0_154 = arith.constant 0 : index
    %c0_155 = arith.constant 0 : index
    %445 = vector.load %arg6[%c1_153, %c0_154, %c0_155] : memref<2x32x32xbf16, #tpu.memory_space<vmem>>, vector<1x32x32xbf16>
    %446 = vector.shape_cast %445 : vector<1x32x32xbf16> to vector<32x32xbf16>
    %447 = arith.truncf %444 : vector<16x32xf32> to vector<16x32xbf16>
    %cst_156 = arith.constant dense<0.000000e+00> : vector<16x32xf32>
    %448 = tpu.matmul %447, %446, %cst_156 {dimension_numbers = #tpu.dot_dimension_numbers<[1], [0], [0], [1], [0, 0, 1, 1], [], []>} : vector<16x32xbf16>, vector<32x32xbf16>, vector<16x32xf32> -> vector<16x32xf32>
    %c1_157 = arith.constant 1 : index
    %c0_158 = arith.constant 0 : index
    %c0_159 = arith.constant 0 : index
    %449 = vector.load %arg7[%c1_157, %c0_158, %c0_159] : memref<2x1x32xf32, #tpu.memory_space<vmem>>, vector<1x1x32xf32>
    %450 = vector.shape_cast %449 : vector<1x1x32xf32> to vector<1x32xf32>
    %451 = vector.broadcast %450 : vector<1x32xf32> to vector<16x32xf32>
    %452 = arith.addf %448, %451 : vector<16x32xf32>
    %453 = arith.addf %452, %279 : vector<16x32xf32>
    %c1_160 = arith.constant 1 : index
    %c0_161 = arith.constant 0 : index
    %c0_162 = arith.constant 0 : index
    %454 = vector.load %arg8[%c1_160, %c0_161, %c0_162] : memref<2x1x32xf32, #tpu.memory_space<vmem>>, vector<1x1x32xf32>
    %455 = vector.shape_cast %454 : vector<1x1x32xf32> to vector<1x32xf32>
    %c1_163 = arith.constant 1 : index
    %c0_164 = arith.constant 0 : index
    %c0_165 = arith.constant 0 : index
    %456 = vector.load %arg9[%c1_163, %c0_164, %c0_165] : memref<2x1x32xf32, #tpu.memory_space<vmem>>, vector<1x1x32xf32>
    %457 = vector.shape_cast %456 : vector<1x1x32xf32> to vector<1x32xf32>
    %cst_166 = arith.constant dense<0.000000e+00> : vector<16xf32>
    %458 = vector.multi_reduction <add>, %453, %cst_166 [1] : vector<16x32xf32> to vector<16xf32>
    %459 = vector.shape_cast %458 : vector<16xf32> to vector<16x1xf32>
    %cst_167 = arith.constant 3.200000e+01 : f32
    %460 = vector.broadcast %cst_167 : f32 to vector<16x1xf32>
    %461 = arith.divf %459, %460 : vector<16x1xf32>
    %462 = vector.broadcast %461 : vector<16x1xf32> to vector<16x32xf32>
    %463 = arith.subf %453, %462 : vector<16x32xf32>
    %464 = arith.mulf %463, %463 : vector<16x32xf32>
    %cst_168 = arith.constant dense<0.000000e+00> : vector<16xf32>
    %465 = vector.multi_reduction <add>, %464, %cst_168 [1] : vector<16x32xf32> to vector<16xf32>
    %466 = vector.shape_cast %465 : vector<16xf32> to vector<16x1xf32>
    %cst_169 = arith.constant 3.200000e+01 : f32
    %467 = vector.broadcast %cst_169 : f32 to vector<16x1xf32>
    %468 = arith.divf %466, %467 : vector<16x1xf32>
    %cst_170 = arith.constant 9.99999996E-13 : f32
    %469 = vector.broadcast %cst_170 : f32 to vector<16x1xf32>
    %470 = arith.addf %468, %469 : vector<16x1xf32>
    %471 = math.rsqrt %470 : vector<16x1xf32>
    %472 = vector.broadcast %471 : vector<16x1xf32> to vector<16x32xf32>
    %473 = arith.mulf %463, %472 : vector<16x32xf32>
    %474 = vector.broadcast %455 : vector<1x32xf32> to vector<16x32xf32>
    %475 = arith.mulf %473, %474 : vector<16x32xf32>
    %476 = vector.broadcast %457 : vector<1x32xf32> to vector<16x32xf32>
    %477 = arith.addf %475, %476 : vector<16x32xf32>
    %c1_171 = arith.constant 1 : index
    %c0_172 = arith.constant 0 : index
    %c0_173 = arith.constant 0 : index
    %478 = vector.load %arg10[%c1_171, %c0_172, %c0_173] : memref<2x32x64xbf16, #tpu.memory_space<vmem>>, vector<1x32x64xbf16>
    %479 = vector.shape_cast %478 : vector<1x32x64xbf16> to vector<32x64xbf16>
    %480 = arith.truncf %477 : vector<16x32xf32> to vector<16x32xbf16>
    %cst_174 = arith.constant dense<0.000000e+00> : vector<16x64xf32>
    %481 = tpu.matmul %480, %479, %cst_174 {dimension_numbers = #tpu.dot_dimension_numbers<[1], [0], [0], [1], [0, 0, 1, 1], [], []>} : vector<16x32xbf16>, vector<32x64xbf16>, vector<16x64xf32> -> vector<16x64xf32>
    %c1_175 = arith.constant 1 : index
    %c0_176 = arith.constant 0 : index
    %c0_177 = arith.constant 0 : index
    %482 = vector.load %arg11[%c1_175, %c0_176, %c0_177] : memref<2x1x64xf32, #tpu.memory_space<vmem>>, vector<1x1x64xf32>
    %483 = vector.shape_cast %482 : vector<1x1x64xf32> to vector<1x64xf32>
    %484 = vector.broadcast %483 : vector<1x64xf32> to vector<16x64xf32>
    %485 = arith.addf %481, %484 : vector<16x64xf32>
    %cst_178 = arith.constant 5.000000e-01 : f32
    %486 = vector.broadcast %cst_178 : f32 to vector<16x64xf32>
    %487 = arith.mulf %486, %485 : vector<16x64xf32>
    %cst_179 = arith.constant 4.471500e-02 : f32
    %488 = vector.broadcast %cst_179 : f32 to vector<16x64xf32>
    %489 = arith.mulf %488, %485 : vector<16x64xf32>
    %490 = arith.mulf %489, %485 : vector<16x64xf32>
    %491 = arith.mulf %490, %485 : vector<16x64xf32>
    %492 = arith.addf %485, %491 : vector<16x64xf32>
    %cst_180 = arith.constant 0.797884583 : f32
    %493 = vector.broadcast %cst_180 : f32 to vector<16x64xf32>
    %494 = arith.mulf %493, %492 : vector<16x64xf32>
    %495 = math.tanh %494 : vector<16x64xf32>
    %cst_181 = arith.constant 1.000000e+00 : f32
    %496 = vector.broadcast %cst_181 : f32 to vector<16x64xf32>
    %497 = arith.addf %496, %495 : vector<16x64xf32>
    %498 = arith.mulf %487, %497 : vector<16x64xf32>
    %c1_182 = arith.constant 1 : index
    %c0_183 = arith.constant 0 : index
    %c0_184 = arith.constant 0 : index
    %499 = vector.load %arg12[%c1_182, %c0_183, %c0_184] : memref<2x64x32xbf16, #tpu.memory_space<vmem>>, vector<1x64x32xbf16>
    %500 = vector.shape_cast %499 : vector<1x64x32xbf16> to vector<64x32xbf16>
    %501 = arith.truncf %498 : vector<16x64xf32> to vector<16x64xbf16>
    %cst_185 = arith.constant dense<0.000000e+00> : vector<16x32xf32>
    %502 = tpu.matmul %501, %500, %cst_185 {dimension_numbers = #tpu.dot_dimension_numbers<[1], [0], [0], [1], [0, 0, 1, 1], [], []>} : vector<16x64xbf16>, vector<64x32xbf16>, vector<16x32xf32> -> vector<16x32xf32>
    %c1_186 = arith.constant 1 : index
    %c0_187 = arith.constant 0 : index
    %c0_188 = arith.constant 0 : index
    %503 = vector.load %arg13[%c1_186, %c0_187, %c0_188] : memref<2x1x32xf32, #tpu.memory_space<vmem>>, vector<1x1x32xf32>
    %504 = vector.shape_cast %503 : vector<1x1x32xf32> to vector<1x32xf32>
    %505 = vector.broadcast %504 : vector<1x32xf32> to vector<16x32xf32>
    %506 = arith.addf %502, %505 : vector<16x32xf32>
    %507 = arith.addf %506, %477 : vector<16x32xf32>
    %c1_189 = arith.constant 1 : index
    %c0_190 = arith.constant 0 : index
    %c0_191 = arith.constant 0 : index
    %508 = vector.load %arg14[%c1_189, %c0_190, %c0_191] : memref<2x1x32xf32, #tpu.memory_space<vmem>>, vector<1x1x32xf32>
    %509 = vector.shape_cast %508 : vector<1x1x32xf32> to vector<1x32xf32>
    %c1_192 = arith.constant 1 : index
    %c0_193 = arith.constant 0 : index
    %c0_194 = arith.constant 0 : index
    %510 = vector.load %arg15[%c1_192, %c0_193, %c0_194] : memref<2x1x32xf32, #tpu.memory_space<vmem>>, vector<1x1x32xf32>
    %511 = vector.shape_cast %510 : vector<1x1x32xf32> to vector<1x32xf32>
    %cst_195 = arith.constant dense<0.000000e+00> : vector<16xf32>
    %512 = vector.multi_reduction <add>, %507, %cst_195 [1] : vector<16x32xf32> to vector<16xf32>
    %513 = vector.shape_cast %512 : vector<16xf32> to vector<16x1xf32>
    %cst_196 = arith.constant 3.200000e+01 : f32
    %514 = vector.broadcast %cst_196 : f32 to vector<16x1xf32>
    %515 = arith.divf %513, %514 : vector<16x1xf32>
    %516 = vector.broadcast %515 : vector<16x1xf32> to vector<16x32xf32>
    %517 = arith.subf %507, %516 : vector<16x32xf32>
    %518 = arith.mulf %517, %517 : vector<16x32xf32>
    %cst_197 = arith.constant dense<0.000000e+00> : vector<16xf32>
    %519 = vector.multi_reduction <add>, %518, %cst_197 [1] : vector<16x32xf32> to vector<16xf32>
    %520 = vector.shape_cast %519 : vector<16xf32> to vector<16x1xf32>
    %cst_198 = arith.constant 3.200000e+01 : f32
    %521 = vector.broadcast %cst_198 : f32 to vector<16x1xf32>
    %522 = arith.divf %520, %521 : vector<16x1xf32>
    %cst_199 = arith.constant 9.99999996E-13 : f32
    %523 = vector.broadcast %cst_199 : f32 to vector<16x1xf32>
    %524 = arith.addf %522, %523 : vector<16x1xf32>
    %525 = math.rsqrt %524 : vector<16x1xf32>
    %526 = vector.broadcast %525 : vector<16x1xf32> to vector<16x32xf32>
    %527 = arith.mulf %517, %526 : vector<16x32xf32>
    %528 = vector.broadcast %509 : vector<1x32xf32> to vector<16x32xf32>
    %529 = arith.mulf %527, %528 : vector<16x32xf32>
    %530 = vector.broadcast %511 : vector<1x32xf32> to vector<16x32xf32>
    %531 = arith.addf %529, %530 : vector<16x32xf32>
    %532 = vector.extract_strided_slice %531 {offsets = [0, 0], sizes = [1, 32], strides = [1, 1]} : vector<16x32xf32> to vector<1x32xf32>
    %533 = vector.extract_strided_slice %531 {offsets = [8, 0], sizes = [1, 32], strides = [1, 1]} : vector<16x32xf32> to vector<1x32xf32>
    %534 = tpu.concatenate %532, %533 in 0 : vector<1x32xf32>, vector<1x32xf32> -> vector<2x32xf32>
    %c0_200 = arith.constant 0 : index
    %c0_201 = arith.constant 0 : index
    %535 = vector.load %arg16[%c0_200, %c0_201] : memref<32x32xbf16, #tpu.memory_space<vmem>>, vector<32x32xbf16>
    %536 = arith.truncf %534 : vector<2x32xf32> to vector<2x32xbf16>
    %cst_202 = arith.constant dense<0.000000e+00> : vector<2x32xf32>
    %537 = tpu.matmul %536, %535, %cst_202 {dimension_numbers = #tpu.dot_dimension_numbers<[1], [0], [0], [1], [0, 0, 1, 1], [], []>} : vector<2x32xbf16>, vector<32x32xbf16>, vector<2x32xf32> -> vector<2x32xf32>
    %c0_203 = arith.constant 0 : index
    %c0_204 = arith.constant 0 : index
    %538 = vector.load %arg17[%c0_203, %c0_204] : memref<1x32xf32, #tpu.memory_space<vmem>>, vector<1x32xf32>
    %539 = vector.broadcast %538 : vector<1x32xf32> to vector<2x32xf32>
    %540 = arith.addf %537, %539 : vector<2x32xf32>
    %541 = math.tanh %540 : vector<2x32xf32>
    %c0_205 = arith.constant 0 : index
    %c0_206 = arith.constant 0 : index
    %542 = vector.load %arg18[%c0_205, %c0_206] : memref<32x8xbf16, #tpu.memory_space<vmem>>, vector<32x8xbf16>
    %543 = arith.truncf %541 : vector<2x32xf32> to vector<2x32xbf16>
    %cst_207 = arith.constant dense<0.000000e+00> : vector<2x8xf32>
    %544 = tpu.matmul %543, %542, %cst_207 {dimension_numbers = #tpu.dot_dimension_numbers<[1], [0], [0], [1], [0, 0, 1, 1], [], []>} : vector<2x32xbf16>, vector<32x8xbf16>, vector<2x8xf32> -> vector<2x8xf32>
    %c0_208 = arith.constant 0 : index
    %c0_209 = arith.constant 0 : index
    %545 = vector.load %arg19[%c0_208, %c0_209] : memref<1x8xf32, #tpu.memory_space<vmem>>, vector<1x8xf32>
    %546 = vector.broadcast %545 : vector<1x8xf32> to vector<2x8xf32>
    %547 = arith.addf %544, %546 : vector<2x8xf32>
    %c0_210 = arith.constant 0 : index
    %c0_211 = arith.constant 0 : index
    %548 = vector.load %arg20[%c0_210, %c0_211] : memref<2x8xf32, #tpu.memory_space<vmem>>, vector<2x8xf32>
    tpu.vector_store %arg20[%c0_210, %c0_211], %547 {strides = array<i32>} : memref<2x8xf32, #tpu.memory_space<vmem>>, vector<2x8xf32>,
    return
  }
}

</mosaic_0001>

<llo_original>
// kernel: classification_model.1
$region0: #{classification_model.1}
  #allocation0 [shape = 'u32[]', space=smem, size = 0x4, offset = 0x4, fixed_abs, tag = 'smem constant byte address 0x4 - core index']
  #allocation1 [shape = 'u32[144,128]{1,0:T(1,128)}', space=vmem, size = 0x12000, scoped, tag = 'internal scratch']
  %s0 = inlined_call_operand.vmem [shape: f32[16,32], index: 0, kind: input, shape index: {}]
  %s1 = inlined_call_operand.vmem [shape: f32[2,8], index: 1, kind: input, shape index: {}]
  %s2 = inlined_call_operand.vmem [shape: f32[1,32], index: 2, kind: input, shape index: {}]
  %s3 = inlined_call_operand.vmem [shape: f32[1,32], index: 3, kind: input, shape index: {}]
  %s4 = inlined_call_operand.vmem [shape: bf16[2,32,96], index: 4, kind: input, shape index: {}]
  %s5 = inlined_call_operand.vmem [shape: f32[2,1,96], index: 5, kind: input, shape index: {}]
  %s6 = inlined_call_operand.vmem [shape: bf16[2,32,32], index: 6, kind: input, shape index: {}]
  %s7 = inlined_call_operand.vmem [shape: f32[2,1,32], index: 7, kind: input, shape index: {}]
  %s8 = inlined_call_operand.vmem [shape: f32[2,1,32], index: 8, kind: input, shape index: {}]
  %s9 = inlined_call_operand.vmem [shape: f32[2,1,32], index: 9, kind: input, shape index: {}]
  %s10 = inlined_call_operand.vmem [shape: bf16[2,32,64], index: 10, kind: input, shape index: {}]
  %s11 = inlined_call_operand.vmem [shape: f32[2,1,64], index: 11, kind: input, shape index: {}]
  %s12 = inlined_call_operand.vmem [shape: bf16[2,64,32], index: 12, kind: input, shape index: {}]
  %s13 = inlined_call_operand.vmem [shape: f32[2,1,32], index: 13, kind: input, shape index: {}]
  %s14 = inlined_call_operand.vmem [shape: f32[2,1,32], index: 14, kind: input, shape index: {}]
  %s15 = inlined_call_operand.vmem [shape: f32[2,1,32], index: 15, kind: input, shape index: {}]
  %s16 = inlined_call_operand.vmem [shape: bf16[32,32], index: 16, kind: input, shape index: {}]
  %s17 = inlined_call_operand.vmem [shape: f32[1,32], index: 17, kind: input, shape index: {}]
  %s18 = inlined_call_operand.vmem [shape: bf16[32,8], index: 18, kind: input, shape index: {}]
  %s19 = inlined_call_operand.vmem [shape: f32[1,8], index: 19, kind: input, shape index: {}]
  %s20 = inlined_call_operand.hbm [shape: f32[2,8], index: 20, kind: output, shape index: {}]
  %s21 = sld [smem:[#allocation0]]
  $region90: #{classification_model.1} parent=0
    _
  %s23 = ssub.s32 1, %s21
  %s24 = scalar_select 0, %s23, %s21
  $region1: #{classification_model.1} parent=0
    #allocation2 [shape = 'u8[1024]{0}', space=vmem, size = 0x400, scoped, tag = 'output window, operand 0, single buffered']
    #allocation3 [shape = 's32[1]{0}', space=sflag, size = 0x4, scoped, tag = 'scoped memory for classification_model.1']
    %25 = vsyncpa [#allocation3], 0
    // Predicated region
    $region2: #{classification_model.1} parent=1 // pred_check
      _
    $region3: #{classification_model.1} parent=1 // pred_check_branch
      %27 = sbr.rel (0) target = $region5
    $region4: #{classification_model.1} parent=1 // pred_region
      _
    $region5: #{classification_model.1} parent=1 // pred_fallthru
      _
    // Predicated region
    $region6: #{classification_model.1} parent=1 // pred_check
      _
    $region7: #{classification_model.1} parent=1 // pred_check_branch
      %29 = sbr.rel (0) target = $region9
    $region8: #{classification_model.1} parent=1 // pred_region
      _
    $region9: #{classification_model.1} parent=1 // pred_fallthru
      _
    // Predicated region
    $region10: #{classification_model.1} parent=1 // pred_check
      _
    $region11: #{classification_model.1} parent=1 // pred_check_branch
      %31 = sbr.rel (0) target = $region13
    $region12: #{classification_model.1} parent=1 // pred_region
      _
    $region13: #{classification_model.1} parent=1 // pred_fallthru
      _
    // Predicated region
    $region14: #{classification_model.1} parent=1 // pred_check
      _
    $region15: #{classification_model.1} parent=1 // pred_check_branch
      %33 = sbr.rel (0) target = $region17
    $region16: #{classification_model.1} parent=1 // pred_region
      _
    $region17: #{classification_model.1} parent=1 // pred_fallthru
      _
    // Predicated region
    $region18: #{classification_model.1} parent=1 // pred_check
      _
    $region19: #{classification_model.1} parent=1 // pred_check_branch
      %35 = sbr.rel (0) target = $region21
    $region20: #{classification_model.1} parent=1 // pred_region
      _
    $region21: #{classification_model.1} parent=1 // pred_fallthru
      _
    // Predicated region
    $region22: #{classification_model.1} parent=1 // pred_check
      _
    $region23: #{classification_model.1} parent=1 // pred_check_branch
      %37 = sbr.rel (0) target = $region25
    $region24: #{classification_model.1} parent=1 // pred_region
      _
    $region25: #{classification_model.1} parent=1 // pred_fallthru
      _
    // Predicated region
    $region26: #{classification_model.1} parent=1 // pred_check
      _
    $region27: #{classification_model.1} parent=1 // pred_check_branch
      %39 = sbr.rel (0) target = $region29
    $region28: #{classification_model.1} parent=1 // pred_region
      _
    $region29: #{classification_model.1} parent=1 // pred_fallthru
      _
    // Predicated region
    $region30: #{classification_model.1} parent=1 // pred_check
      _
    $region31: #{classification_model.1} parent=1 // pred_check_branch
      %41 = sbr.rel (0) target = $region33
    $region32: #{classification_model.1} parent=1 // pred_region
      _
    $region33: #{classification_model.1} parent=1 // pred_fallthru
      _
    // Predicated region
    $region34: #{classification_model.1} parent=1 // pred_check
      _
    $region35: #{classification_model.1} parent=1 // pred_check_branch
      %43 = sbr.rel (0) target = $region37
    $region36: #{classification_model.1} parent=1 // pred_region
      _
    $region37: #{classification_model.1} parent=1 // pred_fallthru
      _
    // Predicated region
    $region38: #{classification_model.1} parent=1 // pred_check
      _
    $region39: #{classification_model.1} parent=1 // pred_check_branch
      %45 = sbr.rel (0) target = $region41
    $region40: #{classification_model.1} parent=1 // pred_region
      _
    $region41: #{classification_model.1} parent=1 // pred_fallthru
      _
    // Predicated region
    $region42: #{classification_model.1} parent=1 // pred_check
      _
    $region43: #{classification_model.1} parent=1 // pred_check_branch
      %47 = sbr.rel (0) target = $region45
    $region44: #{classification_model.1} parent=1 // pred_region
      _
    $region45: #{classification_model.1} parent=1 // pred_fallthru
      _
    // Predicated region
    $region46: #{classification_model.1} parent=1 // pred_check
      _
    $region47: #{classification_model.1} parent=1 // pred_check_branch
      %49 = sbr.rel (0) target = $region49
    $region48: #{classification_model.1} parent=1 // pred_region
      _
    $region49: #{classification_model.1} parent=1 // pred_fallthru
      _
    // Predicated region
    $region50: #{classification_model.1} parent=1 // pred_check
      _
    $region51: #{classification_model.1} parent=1 // pred_check_branch
      %51 = sbr.rel (0) target = $region53
    $region52: #{classification_model.1} parent=1 // pred_region
      _
    $region53: #{classification_model.1} parent=1 // pred_fallthru
      _
    // Predicated region
    $region54: #{classification_model.1} parent=1 // pred_check
      _
    $region55: #{classification_model.1} parent=1 // pred_check_branch
      %53 = sbr.rel (0) target = $region57
    $region56: #{classification_model.1} parent=1 // pred_region
      _
    $region57: #{classification_model.1} parent=1 // pred_fallthru
      _
    // Predicated region
    $region58: #{classification_model.1} parent=1 // pred_check
      _
    $region59: #{classification_model.1} parent=1 // pred_check_branch
      %55 = sbr.rel (0) target = $region61
    $region60: #{classification_model.1} parent=1 // pred_region
      _
    $region61: #{classification_model.1} parent=1 // pred_fallthru
      _
    // Predicated region
    $region62: #{classification_model.1} parent=1 // pred_check
      _
    $region63: #{classification_model.1} parent=1 // pred_check_branch
      %57 = sbr.rel (0) target = $region65
    $region64: #{classification_model.1} parent=1 // pred_region
      _
    $region65: #{classification_model.1} parent=1 // pred_fallthru
      _
    // Predicated region
    $region66: #{classification_model.1} parent=1 // pred_check
      _
    $region67: #{classification_model.1} parent=1 // pred_check_branch
      %59 = sbr.rel (0) target = $region69
    $region68: #{classification_model.1} parent=1 // pred_region
      _
    $region69: #{classification_model.1} parent=1 // pred_fallthru
      _
    // Predicated region
    $region70: #{classification_model.1} parent=1 // pred_check
      _
    $region71: #{classification_model.1} parent=1 // pred_check_branch
      %61 = sbr.rel (0) target = $region73
    $region72: #{classification_model.1} parent=1 // pred_region
      _
    $region73: #{classification_model.1} parent=1 // pred_fallthru
      _
    // Predicated region
    $region74: #{classification_model.1} parent=1 // pred_check
      _
    $region75: #{classification_model.1} parent=1 // pred_check_branch
      %63 = sbr.rel (0) target = $region77
    $region76: #{classification_model.1} parent=1 // pred_region
      _
    $region77: #{classification_model.1} parent=1 // pred_fallthru
      _
    // Predicated region
    $region78: #{classification_model.1} parent=1 // pred_check
      _
    $region79: #{classification_model.1} parent=1 // pred_check_branch
      %65 = sbr.rel (0) target = $region81
    $region80: #{classification_model.1} parent=1 // pred_region
      _
    $region81: #{classification_model.1} parent=1 // pred_fallthru
      _
    %v67 = vld [vmem:[%s1] sm:$0x3]
    %v68 = vsub.f32 1.0, %v67
    %v69 = vmul.f32 %v68, -10000.0
    %v70 = vld [vmem:[%s0] sm:$0xff]
    %v71 = vld [vmem:[%s0 + $0x8] sm:$0xff]
    %v72 = vld [vmem:[%s2] sm:$0x1]
    %v73 = vld [vmem:[%s3] sm:$0x1]
    %vm74 = vcmask 261120
    %v75 = vsel %vm74, %v70, 0.0
    %76 = vadd.xlane.f32.xlu0 %v75
    %v77 = vpop.xlane.xlu0 %76
    %v78 = vsel %vm74, %v71, 0.0
    %79 = vadd.xlane.f32.xlu0 %v78
    %v80 = vpop.xlane.xlu0 %79
    %v81 = vrcp.pop 32.0
    %v82 = vmul.f32 %v77, %v81
    %v83 = vmul.f32 %v80, %v81
    %v84 = vsub.f32 %v70, %v82
    %v85 = vsub.f32 %v71, %v83
    %v86 = vmul.f32 %v84, %v84
    %v87 = vmul.f32 %v85, %v85
    %v88 = vsel %vm74, %v86, 0.0
    %89 = vadd.xlane.f32.xlu0 %v88
    %v90 = vpop.xlane.xlu0 %89
    %v91 = vsel %vm74, %v87, 0.0
    %92 = vadd.xlane.f32.xlu0 %v91
    %v93 = vpop.xlane.xlu0 %92
    %v94 = vmul.f32 %v90, %v81
    %v95 = vmul.f32 %v93, %v81
    %v96 = vadd.f32 %v94, 1e-12
    %v97 = vadd.f32 %v95, 1e-12
    %v98 = vrsqrt.pop %v96
    %v99 = vrsqrt.pop %v97
    %v100 = vmul.f32 %v84, %v98
    %v101 = vmul.f32 %v85, %v99
    %v103 = vlaneseq
    %v104 = vshrl.u32 %v103, 7
    %v105 = vsub.s32 0, %v104
    %v106 = vrot.slane %v72, %v105
    %v108 = vmul.f32 %v100, %v106
    %v109 = vmul.f32 %v101, %v106
    %v111 = vlaneseq
    %v112 = vshrl.u32 %v111, 7
    %v113 = vsub.s32 0, %v112
    %v114 = vrot.slane %v73, %v113
    %v116 = vadd.f32 %v108, %v114
    %v117 = vadd.f32 %v109, %v114
    %v118 = vld [vmem:[%s4] sm:$0xf]
    %v119 = vld [vmem:[%s4 + $0x4] sm:$0xf]
    %v120 = vld [vmem:[%s4 + $0x8] sm:$0xf]
    %v121 = vld [vmem:[%s4 + $0xc] sm:$0xf]
    %v122 = vpack.c.bf16 %v117, %v116
    %v123 = vld [vmem:[%s5] sm:$0x1]
    %v125 = vlaneseq
    %v126 = vshrl.u32 %v125, 7
    %v127 = vsub.s32 0, %v126
    %v128 = vrot.slane %v123, %v127
    %v134 = vunpack.c.l.b16 %v118
    %v135 = vunpack.c.l.b16 %v119
    %v136 = vunpack.c.l.b16 %v120
    %v137 = vunpack.c.l.b16 %v121
    %v138 = vpack.c.b16 %v135, %v134
    %v139 = vpack.c.b16 %v137, %v136
    %v143 = vsel %vm74, %v122, 0
    %145 = vmatprep.subr.bf16.mxu0 0
    %146 = vmatpush1.bf16.msra.mxu0 0
    %147 = vmatprep.subr.bf16.mxu0 0
    %148 = vmatpush1.bf16.msra.mxu0 0
    %149 = vmatprep.subr.bf16.mxu0 0
    %150 = vmatpush1.bf16.msra.mxu0 0
    %151 = vmatprep.subr.bf16.mxu0 0
    %152 = vmatpush1.bf16.msra.mxu0 0
    %153 = vmatprep.subr.bf16.mxu0 0
    %154 = vmatpush1.bf16.msra.mxu0 0
    %155 = vmatprep.subr.bf16.mxu0 0
    %156 = vmatpush1.bf16.msra.mxu0 0
    %157 = vmatprep.subr.bf16.mxu0 0
    %158 = vmatpush1.bf16.msra.mxu0 %v139
    %159 = vmatprep.subr.bf16.mxu0 0
    %160 = vmatpush1.bf16.msra.mxu0 %v138
    %161 = vmatprep.subr.bf16.mxu0 0
    %162 = vmatpush2.bf16.msra.mxu0 0
    %163 = vmatprep.subr.bf16.mxu0 0
    %164 = vmatpush2.bf16.msra.mxu0 0
    %165 = vmatprep.subr.bf16.mxu0 0
    %166 = vmatpush2.bf16.msra.mxu0 0
    %167 = vmatprep.subr.bf16.mxu0 0
    %168 = vmatpush2.bf16.msra.mxu0 0
    %169 = vmatprep.subr.bf16.mxu0 0
    %170 = vmatpush2.bf16.msra.mxu0 0
    %171 = vmatprep.subr.bf16.mxu0 0
    %172 = vmatpush2.bf16.msra.mxu0 0
    %173 = vmatprep.subr.bf16.mxu0 0
    %174 = vmatpush2.bf16.msra.mxu0 0
    %175 = vmatprep.subr.bf16.mxu0 0
    %176 = vmatpush2.bf16.msra.mxu0 0
    %177 = vmatprep.mubr.bf16.mxu0 0
    %178 = vmatmul.mubr.bf16.gmra.mxu0 %v143
    %v179 = vpop.f32.mrf.mxu0
    %v180 = vadd.f32 %v128, %v179
    %v181 = vpop.f32.mrf.mxu0
    %v182 = vpop.f32.mrf.mxu0
    %v183 = vadd.f32 %v128, %v182
    %v184 = vpop.f32.mrf.mxu0
    %185 = vdwg.mxu0
    %187 = vrot.lane.b32.xlu0 %v180, 96
    %v188 = vpop.permute.xlu0 %187
    %vm189 = vcmask 64512
    %v190 = vsel %vm189, %v180, 0
    %v192 = vsel %vm189, %v188, 0
    %194 = vmatprep.subr.mxu0 0.0
    %195 = vmatpush1.xpose.msra.mxu0 0.0
    %196 = vmatprep.subr.mxu0 0.0
    %197 = vmatpush1.xpose.msra.mxu0 0.0
    %198 = vmatprep.subr.mxu0 0.0
    %199 = vmatpush1.xpose.msra.mxu0 0.0
    %200 = vmatprep.subr.mxu0 0.0
    %201 = vmatpush1.xpose.msra.mxu0 0.0
    %202 = vmatprep.subr.mxu0 0.0
    %203 = vmatpush1.xpose.msra.mxu0 0.0
    %204 = vmatprep.subr.mxu0 0.0
    %205 = vmatpush1.xpose.msra.mxu0 0.0
    %206 = vmatprep.subr.mxu0 0.0
    %207 = vmatpush1.xpose.msra.mxu0 0.0
    %208 = vmatprep.subr.mxu0 0.0
    %209 = vmatpush1.xpose.msra.mxu0 0.0
    %210 = vmatprep.subr.mxu0 0.0
    %211 = vmatpush1.xpose.msra.mxu0 0.0
    %212 = vmatprep.subr.mxu0 0.0
    %213 = vmatpush1.xpose.msra.mxu0 0.0
    %214 = vmatprep.subr.mxu0 0.0
    %215 = vmatpush1.xpose.msra.mxu0 0.0
    %216 = vmatprep.subr.mxu0 0.0
    %217 = vmatpush1.xpose.msra.mxu0 0.0
    %218 = vmatprep.subr.mxu0 0.0
    %219 = vmatpush1.xpose.msra.mxu0 0.0
    %220 = vmatprep.subr.mxu0 0.0
    %221 = vmatpush1.xpose.msra.mxu0 0.0
    %222 = vmatprep.subr.mxu0 0.0
    %223 = vmatpush1.xpose.msra.mxu0 0.0
    %224 = vmatprep.subr.mxu0 0.0
    %225 = vmatpush1.xpose.msra.mxu0 %v192
    %226 = vmatprep.subr.mxu0 0.0
    %227 = vmatpush2.xpose.msra.mxu0 0.0
    %228 = vmatprep.subr.mxu0 0.0
    %229 = vmatpush2.xpose.msra.mxu0 0.0
    %230 = vmatprep.subr.mxu0 0.0
    %231 = vmatpush2.xpose.msra.mxu0 0.0
    %232 = vmatprep.subr.mxu0 0.0
    %233 = vmatpush2.xpose.msra.mxu0 0.0
    %234 = vmatprep.subr.mxu0 0.0
    %235 = vmatpush2.xpose.msra.mxu0 0.0
    %236 = vmatprep.subr.mxu0 0.0
    %237 = vmatpush2.xpose.msra.mxu0 0.0
    %238 = vmatprep.subr.mxu0 0.0
    %239 = vmatpush2.xpose.msra.mxu0 0.0
    %240 = vmatprep.subr.mxu0 0.0
    %241 = vmatpush2.xpose.msra.mxu0 0.0
    %242 = vmatprep.subr.mxu0 0.0
    %243 = vmatpush2.xpose.msra.mxu0 0.0
    %244 = vmatprep.subr.mxu0 0.0
    %245 = vmatpush2.xpose.msra.mxu0 0.0
    %246 = vmatprep.subr.mxu0 0.0
    %247 = vmatpush2.xpose.msra.mxu0 0.0
    %248 = vmatprep.subr.mxu0 0.0
    %249 = vmatpush2.xpose.msra.mxu0 0.0
    %250 = vmatprep.subr.mxu0 0.0
    %251 = vmatpush2.xpose.msra.mxu0 0.0
    %252 = vmatprep.subr.mxu0 0.0
    %253 = vmatpush2.xpose.msra.mxu0 0.0
    %254 = vmatprep.subr.mxu0 0.0
    %255 = vmatpush2.xpose.msra.mxu0 0.0
    %256 = vmatprep.subr.mxu0 0.0
    %257 = vmatpush2.xpose.msra.mxu0 0.0
    %258 = vmatprep.mubr.f32.mxu0 0.0
    %259 = vmatmul.mubr.f32.gmra.mxu0 %v190
    %v260 = vpop.f32.mrf.mxu0
    %v261 = vadd.f32 0.0, %v260
    %v262 = vpop.f32.mrf.mxu0
    %263 = vdwg.mxu0
    %v264 = vmul.f32 %v261, 0.35355338
    %v265 = vlaneseq
    %v266 = vshrl.u32 %v265, 7
    %v267 = vsub.s32 0, %v266
    %v268 = vrot.slane %v69, %v267
    %v269 = vadd.f32 %v264, %v268
    %v270 = vsel %vm189, %v269, -inf
    %271 = vmax.xlane.f32.xlu0 %v270
    %v272 = vpop.xlane.xlu0 %271
    %v273 = vsub.f32 %v269, %v272
    %v274 = vmul.f32 %v273, 1.442695
    %v275 = vpow.pop %v274
    %v276 = vsel %vm189, %v275, 0.0
    %277 = vadd.xlane.f32.xlu0 %v276
    %v278 = vpop.xlane.xlu0 %277
    %v279 = vrcp.pop %v278
    %v280 = vmul.f32 %v275, %v279
    %281 = vrot.lane.b32.xlu0 %v180, 64
    %v282 = vpop.permute.xlu0 %281
    %v285 = vsel %vm189, %v280, 0
    %287 = vmatprep.subr.mxu0 0.0
    %288 = vmatpush1.msra.mxu0 0.0
    %289 = vmatprep.subr.mxu0 0.0
    %290 = vmatpush1.msra.mxu0 0.0
    %291 = vmatprep.subr.mxu0 0.0
    %292 = vmatpush1.msra.mxu0 0.0
    %293 = vmatprep.subr.mxu0 0.0
    %294 = vmatpush1.msra.mxu0 0.0
    %295 = vmatprep.subr.mxu0 0.0
    %296 = vmatpush1.msra.mxu0 0.0
    %297 = vmatprep.subr.mxu0 0.0
    %298 = vmatpush1.msra.mxu0 0.0
    %299 = vmatprep.subr.mxu0 0.0
    %300 = vmatpush1.msra.mxu0 0.0
    %301 = vmatprep.subr.mxu0 0.0
    %302 = vmatpush1.msra.mxu0 0.0
    %303 = vmatprep.subr.mxu0 0.0
    %304 = vmatpush1.msra.mxu0 0.0
    %305 = vmatprep.subr.mxu0 0.0
    %306 = vmatpush1.msra.mxu0 0.0
    %307 = vmatprep.subr.mxu0 0.0
    %308 = vmatpush1.msra.mxu0 0.0
    %309 = vmatprep.subr.mxu0 0.0
    %310 = vmatpush1.msra.mxu0 0.0
    %311 = vmatprep.subr.mxu0 0.0
    %312 = vmatpush1.msra.mxu0 0.0
    %313 = vmatprep.subr.mxu0 0.0
    %314 = vmatpush1.msra.mxu0 0.0
    %315 = vmatprep.subr.mxu0 0.0
    %316 = vmatpush1.msra.mxu0 0.0
    %317 = vmatprep.subr.mxu0 0.0
    %318 = vmatpush1.msra.mxu0 %v282
    %319 = vmatprep.subr.mxu0 0.0
    %320 = vmatpush2.msra.mxu0 0.0
    %321 = vmatprep.subr.mxu0 0.0
    %322 = vmatpush2.msra.mxu0 0.0
    %323 = vmatprep.subr.mxu0 0.0
    %324 = vmatpush2.msra.mxu0 0.0
    %325 = vmatprep.subr.mxu0 0.0
    %326 = vmatpush2.msra.mxu0 0.0
    %327 = vmatprep.subr.mxu0 0.0
    %328 = vmatpush2.msra.mxu0 0.0
    %329 = vmatprep.subr.mxu0 0.0
    %330 = vmatpush2.msra.mxu0 0.0
    %331 = vmatprep.subr.mxu0 0.0
    %332 = vmatpush2.msra.mxu0 0.0
    %333 = vmatprep.subr.mxu0 0.0
    %334 = vmatpush2.msra.mxu0 0.0
    %335 = vmatprep.subr.mxu0 0.0
    %336 = vmatpush2.msra.mxu0 0.0
    %337 = vmatprep.subr.mxu0 0.0
    %338 = vmatpush2.msra.mxu0 0.0
    %339 = vmatprep.subr.mxu0 0.0
    %340 = vmatpush2.msra.mxu0 0.0
    %341 = vmatprep.subr.mxu0 0.0
    %342 = vmatpush2.msra.mxu0 0.0
    %343 = vmatprep.subr.mxu0 0.0
    %344 = vmatpush2.msra.mxu0 0.0
    %345 = vmatprep.subr.mxu0 0.0
    %346 = vmatpush2.msra.mxu0 0.0
    %347 = vmatprep.subr.mxu0 0.0
    %348 = vmatpush2.msra.mxu0 0.0
    %349 = vmatprep.subr.mxu0 0.0
    %350 = vmatpush2.msra.mxu0 0.0
    %351 = vmatprep.mubr.f32.mxu0 0.0
    %352 = vmatmul.mubr.f32.gmra.mxu0 %v285
    %v353 = vpop.f32.mrf.mxu0
    %v354 = vadd.f32 0.0, %v353
    %v355 = vpop.f32.mrf.mxu0
    %356 = vdwg.mxu0
    %357 = vrot.lane.b32.xlu0 %v180, 120
    %v358 = vpop.permute.xlu0 %357
    %359 = vrot.lane.b32.xlu0 %v180, 88
    %v360 = vpop.permute.xlu0 %359
    %v361 = vsel %vm189, %v358, 0
    %v363 = vsel %vm189, %v360, 0
    %365 = vmatprep.subr.mxu0 0.0
    %366 = vmatpush1.xpose.msra.mxu0 0.0
    %367 = vmatprep.subr.mxu0 0.0
    %368 = vmatpush1.xpose.msra.mxu0 0.0
    %369 = vmatprep.subr.mxu0 0.0
    %370 = vmatpush1.xpose.msra.mxu0 0.0
    %371 = vmatprep.subr.mxu0 0.0
    %372 = vmatpush1.xpose.msra.mxu0 0.0
    %373 = vmatprep.subr.mxu0 0.0
    %374 = vmatpush1.xpose.msra.mxu0 0.0
    %375 = vmatprep.subr.mxu0 0.0
    %376 = vmatpush1.xpose.msra.mxu0 0.0
    %377 = vmatprep.subr.mxu0 0.0
    %378 = vmatpush1.xpose.msra.mxu0 0.0
    %379 = vmatprep.subr.mxu0 0.0
    %380 = vmatpush1.xpose.msra.mxu0 0.0
    %381 = vmatprep.subr.mxu0 0.0
    %382 = vmatpush1.xpose.msra.mxu0 0.0
    %383 = vmatprep.subr.mxu0 0.0
    %384 = vmatpush1.xpose.msra.mxu0 0.0
    %385 = vmatprep.subr.mxu0 0.0
    %386 = vmatpush1.xpose.msra.mxu0 0.0
    %387 = vmatprep.subr.mxu0 0.0
    %388 = vmatpush1.xpose.msra.mxu0 0.0
    %389 = vmatprep.subr.mxu0 0.0
    %390 = vmatpush1.xpose.msra.mxu0 0.0
    %391 = vmatprep.subr.mxu0 0.0
    %392 = vmatpush1.xpose.msra.mxu0 0.0
    %393 = vmatprep.subr.mxu0 0.0
    %394 = vmatpush1.xpose.msra.mxu0 0.0
    %395 = vmatprep.subr.mxu0 0.0
    %396 = vmatpush1.xpose.msra.mxu0 %v363
    %397 = vmatprep.subr.mxu0 0.0
    %398 = vmatpush2.xpose.msra.mxu0 0.0
    %399 = vmatprep.subr.mxu0 0.0
    %400 = vmatpush2.xpose.msra.mxu0 0.0
    %401 = vmatprep.subr.mxu0 0.0
    %402 = vmatpush2.xpose.msra.mxu0 0.0
    %403 = vmatprep.subr.mxu0 0.0
    %404 = vmatpush2.xpose.msra.mxu0 0.0
    %405 = vmatprep.subr.mxu0 0.0
    %406 = vmatpush2.xpose.msra.mxu0 0.0
    %407 = vmatprep.subr.mxu0 0.0
    %408 = vmatpush2.xpose.msra.mxu0 0.0
    %409 = vmatprep.subr.mxu0 0.0
    %410 = vmatpush2.xpose.msra.mxu0 0.0
    %411 = vmatprep.subr.mxu0 0.0
    %412 = vmatpush2.xpose.msra.mxu0 0.0
    %413 = vmatprep.subr.mxu0 0.0
    %414 = vmatpush2.xpose.msra.mxu0 0.0
    %415 = vmatprep.subr.mxu0 0.0
    %416 = vmatpush2.xpose.msra.mxu0 0.0
    %417 = vmatprep.subr.mxu0 0.0
    %418 = vmatpush2.xpose.msra.mxu0 0.0
    %419 = vmatprep.subr.mxu0 0.0
    %420 = vmatpush2.xpose.msra.mxu0 0.0
    %421 = vmatprep.subr.mxu0 0.0
    %422 = vmatpush2.xpose.msra.mxu0 0.0
    %423 = vmatprep.subr.mxu0 0.0
    %424 = vmatpush2.xpose.msra.mxu0 0.0
    %425 = vmatprep.subr.mxu0 0.0
    %426 = vmatpush2.xpose.msra.mxu0 0.0
    %427 = vmatprep.subr.mxu0 0.0
    %428 = vmatpush2.xpose.msra.mxu0 0.0
    %429 = vmatprep.mubr.f32.mxu0 0.0
    %430 = vmatmul.mubr.f32.gmra.mxu0 %v361
    %v431 = vpop.f32.mrf.mxu0
    %v432 = vadd.f32 0.0, %v431
    %v433 = vpop.f32.mrf.mxu0
    %434 = vdwg.mxu0
    %v435 = vmul.f32 %v432, 0.35355338
    %v436 = vadd.f32 %v435, %v268
    %v437 = vsel %vm189, %v436, -inf
    %438 = vmax.xlane.f32.xlu0 %v437
    %v439 = vpop.xlane.xlu0 %438
    %v440 = vsub.f32 %v436, %v439
    %v441 = vmul.f32 %v440, 1.442695
    %v442 = vpow.pop %v441
    %v443 = vsel %vm189, %v442, 0.0
    %444 = vadd.xlane.f32.xlu0 %v443
    %v445 = vpop.xlane.xlu0 %444
    %v446 = vrcp.pop %v445
    %v447 = vmul.f32 %v442, %v446
    %448 = vrot.lane.b32.xlu0 %v180, 56
    %v449 = vpop.permute.xlu0 %448
    %v452 = vsel %vm189, %v447, 0
    %454 = vmatprep.subr.mxu0 0.0
    %455 = vmatpush1.msra.mxu0 0.0
    %456 = vmatprep.subr.mxu0 0.0
    %457 = vmatpush1.msra.mxu0 0.0
    %458 = vmatprep.subr.mxu0 0.0
    %459 = vmatpush1.msra.mxu0 0.0
    %460 = vmatprep.subr.mxu0 0.0
    %461 = vmatpush1.msra.mxu0 0.0
    %462 = vmatprep.subr.mxu0 0.0
    %463 = vmatpush1.msra.mxu0 0.0
    %464 = vmatprep.subr.mxu0 0.0
    %465 = vmatpush1.msra.mxu0 0.0
    %466 = vmatprep.subr.mxu0 0.0
    %467 = vmatpush1.msra.mxu0 0.0
    %468 = vmatprep.subr.mxu0 0.0
    %469 = vmatpush1.msra.mxu0 0.0
    %470 = vmatprep.subr.mxu0 0.0
    %471 = vmatpush1.msra.mxu0 0.0
    %472 = vmatprep.subr.mxu0 0.0
    %473 = vmatpush1.msra.mxu0 0.0
    %474 = vmatprep.subr.mxu0 0.0
    %475 = vmatpush1.msra.mxu0 0.0
    %476 = vmatprep.subr.mxu0 0.0
    %477 = vmatpush1.msra.mxu0 0.0
    %478 = vmatprep.subr.mxu0 0.0
    %479 = vmatpush1.msra.mxu0 0.0
    %480 = vmatprep.subr.mxu0 0.0
    %481 = vmatpush1.msra.mxu0 0.0
    %482 = vmatprep.subr.mxu0 0.0
    %483 = vmatpush1.msra.mxu0 0.0
    %484 = vmatprep.subr.mxu0 0.0
    %485 = vmatpush1.msra.mxu0 %v449
    %486 = vmatprep.subr.mxu0 0.0
    %487 = vmatpush2.msra.mxu0 0.0
    %488 = vmatprep.subr.mxu0 0.0
    %489 = vmatpush2.msra.mxu0 0.0
    %490 = vmatprep.subr.mxu0 0.0
    %491 = vmatpush2.msra.mxu0 0.0
    %492 = vmatprep.subr.mxu0 0.0
    %493 = vmatpush2.msra.mxu0 0.0
    %494 = vmatprep.subr.mxu0 0.0
    %495 = vmatpush2.msra.mxu0 0.0
    %496 = vmatprep.subr.mxu0 0.0
    %497 = vmatpush2.msra.mxu0 0.0
    %498 = vmatprep.subr.mxu0 0.0
    %499 = vmatpush2.msra.mxu0 0.0
    %500 = vmatprep.subr.mxu0 0.0
    %501 = vmatpush2.msra.mxu0 0.0
    %502 = vmatprep.subr.mxu0 0.0
    %503 = vmatpush2.msra.mxu0 0.0
    %504 = vmatprep.subr.mxu0 0.0
    %505 = vmatpush2.msra.mxu0 0.0
    %506 = vmatprep.subr.mxu0 0.0
    %507 = vmatpush2.msra.mxu0 0.0
    %508 = vmatprep.subr.mxu0 0.0
    %509 = vmatpush2.msra.mxu0 0.0
    %510 = vmatprep.subr.mxu0 0.0
    %511 = vmatpush2.msra.mxu0 0.0
    %512 = vmatprep.subr.mxu0 0.0
    %513 = vmatpush2.msra.mxu0 0.0
    %514 = vmatprep.subr.mxu0 0.0
    %515 = vmatpush2.msra.mxu0 0.0
    %516 = vmatprep.subr.mxu0 0.0
    %517 = vmatpush2.msra.mxu0 0.0
    %518 = vmatprep.mubr.f32.mxu0 0.0
    %519 = vmatmul.mubr.f32.gmra.mxu0 %v452
    %v520 = vpop.f32.mrf.mxu0
    %v521 = vadd.f32 0.0, %v520
    %v522 = vpop.f32.mrf.mxu0
    %523 = vdwg.mxu0
    %524 = vrot.lane.b32.xlu0 %v180, 112
    %v525 = vpop.permute.xlu0 %524
    %526 = vrot.lane.b32.xlu0 %v180, 80
    %v527 = vpop.permute.xlu0 %526
    %v528 = vsel %vm189, %v525, 0
    %v530 = vsel %vm189, %v527, 0
    %532 = vmatprep.subr.mxu0 0.0
    %533 = vmatpush1.xpose.msra.mxu0 0.0
    %534 = vmatprep.subr.mxu0 0.0
    %535 = vmatpush1.xpose.msra.mxu0 0.0
    %536 = vmatprep.subr.mxu0 0.0
    %537 = vmatpush1.xpose.msra.mxu0 0.0
    %538 = vmatprep.subr.mxu0 0.0
    %539 = vmatpush1.xpose.msra.mxu0 0.0
    %540 = vmatprep.subr.mxu0 0.0
    %541 = vmatpush1.xpose.msra.mxu0 0.0
    %542 = vmatprep.subr.mxu0 0.0
    %543 = vmatpush1.xpose.msra.mxu0 0.0
    %544 = vmatprep.subr.mxu0 0.0
    %545 = vmatpush1.xpose.msra.mxu0 0.0
    %546 = vmatprep.subr.mxu0 0.0
    %547 = vmatpush1.xpose.msra.mxu0 0.0
    %548 = vmatprep.subr.mxu0 0.0
    %549 = vmatpush1.xpose.msra.mxu0 0.0
    %550 = vmatprep.subr.mxu0 0.0
    %551 = vmatpush1.xpose.msra.mxu0 0.0
    %552 = vmatprep.subr.mxu0 0.0
    %553 = vmatpush1.xpose.msra.mxu0 0.0
    %554 = vmatprep.subr.mxu0 0.0
    %555 = vmatpush1.xpose.msra.mxu0 0.0
    %556 = vmatprep.subr.mxu0 0.0
    %557 = vmatpush1.xpose.msra.mxu0 0.0
    %558 = vmatprep.subr.mxu0 0.0
    %559 = vmatpush1.xpose.msra.mxu0 0.0
    %560 = vmatprep.subr.mxu0 0.0
    %561 = vmatpush1.xpose.msra.mxu0 0.0
    %562 = vmatprep.subr.mxu0 0.0
    %563 = vmatpush1.xpose.msra.mxu0 %v530
    %564 = vmatprep.subr.mxu0 0.0
    %565 = vmatpush2.xpose.msra.mxu0 0.0
    %566 = vmatprep.subr.mxu0 0.0
    %567 = vmatpush2.xpose.msra.mxu0 0.0
    %568 = vmatprep.subr.mxu0 0.0
    %569 = vmatpush2.xpose.msra.mxu0 0.0
    %570 = vmatprep.subr.mxu0 0.0
    %571 = vmatpush2.xpose.msra.mxu0 0.0
    %572 = vmatprep.subr.mxu0 0.0
    %573 = vmatpush2.xpose.msra.mxu0 0.0
    %574 = vmatprep.subr.mxu0 0.0
    %575 = vmatpush2.xpose.msra.mxu0 0.0
    %576 = vmatprep.subr.mxu0 0.0
    %577 = vmatpush2.xpose.msra.mxu0 0.0
    %578 = vmatprep.subr.mxu0 0.0
    %579 = vmatpush2.xpose.msra.mxu0 0.0
    %580 = vmatprep.subr.mxu0 0.0
    %581 = vmatpush2.xpose.msra.mxu0 0.0
    %582 = vmatprep.subr.mxu0 0.0
    %583 = vmatpush2.xpose.msra.mxu0 0.0
    %584 = vmatprep.subr.mxu0 0.0
    %585 = vmatpush2.xpose.msra.mxu0 0.0
    %586 = vmatprep.subr.mxu0 0.0
    %587 = vmatpush2.xpose.msra.mxu0 0.0
    %588 = vmatprep.subr.mxu0 0.0
    %589 = vmatpush2.xpose.msra.mxu0 0.0
    %590 = vmatprep.subr.mxu0 0.0
    %591 = vmatpush2.xpose.msra.mxu0 0.0
    %592 = vmatprep.subr.mxu0 0.0
    %593 = vmatpush2.xpose.msra.mxu0 0.0
    %594 = vmatprep.subr.mxu0 0.0
    %595 = vmatpush2.xpose.msra.mxu0 0.0
    %596 = vmatprep.mubr.f32.mxu0 0.0
    %597 = vmatmul.mubr.f32.gmra.mxu0 %v528
    %v598 = vpop.f32.mrf.mxu0
    %v599 = vadd.f32 0.0, %v598
    %v600 = vpop.f32.mrf.mxu0
    %601 = vdwg.mxu0
    %v602 = vmul.f32 %v599, 0.35355338
    %v603 = vadd.f32 %v602, %v268
    %v604 = vsel %vm189, %v603, -inf
    %605 = vmax.xlane.f32.xlu0 %v604
    %v606 = vpop.xlane.xlu0 %605
    %v607 = vsub.f32 %v603, %v606
    %v608 = vmul.f32 %v607, 1.442695
    %v609 = vpow.pop %v608
    %v610 = vsel %vm189, %v609, 0.0
    %611 = vadd.xlane.f32.xlu0 %v610
    %v612 = vpop.xlane.xlu0 %611
    %v613 = vrcp.pop %v612
    %v614 = vmul.f32 %v609, %v613
    %615 = vrot.lane.b32.xlu0 %v180, 48
    %v616 = vpop.permute.xlu0 %615
    %v619 = vsel %vm189, %v614, 0
    %621 = vmatprep.subr.mxu0 0.0
    %622 = vmatpush1.msra.mxu0 0.0
    %623 = vmatprep.subr.mxu0 0.0
    %624 = vmatpush1.msra.mxu0 0.0
    %625 = vmatprep.subr.mxu0 0.0
    %626 = vmatpush1.msra.mxu0 0.0
    %627 = vmatprep.subr.mxu0 0.0
    %628 = vmatpush1.msra.mxu0 0.0
    %629 = vmatprep.subr.mxu0 0.0
    %630 = vmatpush1.msra.mxu0 0.0
    %631 = vmatprep.subr.mxu0 0.0
    %632 = vmatpush1.msra.mxu0 0.0
    %633 = vmatprep.subr.mxu0 0.0
    %634 = vmatpush1.msra.mxu0 0.0
    %635 = vmatprep.subr.mxu0 0.0
    %636 = vmatpush1.msra.mxu0 0.0
    %637 = vmatprep.subr.mxu0 0.0
    %638 = vmatpush1.msra.mxu0 0.0
    %639 = vmatprep.subr.mxu0 0.0
    %640 = vmatpush1.msra.mxu0 0.0
    %641 = vmatprep.subr.mxu0 0.0
    %642 = vmatpush1.msra.mxu0 0.0
    %643 = vmatprep.subr.mxu0 0.0
    %644 = vmatpush1.msra.mxu0 0.0
    %645 = vmatprep.subr.mxu0 0.0
    %646 = vmatpush1.msra.mxu0 0.0
    %647 = vmatprep.subr.mxu0 0.0
    %648 = vmatpush1.msra.mxu0 0.0
    %649 = vmatprep.subr.mxu0 0.0
    %650 = vmatpush1.msra.mxu0 0.0
    %651 = vmatprep.subr.mxu0 0.0
    %652 = vmatpush1.msra.mxu0 %v616
    %653 = vmatprep.subr.mxu0 0.0
    %654 = vmatpush2.msra.mxu0 0.0
    %655 = vmatprep.subr.mxu0 0.0
    %656 = vmatpush2.msra.mxu0 0.0
    %657 = vmatprep.subr.mxu0 0.0
    %658 = vmatpush2.msra.mxu0 0.0
    %659 = vmatprep.subr.mxu0 0.0
    %660 = vmatpush2.msra.mxu0 0.0
    %661 = vmatprep.subr.mxu0 0.0
    %662 = vmatpush2.msra.mxu0 0.0
    %663 = vmatprep.subr.mxu0 0.0
    %664 = vmatpush2.msra.mxu0 0.0
    %665 = vmatprep.subr.mxu0 0.0
    %666 = vmatpush2.msra.mxu0 0.0
    %667 = vmatprep.subr.mxu0 0.0
    %668 = vmatpush2.msra.mxu0 0.0
    %669 = vmatprep.subr.mxu0 0.0
    %670 = vmatpush2.msra.mxu0 0.0
    %671 = vmatprep.subr.mxu0 0.0
    %672 = vmatpush2.msra.mxu0 0.0
    %673 = vmatprep.subr.mxu0 0.0
    %674 = vmatpush2.msra.mxu0 0.0
    %675 = vmatprep.subr.mxu0 0.0
    %676 = vmatpush2.msra.mxu0 0.0
    %677 = vmatprep.subr.mxu0 0.0
    %678 = vmatpush2.msra.mxu0 0.0
    %679 = vmatprep.subr.mxu0 0.0
    %680 = vmatpush2.msra.mxu0 0.0
    %681 = vmatprep.subr.mxu0 0.0
    %682 = vmatpush2.msra.mxu0 0.0
    %683 = vmatprep.subr.mxu0 0.0
    %684 = vmatpush2.msra.mxu0 0.0
    %685 = vmatprep.mubr.f32.mxu0 0.0
    %686 = vmatmul.mubr.f32.gmra.mxu0 %v619
    %v687 = vpop.f32.mrf.mxu0
    %v688 = vadd.f32 0.0, %v687
    %v689 = vpop.f32.mrf.mxu0
    %690 = vdwg.mxu0
    %691 = vrot.lane.b32.xlu0 %v180, 104
    %v692 = vpop.permute.xlu0 %691
    %693 = vrot.lane.b32.xlu0 %v180, 72
    %v694 = vpop.permute.xlu0 %693
    %v695 = vsel %vm189, %v692, 0
    %v697 = vsel %vm189, %v694, 0
    %699 = vmatprep.subr.mxu0 0.0
    %700 = vmatpush1.xpose.msra.mxu0 0.0
    %701 = vmatprep.subr.mxu0 0.0
    %702 = vmatpush1.xpose.msra.mxu0 0.0
    %703 = vmatprep.subr.mxu0 0.0
    %704 = vmatpush1.xpose.msra.mxu0 0.0
    %705 = vmatprep.subr.mxu0 0.0
    %706 = vmatpush1.xpose.msra.mxu0 0.0
    %707 = vmatprep.subr.mxu0 0.0
    %708 = vmatpush1.xpose.msra.mxu0 0.0
    %709 = vmatprep.subr.mxu0 0.0
    %710 = vmatpush1.xpose.msra.mxu0 0.0
    %711 = vmatprep.subr.mxu0 0.0
    %712 = vmatpush1.xpose.msra.mxu0 0.0
    %713 = vmatprep.subr.mxu0 0.0
    %714 = vmatpush1.xpose.msra.mxu0 0.0
    %715 = vmatprep.subr.mxu0 0.0
    %716 = vmatpush1.xpose.msra.mxu0 0.0
    %717 = vmatprep.subr.mxu0 0.0
    %718 = vmatpush1.xpose.msra.mxu0 0.0
    %719 = vmatprep.subr.mxu0 0.0
    %720 = vmatpush1.xpose.msra.mxu0 0.0
    %721 = vmatprep.subr.mxu0 0.0
    %722 = vmatpush1.xpose.msra.mxu0 0.0
    %723 = vmatprep.subr.mxu0 0.0
    %724 = vmatpush1.xpose.msra.mxu0 0.0
    %725 = vmatprep.subr.mxu0 0.0
    %726 = vmatpush1.xpose.msra.mxu0 0.0
    %727 = vmatprep.subr.mxu0 0.0
    %728 = vmatpush1.xpose.msra.mxu0 0.0
    %729 = vmatprep.subr.mxu0 0.0
    %730 = vmatpush1.xpose.msra.mxu0 %v697
    %731 = vmatprep.subr.mxu0 0.0
    %732 = vmatpush2.xpose.msra.mxu0 0.0
    %733 = vmatprep.subr.mxu0 0.0
    %734 = vmatpush2.xpose.msra.mxu0 0.0
    %735 = vmatprep.subr.mxu0 0.0
    %736 = vmatpush2.xpose.msra.mxu0 0.0
    %737 = vmatprep.subr.mxu0 0.0
    %738 = vmatpush2.xpose.msra.mxu0 0.0
    %739 = vmatprep.subr.mxu0 0.0
    %740 = vmatpush2.xpose.msra.mxu0 0.0
    %741 = vmatprep.subr.mxu0 0.0
    %742 = vmatpush2.xpose.msra.mxu0 0.0
    %743 = vmatprep.subr.mxu0 0.0
    %744 = vmatpush2.xpose.msra.mxu0 0.0
    %745 = vmatprep.subr.mxu0 0.0
    %746 = vmatpush2.xpose.msra.mxu0 0.0
    %747 = vmatprep.subr.mxu0 0.0
    %748 = vmatpush2.xpose.msra.mxu0 0.0
    %749 = vmatprep.subr.mxu0 0.0
    %750 = vmatpush2.xpose.msra.mxu0 0.0
    %751 = vmatprep.subr.mxu0 0.0
    %752 = vmatpush2.xpose.msra.mxu0 0.0
    %753 = vmatprep.subr.mxu0 0.0
    %754 = vmatpush2.xpose.msra.mxu0 0.0
    %755 = vmatprep.subr.mxu0 0.0
    %756 = vmatpush2.xpose.msra.mxu0 0.0
    %757 = vmatprep.subr.mxu0 0.0
    %758 = vmatpush2.xpose.msra.mxu0 0.0
    %759 = vmatprep.subr.mxu0 0.0
    %760 = vmatpush2.xpose.msra.mxu0 0.0
    %761 = vmatprep.subr.mxu0 0.0
    %762 = vmatpush2.xpose.msra.mxu0 0.0
    %763 = vmatprep.mubr.f32.mxu0 0.0
    %764 = vmatmul.mubr.f32.gmra.mxu0 %v695
    %v765 = vpop.f32.mrf.mxu0
    %v766 = vadd.f32 0.0, %v765
    %v767 = vpop.f32.mrf.mxu0
    %768 = vdwg.mxu0
    %v769 = vmul.f32 %v766, 0.35355338
    %v770 = vadd.f32 %v769, %v268
    %v771 = vsel %vm189, %v770, -inf
    %772 = vmax.xlane.f32.xlu0 %v771
    %v773 = vpop.xlane.xlu0 %772
    %v774 = vsub.f32 %v770, %v773
    %v775 = vmul.f32 %v774, 1.442695
    %v776 = vpow.pop %v775
    %v777 = vsel %vm189, %v776, 0.0
    %778 = vadd.xlane.f32.xlu0 %v777
    %v779 = vpop.xlane.xlu0 %778
    %v780 = vrcp.pop %v779
    %v781 = vmul.f32 %v776, %v780
    %782 = vrot.lane.b32.xlu0 %v180, 40
    %v783 = vpop.permute.xlu0 %782
    %v786 = vsel %vm189, %v781, 0
    %788 = vmatprep.subr.mxu0 0.0
    %789 = vmatpush1.msra.mxu0 0.0
    %790 = vmatprep.subr.mxu0 0.0
    %791 = vmatpush1.msra.mxu0 0.0
    %792 = vmatprep.subr.mxu0 0.0
    %793 = vmatpush1.msra.mxu0 0.0
    %794 = vmatprep.subr.mxu0 0.0
    %795 = vmatpush1.msra.mxu0 0.0
    %796 = vmatprep.subr.mxu0 0.0
    %797 = vmatpush1.msra.mxu0 0.0
    %798 = vmatprep.subr.mxu0 0.0
    %799 = vmatpush1.msra.mxu0 0.0
    %800 = vmatprep.subr.mxu0 0.0
    %801 = vmatpush1.msra.mxu0 0.0
    %802 = vmatprep.subr.mxu0 0.0
    %803 = vmatpush1.msra.mxu0 0.0
    %804 = vmatprep.subr.mxu0 0.0
    %805 = vmatpush1.msra.mxu0 0.0
    %806 = vmatprep.subr.mxu0 0.0
    %807 = vmatpush1.msra.mxu0 0.0
    %808 = vmatprep.subr.mxu0 0.0
    %809 = vmatpush1.msra.mxu0 0.0
    %810 = vmatprep.subr.mxu0 0.0
    %811 = vmatpush1.msra.mxu0 0.0
    %812 = vmatprep.subr.mxu0 0.0
    %813 = vmatpush1.msra.mxu0 0.0
    %814 = vmatprep.subr.mxu0 0.0
    %815 = vmatpush1.msra.mxu0 0.0
    %816 = vmatprep.subr.mxu0 0.0
    %817 = vmatpush1.msra.mxu0 0.0
    %818 = vmatprep.subr.mxu0 0.0
    %819 = vmatpush1.msra.mxu0 %v783
    %820 = vmatprep.subr.mxu0 0.0
    %821 = vmatpush2.msra.mxu0 0.0
    %822 = vmatprep.subr.mxu0 0.0
    %823 = vmatpush2.msra.mxu0 0.0
    %824 = vmatprep.subr.mxu0 0.0
    %825 = vmatpush2.msra.mxu0 0.0
    %826 = vmatprep.subr.mxu0 0.0
    %827 = vmatpush2.msra.mxu0 0.0
    %828 = vmatprep.subr.mxu0 0.0
    %829 = vmatpush2.msra.mxu0 0.0
    %830 = vmatprep.subr.mxu0 0.0
    %831 = vmatpush2.msra.mxu0 0.0
    %832 = vmatprep.subr.mxu0 0.0
    %833 = vmatpush2.msra.mxu0 0.0
    %834 = vmatprep.subr.mxu0 0.0
    %835 = vmatpush2.msra.mxu0 0.0
    %836 = vmatprep.subr.mxu0 0.0
    %837 = vmatpush2.msra.mxu0 0.0
    %838 = vmatprep.subr.mxu0 0.0
    %839 = vmatpush2.msra.mxu0 0.0
    %840 = vmatprep.subr.mxu0 0.0
    %841 = vmatpush2.msra.mxu0 0.0
    %842 = vmatprep.subr.mxu0 0.0
    %843 = vmatpush2.msra.mxu0 0.0
    %844 = vmatprep.subr.mxu0 0.0
    %845 = vmatpush2.msra.mxu0 0.0
    %846 = vmatprep.subr.mxu0 0.0
    %847 = vmatpush2.msra.mxu0 0.0
    %848 = vmatprep.subr.mxu0 0.0
    %849 = vmatpush2.msra.mxu0 0.0
    %850 = vmatprep.subr.mxu0 0.0
    %851 = vmatpush2.msra.mxu0 0.0
    %852 = vmatprep.mubr.f32.mxu0 0.0
    %853 = vmatmul.mubr.f32.gmra.mxu0 %v786
    %v854 = vpop.f32.mrf.mxu0
    %v855 = vadd.f32 0.0, %v854
    %v856 = vpop.f32.mrf.mxu0
    %857 = vdwg.mxu0
    %859 = vrot.lane.b32.xlu0 %v521, 8
    %v860 = vpop.permute.xlu0 %859
    %863 = vrot.lane.b32.xlu0 %v688, 16
    %v864 = vpop.permute.xlu0 %863
    %867 = vrot.lane.b32.xlu0 %v855, 24
    %v868 = vpop.permute.xlu0 %867
    %v870 = vsel %vm189, %v354, %v860
    %vm871 = vcmask 130048
    %v872 = vsel %vm871, %v870, %v864
    %vm873 = vcmask 195584
    %v874 = vsel %vm873, %v872, %v868
    %876 = vrot.lane.b32.xlu0 %v183, 96
    %v877 = vpop.permute.xlu0 %876
    %v878 = vsel %vm189, %v183, 0
    %v880 = vsel %vm189, %v877, 0
    %882 = vmatprep.subr.mxu0 0.0
    %883 = vmatpush1.xpose.msra.mxu0 0.0
    %884 = vmatprep.subr.mxu0 0.0
    %885 = vmatpush1.xpose.msra.mxu0 0.0
    %886 = vmatprep.subr.mxu0 0.0
    %887 = vmatpush1.xpose.msra.mxu0 0.0
    %888 = vmatprep.subr.mxu0 0.0
    %889 = vmatpush1.xpose.msra.mxu0 0.0
    %890 = vmatprep.subr.mxu0 0.0
    %891 = vmatpush1.xpose.msra.mxu0 0.0
    %892 = vmatprep.subr.mxu0 0.0
    %893 = vmatpush1.xpose.msra.mxu0 0.0
    %894 = vmatprep.subr.mxu0 0.0
    %895 = vmatpush1.xpose.msra.mxu0 0.0
    %896 = vmatprep.subr.mxu0 0.0
    %897 = vmatpush1.xpose.msra.mxu0 0.0
    %898 = vmatprep.subr.mxu0 0.0
    %899 = vmatpush1.xpose.msra.mxu0 0.0
    %900 = vmatprep.subr.mxu0 0.0
    %901 = vmatpush1.xpose.msra.mxu0 0.0
    %902 = vmatprep.subr.mxu0 0.0
    %903 = vmatpush1.xpose.msra.mxu0 0.0
    %904 = vmatprep.subr.mxu0 0.0
    %905 = vmatpush1.xpose.msra.mxu0 0.0
    %906 = vmatprep.subr.mxu0 0.0
    %907 = vmatpush1.xpose.msra.mxu0 0.0
    %908 = vmatprep.subr.mxu0 0.0
    %909 = vmatpush1.xpose.msra.mxu0 0.0
    %910 = vmatprep.subr.mxu0 0.0
    %911 = vmatpush1.xpose.msra.mxu0 0.0
    %912 = vmatprep.subr.mxu0 0.0
    %913 = vmatpush1.xpose.msra.mxu0 %v880
    %914 = vmatprep.subr.mxu0 0.0
    %915 = vmatpush2.xpose.msra.mxu0 0.0
    %916 = vmatprep.subr.mxu0 0.0
    %917 = vmatpush2.xpose.msra.mxu0 0.0
    %918 = vmatprep.subr.mxu0 0.0
    %919 = vmatpush2.xpose.msra.mxu0 0.0
    %920 = vmatprep.subr.mxu0 0.0
    %921 = vmatpush2.xpose.msra.mxu0 0.0
    %922 = vmatprep.subr.mxu0 0.0
    %923 = vmatpush2.xpose.msra.mxu0 0.0
    %924 = vmatprep.subr.mxu0 0.0
    %925 = vmatpush2.xpose.msra.mxu0 0.0
    %926 = vmatprep.subr.mxu0 0.0
    %927 = vmatpush2.xpose.msra.mxu0 0.0
    %928 = vmatprep.subr.mxu0 0.0
    %929 = vmatpush2.xpose.msra.mxu0 0.0
    %930 = vmatprep.subr.mxu0 0.0
    %931 = vmatpush2.xpose.msra.mxu0 0.0
    %932 = vmatprep.subr.mxu0 0.0
    %933 = vmatpush2.xpose.msra.mxu0 0.0
    %934 = vmatprep.subr.mxu0 0.0
    %935 = vmatpush2.xpose.msra.mxu0 0.0
    %936 = vmatprep.subr.mxu0 0.0
    %937 = vmatpush2.xpose.msra.mxu0 0.0
    %938 = vmatprep.subr.mxu0 0.0
    %939 = vmatpush2.xpose.msra.mxu0 0.0
    %940 = vmatprep.subr.mxu0 0.0
    %941 = vmatpush2.xpose.msra.mxu0 0.0
    %942 = vmatprep.subr.mxu0 0.0
    %943 = vmatpush2.xpose.msra.mxu0 0.0
    %944 = vmatprep.subr.mxu0 0.0
    %945 = vmatpush2.xpose.msra.mxu0 0.0
    %946 = vmatprep.mubr.f32.mxu0 0.0
    %947 = vmatmul.mubr.f32.gmra.mxu0 %v878
    %v948 = vpop.f32.mrf.mxu0
    %v949 = vadd.f32 0.0, %v948
    %v950 = vpop.f32.mrf.mxu0
    %951 = vdwg.mxu0
    %v952 = vmul.f32 %v949, 0.35355338
    %v953 = vlaneseq
    %v954 = vshrl.u32 %v953, 7
    %v955 = vsub.s32 1, %v954
    %v956 = vrot.slane %v69, %v955
    %v957 = vadd.f32 %v952, %v956
    %v958 = vsel %vm189, %v957, -inf
    %959 = vmax.xlane.f32.xlu0 %v958
    %v960 = vpop.xlane.xlu0 %959
    %v961 = vsub.f32 %v957, %v960
    %v962 = vmul.f32 %v961, 1.442695
    %v963 = vpow.pop %v962
    %v964 = vsel %vm189, %v963, 0.0
    %965 = vadd.xlane.f32.xlu0 %v964
    %v966 = vpop.xlane.xlu0 %965
    %v967 = vrcp.pop %v966
    %v968 = vmul.f32 %v963, %v967
    %969 = vrot.lane.b32.xlu0 %v183, 64
    %v970 = vpop.permute.xlu0 %969
    %v973 = vsel %vm189, %v968, 0
    %975 = vmatprep.subr.mxu0 0.0
    %976 = vmatpush1.msra.mxu0 0.0
    %977 = vmatprep.subr.mxu0 0.0
    %978 = vmatpush1.msra.mxu0 0.0
    %979 = vmatprep.subr.mxu0 0.0
    %980 = vmatpush1.msra.mxu0 0.0
    %981 = vmatprep.subr.mxu0 0.0
    %982 = vmatpush1.msra.mxu0 0.0
    %983 = vmatprep.subr.mxu0 0.0
    %984 = vmatpush1.msra.mxu0 0.0
    %985 = vmatprep.subr.mxu0 0.0
    %986 = vmatpush1.msra.mxu0 0.0
    %987 = vmatprep.subr.mxu0 0.0
    %988 = vmatpush1.msra.mxu0 0.0
    %989 = vmatprep.subr.mxu0 0.0
    %990 = vmatpush1.msra.mxu0 0.0
    %991 = vmatprep.subr.mxu0 0.0
    %992 = vmatpush1.msra.mxu0 0.0
    %993 = vmatprep.subr.mxu0 0.0
    %994 = vmatpush1.msra.mxu0 0.0
    %995 = vmatprep.subr.mxu0 0.0
    %996 = vmatpush1.msra.mxu0 0.0
    %997 = vmatprep.subr.mxu0 0.0
    %998 = vmatpush1.msra.mxu0 0.0
    %999 = vmatprep.subr.mxu0 0.0
    %1000 = vmatpush1.msra.mxu0 0.0
    %1001 = vmatprep.subr.mxu0 0.0
    %1002 = vmatpush1.msra.mxu0 0.0
    %1003 = vmatprep.subr.mxu0 0.0
    %1004 = vmatpush1.msra.mxu0 0.0
    %1005 = vmatprep.subr.mxu0 0.0
    %1006 = vmatpush1.msra.mxu0 %v970
    %1007 = vmatprep.subr.mxu0 0.0
    %1008 = vmatpush2.msra.mxu0 0.0
    %1009 = vmatprep.subr.mxu0 0.0
    %1010 = vmatpush2.msra.mxu0 0.0
    %1011 = vmatprep.subr.mxu0 0.0
    %1012 = vmatpush2.msra.mxu0 0.0
    %1013 = vmatprep.subr.mxu0 0.0
    %1014 = vmatpush2.msra.mxu0 0.0
    %1015 = vmatprep.subr.mxu0 0.0
    %1016 = vmatpush2.msra.mxu0 0.0
    %1017 = vmatprep.subr.mxu0 0.0
    %1018 = vmatpush2.msra.mxu0 0.0
    %1019 = vmatprep.subr.mxu0 0.0
    %1020 = vmatpush2.msra.mxu0 0.0
    %1021 = vmatprep.subr.mxu0 0.0
    %1022 = vmatpush2.msra.mxu0 0.0
    %1023 = vmatprep.subr.mxu0 0.0
    %1024 = vmatpush2.msra.mxu0 0.0
    %1025 = vmatprep.subr.mxu0 0.0
    %1026 = vmatpush2.msra.mxu0 0.0
    %1027 = vmatprep.subr.mxu0 0.0
    %1028 = vmatpush2.msra.mxu0 0.0
    %1029 = vmatprep.subr.mxu0 0.0
    %1030 = vmatpush2.msra.mxu0 0.0
    %1031 = vmatprep.subr.mxu0 0.0
    %1032 = vmatpush2.msra.mxu0 0.0
    %1033 = vmatprep.subr.mxu0 0.0
    %1034 = vmatpush2.msra.mxu0 0.0
    %1035 = vmatprep.subr.mxu0 0.0
    %1036 = vmatpush2.msra.mxu0 0.0
    %1037 = vmatprep.subr.mxu0 0.0
    %1038 = vmatpush2.msra.mxu0 0.0
    %1039 = vmatprep.mubr.f32.mxu0 0.0
    %1040 = vmatmul.mubr.f32.gmra.mxu0 %v973
    %v1041 = vpop.f32.mrf.mxu0
    %v1042 = vadd.f32 0.0, %v1041
    %v1043 = vpop.f32.mrf.mxu0
    %1044 = vdwg.mxu0
    %1045 = vrot.lane.b32.xlu0 %v183, 120
    %v1046 = vpop.permute.xlu0 %1045
    %1047 = vrot.lane.b32.xlu0 %v183, 88
    %v1048 = vpop.permute.xlu0 %1047
    %v1049 = vsel %vm189, %v1046, 0
    %v1051 = vsel %vm189, %v1048, 0
    %1053 = vmatprep.subr.mxu0 0.0
    %1054 = vmatpush1.xpose.msra.mxu0 0.0
    %1055 = vmatprep.subr.mxu0 0.0
    %1056 = vmatpush1.xpose.msra.mxu0 0.0
    %1057 = vmatprep.subr.mxu0 0.0
    %1058 = vmatpush1.xpose.msra.mxu0 0.0
    %1059 = vmatprep.subr.mxu0 0.0
    %1060 = vmatpush1.xpose.msra.mxu0 0.0
    %1061 = vmatprep.subr.mxu0 0.0
    %1062 = vmatpush1.xpose.msra.mxu0 0.0
    %1063 = vmatprep.subr.mxu0 0.0
    %1064 = vmatpush1.xpose.msra.mxu0 0.0
    %1065 = vmatprep.subr.mxu0 0.0
    %1066 = vmatpush1.xpose.msra.mxu0 0.0
    %1067 = vmatprep.subr.mxu0 0.0
    %1068 = vmatpush1.xpose.msra.mxu0 0.0
    %1069 = vmatprep.subr.mxu0 0.0
    %1070 = vmatpush1.xpose.msra.mxu0 0.0
    %1071 = vmatprep.subr.mxu0 0.0
    %1072 = vmatpush1.xpose.msra.mxu0 0.0
    %1073 = vmatprep.subr.mxu0 0.0
    %1074 = vmatpush1.xpose.msra.mxu0 0.0
    %1075 = vmatprep.subr.mxu0 0.0
    %1076 = vmatpush1.xpose.msra.mxu0 0.0
    %1077 = vmatprep.subr.mxu0 0.0
    %1078 = vmatpush1.xpose.msra.mxu0 0.0
    %1079 = vmatprep.subr.mxu0 0.0
    %1080 = vmatpush1.xpose.msra.mxu0 0.0
    %1081 = vmatprep.subr.mxu0 0.0
    %1082 = vmatpush1.xpose.msra.mxu0 0.0
    %1083 = vmatprep.subr.mxu0 0.0
    %1084 = vmatpush1.xpose.msra.mxu0 %v1051
    %1085 = vmatprep.subr.mxu0 0.0
    %1086 = vmatpush2.xpose.msra.mxu0 0.0
    %1087 = vmatprep.subr.mxu0 0.0
    %1088 = vmatpush2.xpose.msra.mxu0 0.0
    %1089 = vmatprep.subr.mxu0 0.0
    %1090 = vmatpush2.xpose.msra.mxu0 0.0
    %1091 = vmatprep.subr.mxu0 0.0
    %1092 = vmatpush2.xpose.msra.mxu0 0.0
    %1093 = vmatprep.subr.mxu0 0.0
    %1094 = vmatpush2.xpose.msra.mxu0 0.0
    %1095 = vmatprep.subr.mxu0 0.0
    %1096 = vmatpush2.xpose.msra.mxu0 0.0
    %1097 = vmatprep.subr.mxu0 0.0
    %1098 = vmatpush2.xpose.msra.mxu0 0.0
    %1099 = vmatprep.subr.mxu0 0.0
    %1100 = vmatpush2.xpose.msra.mxu0 0.0
    %1101 = vmatprep.subr.mxu0 0.0
    %1102 = vmatpush2.xpose.msra.mxu0 0.0
    %1103 = vmatprep.subr.mxu0 0.0
    %1104 = vmatpush2.xpose.msra.mxu0 0.0
    %1105 = vmatprep.subr.mxu0 0.0
    %1106 = vmatpush2.xpose.msra.mxu0 0.0
    %1107 = vmatprep.subr.mxu0 0.0
    %1108 = vmatpush2.xpose.msra.mxu0 0.0
    %1109 = vmatprep.subr.mxu0 0.0
    %1110 = vmatpush2.xpose.msra.mxu0 0.0
    %1111 = vmatprep.subr.mxu0 0.0
    %1112 = vmatpush2.xpose.msra.mxu0 0.0
    %1113 = vmatprep.subr.mxu0 0.0
    %1114 = vmatpush2.xpose.msra.mxu0 0.0
    %1115 = vmatprep.subr.mxu0 0.0
    %1116 = vmatpush2.xpose.msra.mxu0 0.0
    %1117 = vmatprep.mubr.f32.mxu0 0.0
    %1118 = vmatmul.mubr.f32.gmra.mxu0 %v1049
    %v1119 = vpop.f32.mrf.mxu0
    %v1120 = vadd.f32 0.0, %v1119
    %v1121 = vpop.f32.mrf.mxu0
    %1122 = vdwg.mxu0
    %v1123 = vmul.f32 %v1120, 0.35355338
    %v1124 = vadd.f32 %v1123, %v956
    %v1125 = vsel %vm189, %v1124, -inf
    %1126 = vmax.xlane.f32.xlu0 %v1125
    %v1127 = vpop.xlane.xlu0 %1126
    %v1128 = vsub.f32 %v1124, %v1127
    %v1129 = vmul.f32 %v1128, 1.442695
    %v1130 = vpow.pop %v1129
    %v1131 = vsel %vm189, %v1130, 0.0
    %1132 = vadd.xlane.f32.xlu0 %v1131
    %v1133 = vpop.xlane.xlu0 %1132
    %v1134 = vrcp.pop %v1133
    %v1135 = vmul.f32 %v1130, %v1134
    %1136 = vrot.lane.b32.xlu0 %v183, 56
    %v1137 = vpop.permute.xlu0 %1136
    %v1140 = vsel %vm189, %v1135, 0
    %1142 = vmatprep.subr.mxu0 0.0
    %1143 = vmatpush1.msra.mxu0 0.0
    %1144 = vmatprep.subr.mxu0 0.0
    %1145 = vmatpush1.msra.mxu0 0.0
    %1146 = vmatprep.subr.mxu0 0.0
    %1147 = vmatpush1.msra.mxu0 0.0
    %1148 = vmatprep.subr.mxu0 0.0
    %1149 = vmatpush1.msra.mxu0 0.0
    %1150 = vmatprep.subr.mxu0 0.0
    %1151 = vmatpush1.msra.mxu0 0.0
    %1152 = vmatprep.subr.mxu0 0.0
    %1153 = vmatpush1.msra.mxu0 0.0
    %1154 = vmatprep.subr.mxu0 0.0
    %1155 = vmatpush1.msra.mxu0 0.0
    %1156 = vmatprep.subr.mxu0 0.0
    %1157 = vmatpush1.msra.mxu0 0.0
    %1158 = vmatprep.subr.mxu0 0.0
    %1159 = vmatpush1.msra.mxu0 0.0
    %1160 = vmatprep.subr.mxu0 0.0
    %1161 = vmatpush1.msra.mxu0 0.0
    %1162 = vmatprep.subr.mxu0 0.0
    %1163 = vmatpush1.msra.mxu0 0.0
    %1164 = vmatprep.subr.mxu0 0.0
    %1165 = vmatpush1.msra.mxu0 0.0
    %1166 = vmatprep.subr.mxu0 0.0
    %1167 = vmatpush1.msra.mxu0 0.0
    %1168 = vmatprep.subr.mxu0 0.0
    %1169 = vmatpush1.msra.mxu0 0.0
    %1170 = vmatprep.subr.mxu0 0.0
    %1171 = vmatpush1.msra.mxu0 0.0
    %1172 = vmatprep.subr.mxu0 0.0
    %1173 = vmatpush1.msra.mxu0 %v1137
    %1174 = vmatprep.subr.mxu0 0.0
    %1175 = vmatpush2.msra.mxu0 0.0
    %1176 = vmatprep.subr.mxu0 0.0
    %1177 = vmatpush2.msra.mxu0 0.0
    %1178 = vmatprep.subr.mxu0 0.0
    %1179 = vmatpush2.msra.mxu0 0.0
    %1180 = vmatprep.subr.mxu0 0.0
    %1181 = vmatpush2.msra.mxu0 0.0
    %1182 = vmatprep.subr.mxu0 0.0
    %1183 = vmatpush2.msra.mxu0 0.0
    %1184 = vmatprep.subr.mxu0 0.0
    %1185 = vmatpush2.msra.mxu0 0.0
    %1186 = vmatprep.subr.mxu0 0.0
    %1187 = vmatpush2.msra.mxu0 0.0
    %1188 = vmatprep.subr.mxu0 0.0
    %1189 = vmatpush2.msra.mxu0 0.0
    %1190 = vmatprep.subr.mxu0 0.0
    %1191 = vmatpush2.msra.mxu0 0.0
    %1192 = vmatprep.subr.mxu0 0.0
    %1193 = vmatpush2.msra.mxu0 0.0
    %1194 = vmatprep.subr.mxu0 0.0
    %1195 = vmatpush2.msra.mxu0 0.0
    %1196 = vmatprep.subr.mxu0 0.0
    %1197 = vmatpush2.msra.mxu0 0.0
    %1198 = vmatprep.subr.mxu0 0.0
    %1199 = vmatpush2.msra.mxu0 0.0
    %1200 = vmatprep.subr.mxu0 0.0
    %1201 = vmatpush2.msra.mxu0 0.0
    %1202 = vmatprep.subr.mxu0 0.0
    %1203 = vmatpush2.msra.mxu0 0.0
    %1204 = vmatprep.subr.mxu0 0.0
    %1205 = vmatpush2.msra.mxu0 0.0
    %1206 = vmatprep.mubr.f32.mxu0 0.0
    %1207 = vmatmul.mubr.f32.gmra.mxu0 %v1140
    %v1208 = vpop.f32.mrf.mxu0
    %v1209 = vadd.f32 0.0, %v1208
    %v1210 = vpop.f32.mrf.mxu0
    %1211 = vdwg.mxu0
    %1212 = vrot.lane.b32.xlu0 %v183, 112
    %v1213 = vpop.permute.xlu0 %1212
    %1214 = vrot.lane.b32.xlu0 %v183, 80
    %v1215 = vpop.permute.xlu0 %1214
    %v1216 = vsel %vm189, %v1213, 0
    %v1218 = vsel %vm189, %v1215, 0
    %1220 = vmatprep.subr.mxu0 0.0
    %1221 = vmatpush1.xpose.msra.mxu0 0.0
    %1222 = vmatprep.subr.mxu0 0.0
    %1223 = vmatpush1.xpose.msra.mxu0 0.0
    %1224 = vmatprep.subr.mxu0 0.0
    %1225 = vmatpush1.xpose.msra.mxu0 0.0
    %1226 = vmatprep.subr.mxu0 0.0
    %1227 = vmatpush1.xpose.msra.mxu0 0.0
    %1228 = vmatprep.subr.mxu0 0.0
    %1229 = vmatpush1.xpose.msra.mxu0 0.0
    %1230 = vmatprep.subr.mxu0 0.0
    %1231 = vmatpush1.xpose.msra.mxu0 0.0
    %1232 = vmatprep.subr.mxu0 0.0
    %1233 = vmatpush1.xpose.msra.mxu0 0.0
    %1234 = vmatprep.subr.mxu0 0.0
    %1235 = vmatpush1.xpose.msra.mxu0 0.0
    %1236 = vmatprep.subr.mxu0 0.0
    %1237 = vmatpush1.xpose.msra.mxu0 0.0
    %1238 = vmatprep.subr.mxu0 0.0
    %1239 = vmatpush1.xpose.msra.mxu0 0.0
    %1240 = vmatprep.subr.mxu0 0.0
    %1241 = vmatpush1.xpose.msra.mxu0 0.0
    %1242 = vmatprep.subr.mxu0 0.0
    %1243 = vmatpush1.xpose.msra.mxu0 0.0
    %1244 = vmatprep.subr.mxu0 0.0
    %1245 = vmatpush1.xpose.msra.mxu0 0.0
    %1246 = vmatprep.subr.mxu0 0.0
    %1247 = vmatpush1.xpose.msra.mxu0 0.0
    %1248 = vmatprep.subr.mxu0 0.0
    %1249 = vmatpush1.xpose.msra.mxu0 0.0
    %1250 = vmatprep.subr.mxu0 0.0
    %1251 = vmatpush1.xpose.msra.mxu0 %v1218
    %1252 = vmatprep.subr.mxu0 0.0
    %1253 = vmatpush2.xpose.msra.mxu0 0.0
    %1254 = vmatprep.subr.mxu0 0.0
    %1255 = vmatpush2.xpose.msra.mxu0 0.0
    %1256 = vmatprep.subr.mxu0 0.0
    %1257 = vmatpush2.xpose.msra.mxu0 0.0
    %1258 = vmatprep.subr.mxu0 0.0
    %1259 = vmatpush2.xpose.msra.mxu0 0.0
    %1260 = vmatprep.subr.mxu0 0.0
    %1261 = vmatpush2.xpose.msra.mxu0 0.0
    %1262 = vmatprep.subr.mxu0 0.0
    %1263 = vmatpush2.xpose.msra.mxu0 0.0
    %1264 = vmatprep.subr.mxu0 0.0
    %1265 = vmatpush2.xpose.msra.mxu0 0.0
    %1266 = vmatprep.subr.mxu0 0.0
    %1267 = vmatpush2.xpose.msra.mxu0 0.0
    %1268 = vmatprep.subr.mxu0 0.0
    %1269 = vmatpush2.xpose.msra.mxu0 0.0
    %1270 = vmatprep.subr.mxu0 0.0
    %1271 = vmatpush2.xpose.msra.mxu0 0.0
    %1272 = vmatprep.subr.mxu0 0.0
    %1273 = vmatpush2.xpose.msra.mxu0 0.0
    %1274 = vmatprep.subr.mxu0 0.0
    %1275 = vmatpush2.xpose.msra.mxu0 0.0
    %1276 = vmatprep.subr.mxu0 0.0
    %1277 = vmatpush2.xpose.msra.mxu0 0.0
    %1278 = vmatprep.subr.mxu0 0.0
    %1279 = vmatpush2.xpose.msra.mxu0 0.0
    %1280 = vmatprep.subr.mxu0 0.0
    %1281 = vmatpush2.xpose.msra.mxu0 0.0
    %1282 = vmatprep.subr.mxu0 0.0
    %1283 = vmatpush2.xpose.msra.mxu0 0.0
    %1284 = vmatprep.mubr.f32.mxu0 0.0
    %1285 = vmatmul.mubr.f32.gmra.mxu0 %v1216
    %v1286 = vpop.f32.mrf.mxu0
    %v1287 = vadd.f32 0.0, %v1286
    %v1288 = vpop.f32.mrf.mxu0
    %1289 = vdwg.mxu0
    %v1290 = vmul.f32 %v1287, 0.35355338
    %v1291 = vadd.f32 %v1290, %v956
    %v1292 = vsel %vm189, %v1291, -inf
    %1293 = vmax.xlane.f32.xlu0 %v1292
    %v1294 = vpop.xlane.xlu0 %1293
    %v1295 = vsub.f32 %v1291, %v1294
    %v1296 = vmul.f32 %v1295, 1.442695
    %v1297 = vpow.pop %v1296
    %v1298 = vsel %vm189, %v1297, 0.0
    %1299 = vadd.xlane.f32.xlu0 %v1298
    %v1300 = vpop.xlane.xlu0 %1299
    %v1301 = vrcp.pop %v1300
    %v1302 = vmul.f32 %v1297, %v1301
    %1303 = vrot.lane.b32.xlu0 %v183, 48
    %v1304 = vpop.permute.xlu0 %1303
    %v1307 = vsel %vm189, %v1302, 0
    %1309 = vmatprep.subr.mxu0 0.0
    %1310 = vmatpush1.msra.mxu0 0.0
    %1311 = vmatprep.subr.mxu0 0.0
    %1312 = vmatpush1.msra.mxu0 0.0
    %1313 = vmatprep.subr.mxu0 0.0
    %1314 = vmatpush1.msra.mxu0 0.0
    %1315 = vmatprep.subr.mxu0 0.0
    %1316 = vmatpush1.msra.mxu0 0.0
    %1317 = vmatprep.subr.mxu0 0.0
    %1318 = vmatpush1.msra.mxu0 0.0
    %1319 = vmatprep.subr.mxu0 0.0
    %1320 = vmatpush1.msra.mxu0 0.0
    %1321 = vmatprep.subr.mxu0 0.0
    %1322 = vmatpush1.msra.mxu0 0.0
    %1323 = vmatprep.subr.mxu0 0.0
    %1324 = vmatpush1.msra.mxu0 0.0
    %1325 = vmatprep.subr.mxu0 0.0
    %1326 = vmatpush1.msra.mxu0 0.0
    %1327 = vmatprep.subr.mxu0 0.0
    %1328 = vmatpush1.msra.mxu0 0.0
    %1329 = vmatprep.subr.mxu0 0.0
    %1330 = vmatpush1.msra.mxu0 0.0
    %1331 = vmatprep.subr.mxu0 0.0
    %1332 = vmatpush1.msra.mxu0 0.0
    %1333 = vmatprep.subr.mxu0 0.0
    %1334 = vmatpush1.msra.mxu0 0.0
    %1335 = vmatprep.subr.mxu0 0.0
    %1336 = vmatpush1.msra.mxu0 0.0
    %1337 = vmatprep.subr.mxu0 0.0
    %1338 = vmatpush1.msra.mxu0 0.0
    %1339 = vmatprep.subr.mxu0 0.0
    %1340 = vmatpush1.msra.mxu0 %v1304
    %1341 = vmatprep.subr.mxu0 0.0
    %1342 = vmatpush2.msra.mxu0 0.0
    %1343 = vmatprep.subr.mxu0 0.0
    %1344 = vmatpush2.msra.mxu0 0.0
    %1345 = vmatprep.subr.mxu0 0.0
    %1346 = vmatpush2.msra.mxu0 0.0
    %1347 = vmatprep.subr.mxu0 0.0
    %1348 = vmatpush2.msra.mxu0 0.0
    %1349 = vmatprep.subr.mxu0 0.0
    %1350 = vmatpush2.msra.mxu0 0.0
    %1351 = vmatprep.subr.mxu0 0.0
    %1352 = vmatpush2.msra.mxu0 0.0
    %1353 = vmatprep.subr.mxu0 0.0
    %1354 = vmatpush2.msra.mxu0 0.0
    %1355 = vmatprep.subr.mxu0 0.0
    %1356 = vmatpush2.msra.mxu0 0.0
    %1357 = vmatprep.subr.mxu0 0.0
    %1358 = vmatpush2.msra.mxu0 0.0
    %1359 = vmatprep.subr.mxu0 0.0
    %1360 = vmatpush2.msra.mxu0 0.0
    %1361 = vmatprep.subr.mxu0 0.0
    %1362 = vmatpush2.msra.mxu0 0.0
    %1363 = vmatprep.subr.mxu0 0.0
    %1364 = vmatpush2.msra.mxu0 0.0
    %1365 = vmatprep.subr.mxu0 0.0
    %1366 = vmatpush2.msra.mxu0 0.0
    %1367 = vmatprep.subr.mxu0 0.0
    %1368 = vmatpush2.msra.mxu0 0.0
    %1369 = vmatprep.subr.mxu0 0.0
    %1370 = vmatpush2.msra.mxu0 0.0
    %1371 = vmatprep.subr.mxu0 0.0
    %1372 = vmatpush2.msra.mxu0 0.0
    %1373 = vmatprep.mubr.f32.mxu0 0.0
    %1374 = vmatmul.mubr.f32.gmra.mxu0 %v1307
    %v1375 = vpop.f32.mrf.mxu0
    %v1376 = vadd.f32 0.0, %v1375
    %v1377 = vpop.f32.mrf.mxu0
    %1378 = vdwg.mxu0
    %1379 = vrot.lane.b32.xlu0 %v183, 104
    %v1380 = vpop.permute.xlu0 %1379
    %1381 = vrot.lane.b32.xlu0 %v183, 72
    %v1382 = vpop.permute.xlu0 %1381
    %v1383 = vsel %vm189, %v1380, 0
    %v1385 = vsel %vm189, %v1382, 0
    %1387 = vmatprep.subr.mxu0 0.0
    %1388 = vmatpush1.xpose.msra.mxu0 0.0
    %1389 = vmatprep.subr.mxu0 0.0
    %1390 = vmatpush1.xpose.msra.mxu0 0.0
    %1391 = vmatprep.subr.mxu0 0.0
    %1392 = vmatpush1.xpose.msra.mxu0 0.0
    %1393 = vmatprep.subr.mxu0 0.0
    %1394 = vmatpush1.xpose.msra.mxu0 0.0
    %1395 = vmatprep.subr.mxu0 0.0
    %1396 = vmatpush1.xpose.msra.mxu0 0.0
    %1397 = vmatprep.subr.mxu0 0.0
    %1398 = vmatpush1.xpose.msra.mxu0 0.0
    %1399 = vmatprep.subr.mxu0 0.0
    %1400 = vmatpush1.xpose.msra.mxu0 0.0
    %1401 = vmatprep.subr.mxu0 0.0
    %1402 = vmatpush1.xpose.msra.mxu0 0.0
    %1403 = vmatprep.subr.mxu0 0.0
    %1404 = vmatpush1.xpose.msra.mxu0 0.0
    %1405 = vmatprep.subr.mxu0 0.0
    %1406 = vmatpush1.xpose.msra.mxu0 0.0
    %1407 = vmatprep.subr.mxu0 0.0
    %1408 = vmatpush1.xpose.msra.mxu0 0.0
    %1409 = vmatprep.subr.mxu0 0.0
    %1410 = vmatpush1.xpose.msra.mxu0 0.0
    %1411 = vmatprep.subr.mxu0 0.0
    %1412 = vmatpush1.xpose.msra.mxu0 0.0
    %1413 = vmatprep.subr.mxu0 0.0
    %1414 = vmatpush1.xpose.msra.mxu0 0.0
    %1415 = vmatprep.subr.mxu0 0.0
    %1416 = vmatpush1.xpose.msra.mxu0 0.0
    %1417 = vmatprep.subr.mxu0 0.0
    %1418 = vmatpush1.xpose.msra.mxu0 %v1385
    %1419 = vmatprep.subr.mxu0 0.0
    %1420 = vmatpush2.xpose.msra.mxu0 0.0
    %1421 = vmatprep.subr.mxu0 0.0
    %1422 = vmatpush2.xpose.msra.mxu0 0.0
    %1423 = vmatprep.subr.mxu0 0.0
    %1424 = vmatpush2.xpose.msra.mxu0 0.0
    %1425 = vmatprep.subr.mxu0 0.0
    %1426 = vmatpush2.xpose.msra.mxu0 0.0
    %1427 = vmatprep.subr.mxu0 0.0
    %1428 = vmatpush2.xpose.msra.mxu0 0.0
    %1429 = vmatprep.subr.mxu0 0.0
    %1430 = vmatpush2.xpose.msra.mxu0 0.0
    %1431 = vmatprep.subr.mxu0 0.0
    %1432 = vmatpush2.xpose.msra.mxu0 0.0
    %1433 = vmatprep.subr.mxu0 0.0
    %1434 = vmatpush2.xpose.msra.mxu0 0.0
    %1435 = vmatprep.subr.mxu0 0.0
    %1436 = vmatpush2.xpose.msra.mxu0 0.0
    %1437 = vmatprep.subr.mxu0 0.0
    %1438 = vmatpush2.xpose.msra.mxu0 0.0
    %1439 = vmatprep.subr.mxu0 0.0
    %1440 = vmatpush2.xpose.msra.mxu0 0.0
    %1441 = vmatprep.subr.mxu0 0.0
    %1442 = vmatpush2.xpose.msra.mxu0 0.0
    %1443 = vmatprep.subr.mxu0 0.0
    %1444 = vmatpush2.xpose.msra.mxu0 0.0
    %1445 = vmatprep.subr.mxu0 0.0
    %1446 = vmatpush2.xpose.msra.mxu0 0.0
    %1447 = vmatprep.subr.mxu0 0.0
    %1448 = vmatpush2.xpose.msra.mxu0 0.0
    %1449 = vmatprep.subr.mxu0 0.0
    %1450 = vmatpush2.xpose.msra.mxu0 0.0
    %1451 = vmatprep.mubr.f32.mxu0 0.0
    %1452 = vmatmul.mubr.f32.gmra.mxu0 %v1383
    %v1453 = vpop.f32.mrf.mxu0
    %v1454 = vadd.f32 0.0, %v1453
    %v1455 = vpop.f32.mrf.mxu0
    %1456 = vdwg.mxu0
    %v1457 = vmul.f32 %v1454, 0.35355338
    %v1458 = vadd.f32 %v1457, %v956
    %v1459 = vsel %vm189, %v1458, -inf
    %1460 = vmax.xlane.f32.xlu0 %v1459
    %v1461 = vpop.xlane.xlu0 %1460
    %v1462 = vsub.f32 %v1458, %v1461
    %v1463 = vmul.f32 %v1462, 1.442695
    %v1464 = vpow.pop %v1463
    %v1465 = vsel %vm189, %v1464, 0.0
    %1466 = vadd.xlane.f32.xlu0 %v1465
    %v1467 = vpop.xlane.xlu0 %1466
    %v1468 = vrcp.pop %v1467
    %v1469 = vmul.f32 %v1464, %v1468
    %1470 = vrot.lane.b32.xlu0 %v183, 40
    %v1471 = vpop.permute.xlu0 %1470
    %v1474 = vsel %vm189, %v1469, 0
    %1476 = vmatprep.subr.mxu0 0.0
    %1477 = vmatpush1.msra.mxu0 0.0
    %1478 = vmatprep.subr.mxu0 0.0
    %1479 = vmatpush1.msra.mxu0 0.0
    %1480 = vmatprep.subr.mxu0 0.0
    %1481 = vmatpush1.msra.mxu0 0.0
    %1482 = vmatprep.subr.mxu0 0.0
    %1483 = vmatpush1.msra.mxu0 0.0
    %1484 = vmatprep.subr.mxu0 0.0
    %1485 = vmatpush1.msra.mxu0 0.0
    %1486 = vmatprep.subr.mxu0 0.0
    %1487 = vmatpush1.msra.mxu0 0.0
    %1488 = vmatprep.subr.mxu0 0.0
    %1489 = vmatpush1.msra.mxu0 0.0
    %1490 = vmatprep.subr.mxu0 0.0
    %1491 = vmatpush1.msra.mxu0 0.0
    %1492 = vmatprep.subr.mxu0 0.0
    %1493 = vmatpush1.msra.mxu0 0.0
    %1494 = vmatprep.subr.mxu0 0.0
    %1495 = vmatpush1.msra.mxu0 0.0
    %1496 = vmatprep.subr.mxu0 0.0
    %1497 = vmatpush1.msra.mxu0 0.0
    %1498 = vmatprep.subr.mxu0 0.0
    %1499 = vmatpush1.msra.mxu0 0.0
    %1500 = vmatprep.subr.mxu0 0.0
    %1501 = vmatpush1.msra.mxu0 0.0
    %1502 = vmatprep.subr.mxu0 0.0
    %1503 = vmatpush1.msra.mxu0 0.0
    %1504 = vmatprep.subr.mxu0 0.0
    %1505 = vmatpush1.msra.mxu0 0.0
    %1506 = vmatprep.subr.mxu0 0.0
    %1507 = vmatpush1.msra.mxu0 %v1471
    %1508 = vmatprep.subr.mxu0 0.0
    %1509 = vmatpush2.msra.mxu0 0.0
    %1510 = vmatprep.subr.mxu0 0.0
    %1511 = vmatpush2.msra.mxu0 0.0
    %1512 = vmatprep.subr.mxu0 0.0
    %1513 = vmatpush2.msra.mxu0 0.0
    %1514 = vmatprep.subr.mxu0 0.0
    %1515 = vmatpush2.msra.mxu0 0.0
    %1516 = vmatprep.subr.mxu0 0.0
    %1517 = vmatpush2.msra.mxu0 0.0
    %1518 = vmatprep.subr.mxu0 0.0
    %1519 = vmatpush2.msra.mxu0 0.0
    %1520 = vmatprep.subr.mxu0 0.0
    %1521 = vmatpush2.msra.mxu0 0.0
    %1522 = vmatprep.subr.mxu0 0.0
    %1523 = vmatpush2.msra.mxu0 0.0
    %1524 = vmatprep.subr.mxu0 0.0
    %1525 = vmatpush2.msra.mxu0 0.0
    %1526 = vmatprep.subr.mxu0 0.0
    %1527 = vmatpush2.msra.mxu0 0.0
    %1528 = vmatprep.subr.mxu0 0.0
    %1529 = vmatpush2.msra.mxu0 0.0
    %1530 = vmatprep.subr.mxu0 0.0
    %1531 = vmatpush2.msra.mxu0 0.0
    %1532 = vmatprep.subr.mxu0 0.0
    %1533 = vmatpush2.msra.mxu0 0.0
    %1534 = vmatprep.subr.mxu0 0.0
    %1535 = vmatpush2.msra.mxu0 0.0
    %1536 = vmatprep.subr.mxu0 0.0
    %1537 = vmatpush2.msra.mxu0 0.0
    %1538 = vmatprep.subr.mxu0 0.0
    %1539 = vmatpush2.msra.mxu0 0.0
    %1540 = vmatprep.mubr.f32.mxu0 0.0
    %1541 = vmatmul.mubr.f32.gmra.mxu0 %v1474
    %v1542 = vpop.f32.mrf.mxu0
    %v1543 = vadd.f32 0.0, %v1542
    %v1544 = vpop.f32.mrf.mxu0
    %1545 = vdwg.mxu0
    %1547 = vrot.lane.b32.xlu0 %v1209, 8
    %v1548 = vpop.permute.xlu0 %1547
    %1551 = vrot.lane.b32.xlu0 %v1376, 16
    %v1552 = vpop.permute.xlu0 %1551
    %1555 = vrot.lane.b32.xlu0 %v1543, 24
    %v1556 = vpop.permute.xlu0 %1555
    %v1558 = vsel %vm189, %v1042, %v1548
    %v1559 = vsel %vm871, %v1558, %v1552
    %v1560 = vsel %vm873, %v1559, %v1556
    %v1561 = vld [vmem:[%s6] sm:$0xf]
    %v1562 = vld [vmem:[%s6 + $0x4] sm:$0xf]
    %v1563 = vld [vmem:[%s6 + $0x8] sm:$0xf]
    %v1564 = vld [vmem:[%s6 + $0xc] sm:$0xf]
    %v1565 = vpack.c.bf16 %v1560, %v874
    %v1566 = vld [vmem:[%s7] sm:$0x1]
    %v1568 = vlaneseq
    %v1569 = vshrl.u32 %v1568, 7
    %v1570 = vsub.s32 0, %v1569
    %v1571 = vrot.slane %v1566, %v1570
    %v1577 = vunpack.c.l.b16 %v1561
    %v1578 = vunpack.c.l.b16 %v1562
    %v1579 = vunpack.c.l.b16 %v1563
    %v1580 = vunpack.c.l.b16 %v1564
    %v1581 = vpack.c.b16 %v1578, %v1577
    %v1582 = vpack.c.b16 %v1580, %v1579
    %v1586 = vsel %vm74, %v1565, 0
    %1588 = vmatprep.subr.bf16.mxu0 0
    %1589 = vmatpush1.bf16.msra.mxu0 0
    %1590 = vmatprep.subr.bf16.mxu0 0
    %1591 = vmatpush1.bf16.msra.mxu0 0
    %1592 = vmatprep.subr.bf16.mxu0 0
    %1593 = vmatpush1.bf16.msra.mxu0 0
    %1594 = vmatprep.subr.bf16.mxu0 0
    %1595 = vmatpush1.bf16.msra.mxu0 0
    %1596 = vmatprep.subr.bf16.mxu0 0
    %1597 = vmatpush1.bf16.msra.mxu0 0
    %1598 = vmatprep.subr.bf16.mxu0 0
    %1599 = vmatpush1.bf16.msra.mxu0 0
    %1600 = vmatprep.subr.bf16.mxu0 0
    %1601 = vmatpush1.bf16.msra.mxu0 %v1582
    %1602 = vmatprep.subr.bf16.mxu0 0
    %1603 = vmatpush1.bf16.msra.mxu0 %v1581
    %1604 = vmatprep.subr.bf16.mxu0 0
    %1605 = vmatpush2.bf16.msra.mxu0 0
    %1606 = vmatprep.subr.bf16.mxu0 0
    %1607 = vmatpush2.bf16.msra.mxu0 0
    %1608 = vmatprep.subr.bf16.mxu0 0
    %1609 = vmatpush2.bf16.msra.mxu0 0
    %1610 = vmatprep.subr.bf16.mxu0 0
    %1611 = vmatpush2.bf16.msra.mxu0 0
    %1612 = vmatprep.subr.bf16.mxu0 0
    %1613 = vmatpush2.bf16.msra.mxu0 0
    %1614 = vmatprep.subr.bf16.mxu0 0
    %1615 = vmatpush2.bf16.msra.mxu0 0
    %1616 = vmatprep.subr.bf16.mxu0 0
    %1617 = vmatpush2.bf16.msra.mxu0 0
    %1618 = vmatprep.subr.bf16.mxu0 0
    %1619 = vmatpush2.bf16.msra.mxu0 0
    %1620 = vmatprep.mubr.bf16.mxu0 0
    %1621 = vmatmul.mubr.bf16.gmra.mxu0 %v1586
    %v1622 = vpop.f32.mrf.mxu0
    %v1623 = vadd.f32 %v1571, %v1622
    %v1624 = vpop.f32.mrf.mxu0
    %v1625 = vpop.f32.mrf.mxu0
    %v1626 = vadd.f32 %v1571, %v1625
    %v1627 = vpop.f32.mrf.mxu0
    %1628 = vdwg.mxu0
    %v1629 = vadd.f32 %v1623, %v116
    %v1630 = vadd.f32 %v1626, %v117
    %v1631 = vld [vmem:[%s8] sm:$0x1]
    %v1632 = vld [vmem:[%s9] sm:$0x1]
    %v1633 = vsel %vm74, %v1629, 0.0
    %1634 = vadd.xlane.f32.xlu0 %v1633
    %v1635 = vpop.xlane.xlu0 %1634
    %v1636 = vsel %vm74, %v1630, 0.0
    %1637 = vadd.xlane.f32.xlu0 %v1636
    %v1638 = vpop.xlane.xlu0 %1637
    %v1639 = vmul.f32 %v1635, %v81
    %v1640 = vmul.f32 %v1638, %v81
    %v1641 = vsub.f32 %v1629, %v1639
    %v1642 = vsub.f32 %v1630, %v1640
    %v1643 = vmul.f32 %v1641, %v1641
    %v1644 = vmul.f32 %v1642, %v1642
    %v1645 = vsel %vm74, %v1643, 0.0
    %1646 = vadd.xlane.f32.xlu0 %v1645
    %v1647 = vpop.xlane.xlu0 %1646
    %v1648 = vsel %vm74, %v1644, 0.0
    %1649 = vadd.xlane.f32.xlu0 %v1648
    %v1650 = vpop.xlane.xlu0 %1649
    %v1651 = vmul.f32 %v1647, %v81
    %v1652 = vmul.f32 %v1650, %v81
    %v1653 = vadd.f32 %v1651, 1e-12
    %v1654 = vadd.f32 %v1652, 1e-12
    %v1655 = vrsqrt.pop %v1653
    %v1656 = vrsqrt.pop %v1654
    %v1657 = vmul.f32 %v1641, %v1655
    %v1658 = vmul.f32 %v1642, %v1656
    %v1660 = vlaneseq
    %v1661 = vshrl.u32 %v1660, 7
    %v1662 = vsub.s32 0, %v1661
    %v1663 = vrot.slane %v1631, %v1662
    %v1665 = vmul.f32 %v1657, %v1663
    %v1666 = vmul.f32 %v1658, %v1663
    %v1668 = vlaneseq
    %v1669 = vshrl.u32 %v1668, 7
    %v1670 = vsub.s32 0, %v1669
    %v1671 = vrot.slane %v1632, %v1670
    %v1673 = vadd.f32 %v1665, %v1671
    %v1674 = vadd.f32 %v1666, %v1671
    %v1675 = vld [vmem:[%s10] sm:$0xf]
    %v1676 = vld [vmem:[%s10 + $0x4] sm:$0xf]
    %v1677 = vld [vmem:[%s10 + $0x8] sm:$0xf]
    %v1678 = vld [vmem:[%s10 + $0xc] sm:$0xf]
    %v1679 = vpack.c.bf16 %v1674, %v1673
    %v1680 = vld [vmem:[%s11] sm:$0x1]
    %v1682 = vlaneseq
    %v1683 = vshrl.u32 %v1682, 7
    %v1684 = vsub.s32 0, %v1683
    %v1685 = vrot.slane %v1680, %v1684
    %v1691 = vunpack.c.l.b16 %v1675
    %v1692 = vunpack.c.l.b16 %v1676
    %v1693 = vunpack.c.l.b16 %v1677
    %v1694 = vunpack.c.l.b16 %v1678
    %v1695 = vpack.c.b16 %v1692, %v1691
    %v1696 = vpack.c.b16 %v1694, %v1693
    %v1700 = vsel %vm74, %v1679, 0
    %1702 = vmatprep.subr.bf16.mxu0 0
    %1703 = vmatpush1.bf16.msra.mxu0 0
    %1704 = vmatprep.subr.bf16.mxu0 0
    %1705 = vmatpush1.bf16.msra.mxu0 0
    %1706 = vmatprep.subr.bf16.mxu0 0
    %1707 = vmatpush1.bf16.msra.mxu0 0
    %1708 = vmatprep.subr.bf16.mxu0 0
    %1709 = vmatpush1.bf16.msra.mxu0 0
    %1710 = vmatprep.subr.bf16.mxu0 0
    %1711 = vmatpush1.bf16.msra.mxu0 0
    %1712 = vmatprep.subr.bf16.mxu0 0
    %1713 = vmatpush1.bf16.msra.mxu0 0
    %1714 = vmatprep.subr.bf16.mxu0 0
    %1715 = vmatpush1.bf16.msra.mxu0 %v1696
    %1716 = vmatprep.subr.bf16.mxu0 0
    %1717 = vmatpush1.bf16.msra.mxu0 %v1695
    %1718 = vmatprep.subr.bf16.mxu0 0
    %1719 = vmatpush2.bf16.msra.mxu0 0
    %1720 = vmatprep.subr.bf16.mxu0 0
    %1721 = vmatpush2.bf16.msra.mxu0 0
    %1722 = vmatprep.subr.bf16.mxu0 0
    %1723 = vmatpush2.bf16.msra.mxu0 0
    %1724 = vmatprep.subr.bf16.mxu0 0
    %1725 = vmatpush2.bf16.msra.mxu0 0
    %1726 = vmatprep.subr.bf16.mxu0 0
    %1727 = vmatpush2.bf16.msra.mxu0 0
    %1728 = vmatprep.subr.bf16.mxu0 0
    %1729 = vmatpush2.bf16.msra.mxu0 0
    %1730 = vmatprep.subr.bf16.mxu0 0
    %1731 = vmatpush2.bf16.msra.mxu0 0
    %1732 = vmatprep.subr.bf16.mxu0 0
    %1733 = vmatpush2.bf16.msra.mxu0 0
    %1734 = vmatprep.mubr.bf16.mxu0 0
    %1735 = vmatmul.mubr.bf16.gmra.mxu0 %v1700
    %v1736 = vpop.f32.mrf.mxu0
    %v1737 = vadd.f32 %v1685, %v1736
    %v1738 = vpop.f32.mrf.mxu0
    %v1739 = vpop.f32.mrf.mxu0
    %v1740 = vadd.f32 %v1685, %v1739
    %v1741 = vpop.f32.mrf.mxu0
    %1742 = vdwg.mxu0
    %v1743 = vmul.f32 %v1737, 0.5
    %v1744 = vmul.f32 %v1740, 0.5
    %v1745 = vmul.f32 %v1737, 0.044715
    %v1746 = vmul.f32 %v1740, 0.044715
    %v1747 = vmul.f32 %v1745, %v1737
    %v1748 = vmul.f32 %v1746, %v1740
    %v1749 = vmul.f32 %v1747, %v1737
    %v1750 = vmul.f32 %v1748, %v1740
    %v1751 = vadd.f32 %v1737, %v1749
    %v1752 = vadd.f32 %v1740, %v1750
    %v1753 = vmul.f32 %v1751, 0.7978846
    %v1754 = vmul.f32 %v1752, 0.7978846
    %v1755 = vtanh.pop %v1753
    %v1756 = vtanh.pop %v1754
    %v1757 = vadd.f32 %v1755, 1.0
    %v1758 = vadd.f32 %v1756, 1.0
    %v1759 = vmul.f32 %v1743, %v1757
    %v1760 = vmul.f32 %v1744, %v1758
    %v1761 = vld [vmem:[%s12] sm:$0xf]
    %v1762 = vld [vmem:[%s12 + $0x4] sm:$0xf]
    %v1763 = vld [vmem:[%s12 + $0x8] sm:$0xf]
    %v1764 = vld [vmem:[%s12 + $0xc] sm:$0xf]
    %v1765 = vld [vmem:[%s12 + $0x10] sm:$0xf]
    %v1766 = vld [vmem:[%s12 + $0x14] sm:$0xf]
    %v1767 = vld [vmem:[%s12 + $0x18] sm:$0xf]
    %v1768 = vld [vmem:[%s12 + $0x1c] sm:$0xf]
    %v1769 = vpack.c.bf16 %v1760, %v1759
    %v1770 = vld [vmem:[%s13] sm:$0x1]
    %v1772 = vlaneseq
    %v1773 = vshrl.u32 %v1772, 7
    %v1774 = vsub.s32 0, %v1773
    %v1775 = vrot.slane %v1770, %v1774
    %v1785 = vunpack.c.l.b16 %v1761
    %v1786 = vunpack.c.l.b16 %v1762
    %v1787 = vunpack.c.l.b16 %v1763
    %v1788 = vunpack.c.l.b16 %v1764
    %v1789 = vunpack.c.l.b16 %v1765
    %v1790 = vunpack.c.l.b16 %v1766
    %v1791 = vunpack.c.l.b16 %v1767
    %v1792 = vunpack.c.l.b16 %v1768
    %v1793 = vpack.c.b16 %v1786, %v1785
    %v1794 = vpack.c.b16 %v1788, %v1787
    %v1795 = vpack.c.b16 %v1790, %v1789
    %v1796 = vpack.c.b16 %v1792, %v1791
    %vm1801 = vcmask 523264
    %v1803 = vsel %vm1801, %v1769, 0
    %1805 = vmatprep.subr.bf16.mxu0 0
    %1806 = vmatpush1.bf16.msra.mxu0 0
    %1807 = vmatprep.subr.bf16.mxu0 0
    %1808 = vmatpush1.bf16.msra.mxu0 0
    %1809 = vmatprep.subr.bf16.mxu0 0
    %1810 = vmatpush1.bf16.msra.mxu0 0
    %1811 = vmatprep.subr.bf16.mxu0 0
    %1812 = vmatpush1.bf16.msra.mxu0 0
    %1813 = vmatprep.subr.bf16.mxu0 0
    %1814 = vmatpush1.bf16.msra.mxu0 %v1796
    %1815 = vmatprep.subr.bf16.mxu0 0
    %1816 = vmatpush1.bf16.msra.mxu0 %v1795
    %1817 = vmatprep.subr.bf16.mxu0 0
    %1818 = vmatpush1.bf16.msra.mxu0 %v1794
    %1819 = vmatprep.subr.bf16.mxu0 0
    %1820 = vmatpush1.bf16.msra.mxu0 %v1793
    %1821 = vmatprep.subr.bf16.mxu0 0
    %1822 = vmatpush2.bf16.msra.mxu0 0
    %1823 = vmatprep.subr.bf16.mxu0 0
    %1824 = vmatpush2.bf16.msra.mxu0 0
    %1825 = vmatprep.subr.bf16.mxu0 0
    %1826 = vmatpush2.bf16.msra.mxu0 0
    %1827 = vmatprep.subr.bf16.mxu0 0
    %1828 = vmatpush2.bf16.msra.mxu0 0
    %1829 = vmatprep.subr.bf16.mxu0 0
    %1830 = vmatpush2.bf16.msra.mxu0 0
    %1831 = vmatprep.subr.bf16.mxu0 0
    %1832 = vmatpush2.bf16.msra.mxu0 0
    %1833 = vmatprep.subr.bf16.mxu0 0
    %1834 = vmatpush2.bf16.msra.mxu0 0
    %1835 = vmatprep.subr.bf16.mxu0 0
    %1836 = vmatpush2.bf16.msra.mxu0 0
    %1837 = vmatprep.mubr.bf16.mxu0 0
    %1838 = vmatmul.mubr.bf16.gmra.mxu0 %v1803
    %v1839 = vpop.f32.mrf.mxu0
    %v1840 = vadd.f32 %v1775, %v1839
    %v1841 = vpop.f32.mrf.mxu0
    %v1842 = vpop.f32.mrf.mxu0
    %v1843 = vadd.f32 %v1775, %v1842
    %v1844 = vpop.f32.mrf.mxu0
    %1845 = vdwg.mxu0
    %v1846 = vadd.f32 %v1840, %v1673
    %v1847 = vadd.f32 %v1843, %v1674
    %v1848 = vld [vmem:[%s14] sm:$0x1]
    %v1849 = vld [vmem:[%s15] sm:$0x1]
    %v1850 = vsel %vm74, %v1846, 0.0
    %1851 = vadd.xlane.f32.xlu0 %v1850
    %v1852 = vpop.xlane.xlu0 %1851
    %v1853 = vsel %vm74, %v1847, 0.0
    %1854 = vadd.xlane.f32.xlu0 %v1853
    %v1855 = vpop.xlane.xlu0 %1854
    %v1856 = vmul.f32 %v1852, %v81
    %v1857 = vmul.f32 %v1855, %v81
    %v1858 = vsub.f32 %v1846, %v1856
    %v1859 = vsub.f32 %v1847, %v1857
    %v1860 = vmul.f32 %v1858, %v1858
    %v1861 = vmul.f32 %v1859, %v1859
    %v1862 = vsel %vm74, %v1860, 0.0
    %1863 = vadd.xlane.f32.xlu0 %v1862
    %v1864 = vpop.xlane.xlu0 %1863
    %v1865 = vsel %vm74, %v1861, 0.0
    %1866 = vadd.xlane.f32.xlu0 %v1865
    %v1867 = vpop.xlane.xlu0 %1866
    %v1868 = vmul.f32 %v1864, %v81
    %v1869 = vmul.f32 %v1867, %v81
    %v1870 = vadd.f32 %v1868, 1e-12
    %v1871 = vadd.f32 %v1869, 1e-12
    %v1872 = vrsqrt.pop %v1870
    %v1873 = vrsqrt.pop %v1871
    %v1874 = vmul.f32 %v1858, %v1872
    %v1875 = vmul.f32 %v1859, %v1873
    %v1877 = vlaneseq
    %v1878 = vshrl.u32 %v1877, 7
    %v1879 = vsub.s32 0, %v1878
    %v1880 = vrot.slane %v1848, %v1879
    %v1882 = vmul.f32 %v1874, %v1880
    %v1883 = vmul.f32 %v1875, %v1880
    %v1885 = vlaneseq
    %v1886 = vshrl.u32 %v1885, 7
    %v1887 = vsub.s32 0, %v1886
    %v1888 = vrot.slane %v1849, %v1887
    %v1890 = vadd.f32 %v1882, %v1888
    %v1891 = vadd.f32 %v1883, %v1888
    %s1892 = scalar_lea.vmem %s4, 16
    %v1893 = vld [vmem:[%s1892] sm:$0xf]
    %v1894 = vld [vmem:[%s1892 + $0x4] sm:$0xf]
    %v1895 = vld [vmem:[%s1892 + $0x8] sm:$0xf]
    %v1896 = vld [vmem:[%s1892 + $0xc] sm:$0xf]
    %v1897 = vpack.c.bf16 %v1891, %v1890
    %s1898 = scalar_lea.vmem %s5, 1
    %v1899 = vld [vmem:[%s1898] sm:$0x1]
    %v1901 = vlaneseq
    %v1902 = vshrl.u32 %v1901, 7
    %v1903 = vsub.s32 0, %v1902
    %v1904 = vrot.slane %v1899, %v1903
    %v1910 = vunpack.c.l.b16 %v1893
    %v1911 = vunpack.c.l.b16 %v1894
    %v1912 = vunpack.c.l.b16 %v1895
    %v1913 = vunpack.c.l.b16 %v1896
    %v1914 = vpack.c.b16 %v1911, %v1910
    %v1915 = vpack.c.b16 %v1913, %v1912
    %v1919 = vsel %vm74, %v1897, 0
    %1921 = vmatprep.subr.bf16.mxu0 0
    %1922 = vmatpush1.bf16.msra.mxu0 0
    %1923 = vmatprep.subr.bf16.mxu0 0
    %1924 = vmatpush1.bf16.msra.mxu0 0
    %1925 = vmatprep.subr.bf16.mxu0 0
    %1926 = vmatpush1.bf16.msra.mxu0 0
    %1927 = vmatprep.subr.bf16.mxu0 0
    %1928 = vmatpush1.bf16.msra.mxu0 0
    %1929 = vmatprep.subr.bf16.mxu0 0
    %1930 = vmatpush1.bf16.msra.mxu0 0
    %1931 = vmatprep.subr.bf16.mxu0 0
    %1932 = vmatpush1.bf16.msra.mxu0 0
    %1933 = vmatprep.subr.bf16.mxu0 0
    %1934 = vmatpush1.bf16.msra.mxu0 %v1915
    %1935 = vmatprep.subr.bf16.mxu0 0
    %1936 = vmatpush1.bf16.msra.mxu0 %v1914
    %1937 = vmatprep.subr.bf16.mxu0 0
    %1938 = vmatpush2.bf16.msra.mxu0 0
    %1939 = vmatprep.subr.bf16.mxu0 0
    %1940 = vmatpush2.bf16.msra.mxu0 0
    %1941 = vmatprep.subr.bf16.mxu0 0
    %1942 = vmatpush2.bf16.msra.mxu0 0
    %1943 = vmatprep.subr.bf16.mxu0 0
    %1944 = vmatpush2.bf16.msra.mxu0 0
    %1945 = vmatprep.subr.bf16.mxu0 0
    %1946 = vmatpush2.bf16.msra.mxu0 0
    %1947 = vmatprep.subr.bf16.mxu0 0
    %1948 = vmatpush2.bf16.msra.mxu0 0
    %1949 = vmatprep.subr.bf16.mxu0 0
    %1950 = vmatpush2.bf16.msra.mxu0 0
    %1951 = vmatprep.subr.bf16.mxu0 0
    %1952 = vmatpush2.bf16.msra.mxu0 0
    %1953 = vmatprep.mubr.bf16.mxu0 0
    %1954 = vmatmul.mubr.bf16.gmra.mxu0 %v1919
    %v1955 = vpop.f32.mrf.mxu0
    %v1956 = vadd.f32 %v1904, %v1955
    %v1957 = vpop.f32.mrf.mxu0
    %v1958 = vpop.f32.mrf.mxu0
    %v1959 = vadd.f32 %v1904, %v1958
    %v1960 = vpop.f32.mrf.mxu0
    %1961 = vdwg.mxu0
    %1963 = vrot.lane.b32.xlu0 %v1956, 96
    %v1964 = vpop.permute.xlu0 %1963
    %v1965 = vsel %vm189, %v1956, 0
    %v1967 = vsel %vm189, %v1964, 0
    %1969 = vmatprep.subr.mxu0 0.0
    %1970 = vmatpush1.xpose.msra.mxu0 0.0
    %1971 = vmatprep.subr.mxu0 0.0
    %1972 = vmatpush1.xpose.msra.mxu0 0.0
    %1973 = vmatprep.subr.mxu0 0.0
    %1974 = vmatpush1.xpose.msra.mxu0 0.0
    %1975 = vmatprep.subr.mxu0 0.0
    %1976 = vmatpush1.xpose.msra.mxu0 0.0
    %1977 = vmatprep.subr.mxu0 0.0
    %1978 = vmatpush1.xpose.msra.mxu0 0.0
    %1979 = vmatprep.subr.mxu0 0.0
    %1980 = vmatpush1.xpose.msra.mxu0 0.0
    %1981 = vmatprep.subr.mxu0 0.0
    %1982 = vmatpush1.xpose.msra.mxu0 0.0
    %1983 = vmatprep.subr.mxu0 0.0
    %1984 = vmatpush1.xpose.msra.mxu0 0.0
    %1985 = vmatprep.subr.mxu0 0.0
    %1986 = vmatpush1.xpose.msra.mxu0 0.0
    %1987 = vmatprep.subr.mxu0 0.0
    %1988 = vmatpush1.xpose.msra.mxu0 0.0
    %1989 = vmatprep.subr.mxu0 0.0
    %1990 = vmatpush1.xpose.msra.mxu0 0.0
    %1991 = vmatprep.subr.mxu0 0.0
    %1992 = vmatpush1.xpose.msra.mxu0 0.0
    %1993 = vmatprep.subr.mxu0 0.0
    %1994 = vmatpush1.xpose.msra.mxu0 0.0
    %1995 = vmatprep.subr.mxu0 0.0
    %1996 = vmatpush1.xpose.msra.mxu0 0.0
    %1997 = vmatprep.subr.mxu0 0.0
    %1998 = vmatpush1.xpose.msra.mxu0 0.0
    %1999 = vmatprep.subr.mxu0 0.0
    %2000 = vmatpush1.xpose.msra.mxu0 %v1967
    %2001 = vmatprep.subr.mxu0 0.0
    %2002 = vmatpush2.xpose.msra.mxu0 0.0
    %2003 = vmatprep.subr.mxu0 0.0
    %2004 = vmatpush2.xpose.msra.mxu0 0.0
    %2005 = vmatprep.subr.mxu0 0.0
    %2006 = vmatpush2.xpose.msra.mxu0 0.0
    %2007 = vmatprep.subr.mxu0 0.0
    %2008 = vmatpush2.xpose.msra.mxu0 0.0
    %2009 = vmatprep.subr.mxu0 0.0
    %2010 = vmatpush2.xpose.msra.mxu0 0.0
    %2011 = vmatprep.subr.mxu0 0.0
    %2012 = vmatpush2.xpose.msra.mxu0 0.0
    %2013 = vmatprep.subr.mxu0 0.0
    %2014 = vmatpush2.xpose.msra.mxu0 0.0
    %2015 = vmatprep.subr.mxu0 0.0
    %2016 = vmatpush2.xpose.msra.mxu0 0.0
    %2017 = vmatprep.subr.mxu0 0.0
    %2018 = vmatpush2.xpose.msra.mxu0 0.0
    %2019 = vmatprep.subr.mxu0 0.0
    %2020 = vmatpush2.xpose.msra.mxu0 0.0
    %2021 = vmatprep.subr.mxu0 0.0
    %2022 = vmatpush2.xpose.msra.mxu0 0.0
    %2023 = vmatprep.subr.mxu0 0.0
    %2024 = vmatpush2.xpose.msra.mxu0 0.0
    %2025 = vmatprep.subr.mxu0 0.0
    %2026 = vmatpush2.xpose.msra.mxu0 0.0
    %2027 = vmatprep.subr.mxu0 0.0
    %2028 = vmatpush2.xpose.msra.mxu0 0.0
    %2029 = vmatprep.subr.mxu0 0.0
    %2030 = vmatpush2.xpose.msra.mxu0 0.0
    %2031 = vmatprep.subr.mxu0 0.0
    %2032 = vmatpush2.xpose.msra.mxu0 0.0
    %2033 = vmatprep.mubr.f32.mxu0 0.0
    %2034 = vmatmul.mubr.f32.gmra.mxu0 %v1965
    %v2035 = vpop.f32.mrf.mxu0
    %v2036 = vadd.f32 0.0, %v2035
    %v2037 = vpop.f32.mrf.mxu0
    %2038 = vdwg.mxu0
    %v2039 = vmul.f32 %v2036, 0.35355338
    %v2040 = vadd.f32 %v2039, %v268
    %v2041 = vsel %vm189, %v2040, -inf
    %2042 = vmax.xlane.f32.xlu0 %v2041
    %v2043 = vpop.xlane.xlu0 %2042
    %v2044 = vsub.f32 %v2040, %v2043
    %v2045 = vmul.f32 %v2044, 1.442695
    %v2046 = vpow.pop %v2045
    %v2047 = vsel %vm189, %v2046, 0.0
    %2048 = vadd.xlane.f32.xlu0 %v2047
    %v2049 = vpop.xlane.xlu0 %2048
    %v2050 = vrcp.pop %v2049
    %v2051 = vmul.f32 %v2046, %v2050
    %2052 = vrot.lane.b32.xlu0 %v1956, 64
    %v2053 = vpop.permute.xlu0 %2052
    %v2056 = vsel %vm189, %v2051, 0
    %2058 = vmatprep.subr.mxu0 0.0
    %2059 = vmatpush1.msra.mxu0 0.0
    %2060 = vmatprep.subr.mxu0 0.0
    %2061 = vmatpush1.msra.mxu0 0.0
    %2062 = vmatprep.subr.mxu0 0.0
    %2063 = vmatpush1.msra.mxu0 0.0
    %2064 = vmatprep.subr.mxu0 0.0
    %2065 = vmatpush1.msra.mxu0 0.0
    %2066 = vmatprep.subr.mxu0 0.0
    %2067 = vmatpush1.msra.mxu0 0.0
    %2068 = vmatprep.subr.mxu0 0.0
    %2069 = vmatpush1.msra.mxu0 0.0
    %2070 = vmatprep.subr.mxu0 0.0
    %2071 = vmatpush1.msra.mxu0 0.0
    %2072 = vmatprep.subr.mxu0 0.0
    %2073 = vmatpush1.msra.mxu0 0.0
    %2074 = vmatprep.subr.mxu0 0.0
    %2075 = vmatpush1.msra.mxu0 0.0
    %2076 = vmatprep.subr.mxu0 0.0
    %2077 = vmatpush1.msra.mxu0 0.0
    %2078 = vmatprep.subr.mxu0 0.0
    %2079 = vmatpush1.msra.mxu0 0.0
    %2080 = vmatprep.subr.mxu0 0.0
    %2081 = vmatpush1.msra.mxu0 0.0
    %2082 = vmatprep.subr.mxu0 0.0
    %2083 = vmatpush1.msra.mxu0 0.0
    %2084 = vmatprep.subr.mxu0 0.0
    %2085 = vmatpush1.msra.mxu0 0.0
    %2086 = vmatprep.subr.mxu0 0.0
    %2087 = vmatpush1.msra.mxu0 0.0
    %2088 = vmatprep.subr.mxu0 0.0
    %2089 = vmatpush1.msra.mxu0 %v2053
    %2090 = vmatprep.subr.mxu0 0.0
    %2091 = vmatpush2.msra.mxu0 0.0
    %2092 = vmatprep.subr.mxu0 0.0
    %2093 = vmatpush2.msra.mxu0 0.0
    %2094 = vmatprep.subr.mxu0 0.0
    %2095 = vmatpush2.msra.mxu0 0.0
    %2096 = vmatprep.subr.mxu0 0.0
    %2097 = vmatpush2.msra.mxu0 0.0
    %2098 = vmatprep.subr.mxu0 0.0
    %2099 = vmatpush2.msra.mxu0 0.0
    %2100 = vmatprep.subr.mxu0 0.0
    %2101 = vmatpush2.msra.mxu0 0.0
    %2102 = vmatprep.subr.mxu0 0.0
    %2103 = vmatpush2.msra.mxu0 0.0
    %2104 = vmatprep.subr.mxu0 0.0
    %2105 = vmatpush2.msra.mxu0 0.0
    %2106 = vmatprep.subr.mxu0 0.0
    %2107 = vmatpush2.msra.mxu0 0.0
    %2108 = vmatprep.subr.mxu0 0.0
    %2109 = vmatpush2.msra.mxu0 0.0
    %2110 = vmatprep.subr.mxu0 0.0
    %2111 = vmatpush2.msra.mxu0 0.0
    %2112 = vmatprep.subr.mxu0 0.0
    %2113 = vmatpush2.msra.mxu0 0.0
    %2114 = vmatprep.subr.mxu0 0.0
    %2115 = vmatpush2.msra.mxu0 0.0
    %2116 = vmatprep.subr.mxu0 0.0
    %2117 = vmatpush2.msra.mxu0 0.0
    %2118 = vmatprep.subr.mxu0 0.0
    %2119 = vmatpush2.msra.mxu0 0.0
    %2120 = vmatprep.subr.mxu0 0.0
    %2121 = vmatpush2.msra.mxu0 0.0
    %2122 = vmatprep.mubr.f32.mxu0 0.0
    %2123 = vmatmul.mubr.f32.gmra.mxu0 %v2056
    %v2124 = vpop.f32.mrf.mxu0
    %v2125 = vadd.f32 0.0, %v2124
    %v2126 = vpop.f32.mrf.mxu0
    %2127 = vdwg.mxu0
    %2128 = vrot.lane.b32.xlu0 %v1956, 120
    %v2129 = vpop.permute.xlu0 %2128
    %2130 = vrot.lane.b32.xlu0 %v1956, 88
    %v2131 = vpop.permute.xlu0 %2130
    %v2132 = vsel %vm189, %v2129, 0
    %v2134 = vsel %vm189, %v2131, 0
    %2136 = vmatprep.subr.mxu0 0.0
    %2137 = vmatpush1.xpose.msra.mxu0 0.0
    %2138 = vmatprep.subr.mxu0 0.0
    %2139 = vmatpush1.xpose.msra.mxu0 0.0
    %2140 = vmatprep.subr.mxu0 0.0
    %2141 = vmatpush1.xpose.msra.mxu0 0.0
    %2142 = vmatprep.subr.mxu0 0.0
    %2143 = vmatpush1.xpose.msra.mxu0 0.0
    %2144 = vmatprep.subr.mxu0 0.0
    %2145 = vmatpush1.xpose.msra.mxu0 0.0
    %2146 = vmatprep.subr.mxu0 0.0
    %2147 = vmatpush1.xpose.msra.mxu0 0.0
    %2148 = vmatprep.subr.mxu0 0.0
    %2149 = vmatpush1.xpose.msra.mxu0 0.0
    %2150 = vmatprep.subr.mxu0 0.0
    %2151 = vmatpush1.xpose.msra.mxu0 0.0
    %2152 = vmatprep.subr.mxu0 0.0
    %2153 = vmatpush1.xpose.msra.mxu0 0.0
    %2154 = vmatprep.subr.mxu0 0.0
    %2155 = vmatpush1.xpose.msra.mxu0 0.0
    %2156 = vmatprep.subr.mxu0 0.0
    %2157 = vmatpush1.xpose.msra.mxu0 0.0
    %2158 = vmatprep.subr.mxu0 0.0
    %2159 = vmatpush1.xpose.msra.mxu0 0.0
    %2160 = vmatprep.subr.mxu0 0.0
    %2161 = vmatpush1.xpose.msra.mxu0 0.0
    %2162 = vmatprep.subr.mxu0 0.0
    %2163 = vmatpush1.xpose.msra.mxu0 0.0
    %2164 = vmatprep.subr.mxu0 0.0
    %2165 = vmatpush1.xpose.msra.mxu0 0.0
    %2166 = vmatprep.subr.mxu0 0.0
    %2167 = vmatpush1.xpose.msra.mxu0 %v2134
    %2168 = vmatprep.subr.mxu0 0.0
    %2169 = vmatpush2.xpose.msra.mxu0 0.0
    %2170 = vmatprep.subr.mxu0 0.0
    %2171 = vmatpush2.xpose.msra.mxu0 0.0
    %2172 = vmatprep.subr.mxu0 0.0
    %2173 = vmatpush2.xpose.msra.mxu0 0.0
    %2174 = vmatprep.subr.mxu0 0.0
    %2175 = vmatpush2.xpose.msra.mxu0 0.0
    %2176 = vmatprep.subr.mxu0 0.0
    %2177 = vmatpush2.xpose.msra.mxu0 0.0
    %2178 = vmatprep.subr.mxu0 0.0
    %2179 = vmatpush2.xpose.msra.mxu0 0.0
    %2180 = vmatprep.subr.mxu0 0.0
    %2181 = vmatpush2.xpose.msra.mxu0 0.0
    %2182 = vmatprep.subr.mxu0 0.0
    %2183 = vmatpush2.xpose.msra.mxu0 0.0
    %2184 = vmatprep.subr.mxu0 0.0
    %2185 = vmatpush2.xpose.msra.mxu0 0.0
    %2186 = vmatprep.subr.mxu0 0.0
    %2187 = vmatpush2.xpose.msra.mxu0 0.0
    %2188 = vmatprep.subr.mxu0 0.0
    %2189 = vmatpush2.xpose.msra.mxu0 0.0
    %2190 = vmatprep.subr.mxu0 0.0
    %2191 = vmatpush2.xpose.msra.mxu0 0.0
    %2192 = vmatprep.subr.mxu0 0.0
    %2193 = vmatpush2.xpose.msra.mxu0 0.0
    %2194 = vmatprep.subr.mxu0 0.0
    %2195 = vmatpush2.xpose.msra.mxu0 0.0
    %2196 = vmatprep.subr.mxu0 0.0
    %2197 = vmatpush2.xpose.msra.mxu0 0.0
    %2198 = vmatprep.subr.mxu0 0.0
    %2199 = vmatpush2.xpose.msra.mxu0 0.0
    %2200 = vmatprep.mubr.f32.mxu0 0.0
    %2201 = vmatmul.mubr.f32.gmra.mxu0 %v2132
    %v2202 = vpop.f32.mrf.mxu0
    %v2203 = vadd.f32 0.0, %v2202
    %v2204 = vpop.f32.mrf.mxu0
    %2205 = vdwg.mxu0
    %v2206 = vmul.f32 %v2203, 0.35355338
    %v2207 = vadd.f32 %v2206, %v268
    %v2208 = vsel %vm189, %v2207, -inf
    %2209 = vmax.xlane.f32.xlu0 %v2208
    %v2210 = vpop.xlane.xlu0 %2209
    %v2211 = vsub.f32 %v2207, %v2210
    %v2212 = vmul.f32 %v2211, 1.442695
    %v2213 = vpow.pop %v2212
    %v2214 = vsel %vm189, %v2213, 0.0
    %2215 = vadd.xlane.f32.xlu0 %v2214
    %v2216 = vpop.xlane.xlu0 %2215
    %v2217 = vrcp.pop %v2216
    %v2218 = vmul.f32 %v2213, %v2217
    %2219 = vrot.lane.b32.xlu0 %v1956, 56
    %v2220 = vpop.permute.xlu0 %2219
    %v2223 = vsel %vm189, %v2218, 0
    %2225 = vmatprep.subr.mxu0 0.0
    %2226 = vmatpush1.msra.mxu0 0.0
    %2227 = vmatprep.subr.mxu0 0.0
    %2228 = vmatpush1.msra.mxu0 0.0
    %2229 = vmatprep.subr.mxu0 0.0
    %2230 = vmatpush1.msra.mxu0 0.0
    %2231 = vmatprep.subr.mxu0 0.0
    %2232 = vmatpush1.msra.mxu0 0.0
    %2233 = vmatprep.subr.mxu0 0.0
    %2234 = vmatpush1.msra.mxu0 0.0
    %2235 = vmatprep.subr.mxu0 0.0
    %2236 = vmatpush1.msra.mxu0 0.0
    %2237 = vmatprep.subr.mxu0 0.0
    %2238 = vmatpush1.msra.mxu0 0.0
    %2239 = vmatprep.subr.mxu0 0.0
    %2240 = vmatpush1.msra.mxu0 0.0
    %2241 = vmatprep.subr.mxu0 0.0
    %2242 = vmatpush1.msra.mxu0 0.0
    %2243 = vmatprep.subr.mxu0 0.0
    %2244 = vmatpush1.msra.mxu0 0.0
    %2245 = vmatprep.subr.mxu0 0.0
    %2246 = vmatpush1.msra.mxu0 0.0
    %2247 = vmatprep.subr.mxu0 0.0
    %2248 = vmatpush1.msra.mxu0 0.0
    %2249 = vmatprep.subr.mxu0 0.0
    %2250 = vmatpush1.msra.mxu0 0.0
    %2251 = vmatprep.subr.mxu0 0.0
    %2252 = vmatpush1.msra.mxu0 0.0
    %2253 = vmatprep.subr.mxu0 0.0
    %2254 = vmatpush1.msra.mxu0 0.0
    %2255 = vmatprep.subr.mxu0 0.0
    %2256 = vmatpush1.msra.mxu0 %v2220
    %2257 = vmatprep.subr.mxu0 0.0
    %2258 = vmatpush2.msra.mxu0 0.0
    %2259 = vmatprep.subr.mxu0 0.0
    %2260 = vmatpush2.msra.mxu0 0.0
    %2261 = vmatprep.subr.mxu0 0.0
    %2262 = vmatpush2.msra.mxu0 0.0
    %2263 = vmatprep.subr.mxu0 0.0
    %2264 = vmatpush2.msra.mxu0 0.0
    %2265 = vmatprep.subr.mxu0 0.0
    %2266 = vmatpush2.msra.mxu0 0.0
    %2267 = vmatprep.subr.mxu0 0.0
    %2268 = vmatpush2.msra.mxu0 0.0
    %2269 = vmatprep.subr.mxu0 0.0
    %2270 = vmatpush2.msra.mxu0 0.0
    %2271 = vmatprep.subr.mxu0 0.0
    %2272 = vmatpush2.msra.mxu0 0.0
    %2273 = vmatprep.subr.mxu0 0.0
    %2274 = vmatpush2.msra.mxu0 0.0
    %2275 = vmatprep.subr.mxu0 0.0
    %2276 = vmatpush2.msra.mxu0 0.0
    %2277 = vmatprep.subr.mxu0 0.0
    %2278 = vmatpush2.msra.mxu0 0.0
    %2279 = vmatprep.subr.mxu0 0.0
    %2280 = vmatpush2.msra.mxu0 0.0
    %2281 = vmatprep.subr.mxu0 0.0
    %2282 = vmatpush2.msra.mxu0 0.0
    %2283 = vmatprep.subr.mxu0 0.0
    %2284 = vmatpush2.msra.mxu0 0.0
    %2285 = vmatprep.subr.mxu0 0.0
    %2286 = vmatpush2.msra.mxu0 0.0
    %2287 = vmatprep.subr.mxu0 0.0
    %2288 = vmatpush2.msra.mxu0 0.0
    %2289 = vmatprep.mubr.f32.mxu0 0.0
    %2290 = vmatmul.mubr.f32.gmra.mxu0 %v2223
    %v2291 = vpop.f32.mrf.mxu0
    %v2292 = vadd.f32 0.0, %v2291
    %v2293 = vpop.f32.mrf.mxu0
    %2294 = vdwg.mxu0
    %2295 = vrot.lane.b32.xlu0 %v1956, 112
    %v2296 = vpop.permute.xlu0 %2295
    %2297 = vrot.lane.b32.xlu0 %v1956, 80
    %v2298 = vpop.permute.xlu0 %2297
    %v2299 = vsel %vm189, %v2296, 0
    %v2301 = vsel %vm189, %v2298, 0
    %2303 = vmatprep.subr.mxu0 0.0
    %2304 = vmatpush1.xpose.msra.mxu0 0.0
    %2305 = vmatprep.subr.mxu0 0.0
    %2306 = vmatpush1.xpose.msra.mxu0 0.0
    %2307 = vmatprep.subr.mxu0 0.0
    %2308 = vmatpush1.xpose.msra.mxu0 0.0
    %2309 = vmatprep.subr.mxu0 0.0
    %2310 = vmatpush1.xpose.msra.mxu0 0.0
    %2311 = vmatprep.subr.mxu0 0.0
    %2312 = vmatpush1.xpose.msra.mxu0 0.0
    %2313 = vmatprep.subr.mxu0 0.0
    %2314 = vmatpush1.xpose.msra.mxu0 0.0
    %2315 = vmatprep.subr.mxu0 0.0
    %2316 = vmatpush1.xpose.msra.mxu0 0.0
    %2317 = vmatprep.subr.mxu0 0.0
    %2318 = vmatpush1.xpose.msra.mxu0 0.0
    %2319 = vmatprep.subr.mxu0 0.0
    %2320 = vmatpush1.xpose.msra.mxu0 0.0
    %2321 = vmatprep.subr.mxu0 0.0
    %2322 = vmatpush1.xpose.msra.mxu0 0.0
    %2323 = vmatprep.subr.mxu0 0.0
    %2324 = vmatpush1.xpose.msra.mxu0 0.0
    %2325 = vmatprep.subr.mxu0 0.0
    %2326 = vmatpush1.xpose.msra.mxu0 0.0
    %2327 = vmatprep.subr.mxu0 0.0
    %2328 = vmatpush1.xpose.msra.mxu0 0.0
    %2329 = vmatprep.subr.mxu0 0.0
    %2330 = vmatpush1.xpose.msra.mxu0 0.0
    %2331 = vmatprep.subr.mxu0 0.0
    %2332 = vmatpush1.xpose.msra.mxu0 0.0
    %2333 = vmatprep.subr.mxu0 0.0
    %2334 = vmatpush1.xpose.msra.mxu0 %v2301
    %2335 = vmatprep.subr.mxu0 0.0
    %2336 = vmatpush2.xpose.msra.mxu0 0.0
    %2337 = vmatprep.subr.mxu0 0.0
    %2338 = vmatpush2.xpose.msra.mxu0 0.0
    %2339 = vmatprep.subr.mxu0 0.0
    %2340 = vmatpush2.xpose.msra.mxu0 0.0
    %2341 = vmatprep.subr.mxu0 0.0
    %2342 = vmatpush2.xpose.msra.mxu0 0.0
    %2343 = vmatprep.subr.mxu0 0.0
    %2344 = vmatpush2.xpose.msra.mxu0 0.0
    %2345 = vmatprep.subr.mxu0 0.0
    %2346 = vmatpush2.xpose.msra.mxu0 0.0
    %2347 = vmatprep.subr.mxu0 0.0
    %2348 = vmatpush2.xpose.msra.mxu0 0.0
    %2349 = vmatprep.subr.mxu0 0.0
    %2350 = vmatpush2.xpose.msra.mxu0 0.0
    %2351 = vmatprep.subr.mxu0 0.0
    %2352 = vmatpush2.xpose.msra.mxu0 0.0
    %2353 = vmatprep.subr.mxu0 0.0
    %2354 = vmatpush2.xpose.msra.mxu0 0.0
    %2355 = vmatprep.subr.mxu0 0.0
    %2356 = vmatpush2.xpose.msra.mxu0 0.0
    %2357 = vmatprep.subr.mxu0 0.0
    %2358 = vmatpush2.xpose.msra.mxu0 0.0
    %2359 = vmatprep.subr.mxu0 0.0
    %2360 = vmatpush2.xpose.msra.mxu0 0.0
    %2361 = vmatprep.subr.mxu0 0.0
    %2362 = vmatpush2.xpose.msra.mxu0 0.0
    %2363 = vmatprep.subr.mxu0 0.0
    %2364 = vmatpush2.xpose.msra.mxu0 0.0
    %2365 = vmatprep.subr.mxu0 0.0
    %2366 = vmatpush2.xpose.msra.mxu0 0.0
    %2367 = vmatprep.mubr.f32.mxu0 0.0
    %2368 = vmatmul.mubr.f32.gmra.mxu0 %v2299
    %v2369 = vpop.f32.mrf.mxu0
    %v2370 = vadd.f32 0.0, %v2369
    %v2371 = vpop.f32.mrf.mxu0
    %2372 = vdwg.mxu0
    %v2373 = vmul.f32 %v2370, 0.35355338
    %v2374 = vadd.f32 %v2373, %v268
    %v2375 = vsel %vm189, %v2374, -inf
    %2376 = vmax.xlane.f32.xlu0 %v2375
    %v2377 = vpop.xlane.xlu0 %2376
    %v2378 = vsub.f32 %v2374, %v2377
    %v2379 = vmul.f32 %v2378, 1.442695
    %v2380 = vpow.pop %v2379
    %v2381 = vsel %vm189, %v2380, 0.0
    %2382 = vadd.xlane.f32.xlu0 %v2381
    %v2383 = vpop.xlane.xlu0 %2382
    %v2384 = vrcp.pop %v2383
    %v2385 = vmul.f32 %v2380, %v2384
    %2386 = vrot.lane.b32.xlu0 %v1956, 48
    %v2387 = vpop.permute.xlu0 %2386
    %v2390 = vsel %vm189, %v2385, 0
    %2392 = vmatprep.subr.mxu0 0.0
    %2393 = vmatpush1.msra.mxu0 0.0
    %2394 = vmatprep.subr.mxu0 0.0
    %2395 = vmatpush1.msra.mxu0 0.0
    %2396 = vmatprep.subr.mxu0 0.0
    %2397 = vmatpush1.msra.mxu0 0.0
    %2398 = vmatprep.subr.mxu0 0.0
    %2399 = vmatpush1.msra.mxu0 0.0
    %2400 = vmatprep.subr.mxu0 0.0
    %2401 = vmatpush1.msra.mxu0 0.0
    %2402 = vmatprep.subr.mxu0 0.0
    %2403 = vmatpush1.msra.mxu0 0.0
    %2404 = vmatprep.subr.mxu0 0.0
    %2405 = vmatpush1.msra.mxu0 0.0
    %2406 = vmatprep.subr.mxu0 0.0
    %2407 = vmatpush1.msra.mxu0 0.0
    %2408 = vmatprep.subr.mxu0 0.0
    %2409 = vmatpush1.msra.mxu0 0.0
    %2410 = vmatprep.subr.mxu0 0.0
    %2411 = vmatpush1.msra.mxu0 0.0
    %2412 = vmatprep.subr.mxu0 0.0
    %2413 = vmatpush1.msra.mxu0 0.0
    %2414 = vmatprep.subr.mxu0 0.0
    %2415 = vmatpush1.msra.mxu0 0.0
    %2416 = vmatprep.subr.mxu0 0.0
    %2417 = vmatpush1.msra.mxu0 0.0
    %2418 = vmatprep.subr.mxu0 0.0
    %2419 = vmatpush1.msra.mxu0 0.0
    %2420 = vmatprep.subr.mxu0 0.0
    %2421 = vmatpush1.msra.mxu0 0.0
    %2422 = vmatprep.subr.mxu0 0.0
    %2423 = vmatpush1.msra.mxu0 %v2387
    %2424 = vmatprep.subr.mxu0 0.0
    %2425 = vmatpush2.msra.mxu0 0.0
    %2426 = vmatprep.subr.mxu0 0.0
    %2427 = vmatpush2.msra.mxu0 0.0
    %2428 = vmatprep.subr.mxu0 0.0
    %2429 = vmatpush2.msra.mxu0 0.0
    %2430 = vmatprep.subr.mxu0 0.0
    %2431 = vmatpush2.msra.mxu0 0.0
    %2432 = vmatprep.subr.mxu0 0.0
    %2433 = vmatpush2.msra.mxu0 0.0
    %2434 = vmatprep.subr.mxu0 0.0
    %2435 = vmatpush2.msra.mxu0 0.0
    %2436 = vmatprep.subr.mxu0 0.0
    %2437 = vmatpush2.msra.mxu0 0.0
    %2438 = vmatprep.subr.mxu0 0.0
    %2439 = vmatpush2.msra.mxu0 0.0
    %2440 = vmatprep.subr.mxu0 0.0
    %2441 = vmatpush2.msra.mxu0 0.0
    %2442 = vmatprep.subr.mxu0 0.0
    %2443 = vmatpush2.msra.mxu0 0.0
    %2444 = vmatprep.subr.mxu0 0.0
    %2445 = vmatpush2.msra.mxu0 0.0
    %2446 = vmatprep.subr.mxu0 0.0
    %2447 = vmatpush2.msra.mxu0 0.0
    %2448 = vmatprep.subr.mxu0 0.0
    %2449 = vmatpush2.msra.mxu0 0.0
    %2450 = vmatprep.subr.mxu0 0.0
    %2451 = vmatpush2.msra.mxu0 0.0
    %2452 = vmatprep.subr.mxu0 0.0
    %2453 = vmatpush2.msra.mxu0 0.0
    %2454 = vmatprep.subr.mxu0 0.0
    %2455 = vmatpush2.msra.mxu0 0.0
    %2456 = vmatprep.mubr.f32.mxu0 0.0
    %2457 = vmatmul.mubr.f32.gmra.mxu0 %v2390
    %v2458 = vpop.f32.mrf.mxu0
    %v2459 = vadd.f32 0.0, %v2458
    %v2460 = vpop.f32.mrf.mxu0
    %2461 = vdwg.mxu0
    %2462 = vrot.lane.b32.xlu0 %v1956, 104
    %v2463 = vpop.permute.xlu0 %2462
    %2464 = vrot.lane.b32.xlu0 %v1956, 72
    %v2465 = vpop.permute.xlu0 %2464
    %v2466 = vsel %vm189, %v2463, 0
    %v2468 = vsel %vm189, %v2465, 0
    %2470 = vmatprep.subr.mxu0 0.0
    %2471 = vmatpush1.xpose.msra.mxu0 0.0
    %2472 = vmatprep.subr.mxu0 0.0
    %2473 = vmatpush1.xpose.msra.mxu0 0.0
    %2474 = vmatprep.subr.mxu0 0.0
    %2475 = vmatpush1.xpose.msra.mxu0 0.0
    %2476 = vmatprep.subr.mxu0 0.0
    %2477 = vmatpush1.xpose.msra.mxu0 0.0
    %2478 = vmatprep.subr.mxu0 0.0
    %2479 = vmatpush1.xpose.msra.mxu0 0.0
    %2480 = vmatprep.subr.mxu0 0.0
    %2481 = vmatpush1.xpose.msra.mxu0 0.0
    %2482 = vmatprep.subr.mxu0 0.0
    %2483 = vmatpush1.xpose.msra.mxu0 0.0
    %2484 = vmatprep.subr.mxu0 0.0
    %2485 = vmatpush1.xpose.msra.mxu0 0.0
    %2486 = vmatprep.subr.mxu0 0.0
    %2487 = vmatpush1.xpose.msra.mxu0 0.0
    %2488 = vmatprep.subr.mxu0 0.0
    %2489 = vmatpush1.xpose.msra.mxu0 0.0
    %2490 = vmatprep.subr.mxu0 0.0
    %2491 = vmatpush1.xpose.msra.mxu0 0.0
    %2492 = vmatprep.subr.mxu0 0.0
    %2493 = vmatpush1.xpose.msra.mxu0 0.0
    %2494 = vmatprep.subr.mxu0 0.0
    %2495 = vmatpush1.xpose.msra.mxu0 0.0
    %2496 = vmatprep.subr.mxu0 0.0
    %2497 = vmatpush1.xpose.msra.mxu0 0.0
    %2498 = vmatprep.subr.mxu0 0.0
    %2499 = vmatpush1.xpose.msra.mxu0 0.0
    %2500 = vmatprep.subr.mxu0 0.0
    %2501 = vmatpush1.xpose.msra.mxu0 %v2468
    %2502 = vmatprep.subr.mxu0 0.0
    %2503 = vmatpush2.xpose.msra.mxu0 0.0
    %2504 = vmatprep.subr.mxu0 0.0
    %2505 = vmatpush2.xpose.msra.mxu0 0.0
    %2506 = vmatprep.subr.mxu0 0.0
    %2507 = vmatpush2.xpose.msra.mxu0 0.0
    %2508 = vmatprep.subr.mxu0 0.0
    %2509 = vmatpush2.xpose.msra.mxu0 0.0
    %2510 = vmatprep.subr.mxu0 0.0
    %2511 = vmatpush2.xpose.msra.mxu0 0.0
    %2512 = vmatprep.subr.mxu0 0.0
    %2513 = vmatpush2.xpose.msra.mxu0 0.0
    %2514 = vmatprep.subr.mxu0 0.0
    %2515 = vmatpush2.xpose.msra.mxu0 0.0
    %2516 = vmatprep.subr.mxu0 0.0
    %2517 = vmatpush2.xpose.msra.mxu0 0.0
    %2518 = vmatprep.subr.mxu0 0.0
    %2519 = vmatpush2.xpose.msra.mxu0 0.0
    %2520 = vmatprep.subr.mxu0 0.0
    %2521 = vmatpush2.xpose.msra.mxu0 0.0
    %2522 = vmatprep.subr.mxu0 0.0
    %2523 = vmatpush2.xpose.msra.mxu0 0.0
    %2524 = vmatprep.subr.mxu0 0.0
    %2525 = vmatpush2.xpose.msra.mxu0 0.0
    %2526 = vmatprep.subr.mxu0 0.0
    %2527 = vmatpush2.xpose.msra.mxu0 0.0
    %2528 = vmatprep.subr.mxu0 0.0
    %2529 = vmatpush2.xpose.msra.mxu0 0.0
    %2530 = vmatprep.subr.mxu0 0.0
    %2531 = vmatpush2.xpose.msra.mxu0 0.0
    %2532 = vmatprep.subr.mxu0 0.0
    %2533 = vmatpush2.xpose.msra.mxu0 0.0
    %2534 = vmatprep.mubr.f32.mxu0 0.0
    %2535 = vmatmul.mubr.f32.gmra.mxu0 %v2466
    %v2536 = vpop.f32.mrf.mxu0
    %v2537 = vadd.f32 0.0, %v2536
    %v2538 = vpop.f32.mrf.mxu0
    %2539 = vdwg.mxu0
    %v2540 = vmul.f32 %v2537, 0.35355338
    %v2541 = vadd.f32 %v2540, %v268
    %v2542 = vsel %vm189, %v2541, -inf
    %2543 = vmax.xlane.f32.xlu0 %v2542
    %v2544 = vpop.xlane.xlu0 %2543
    %v2545 = vsub.f32 %v2541, %v2544
    %v2546 = vmul.f32 %v2545, 1.442695
    %v2547 = vpow.pop %v2546
    %v2548 = vsel %vm189, %v2547, 0.0
    %2549 = vadd.xlane.f32.xlu0 %v2548
    %v2550 = vpop.xlane.xlu0 %2549
    %v2551 = vrcp.pop %v2550
    %v2552 = vmul.f32 %v2547, %v2551
    %2553 = vrot.lane.b32.xlu0 %v1956, 40
    %v2554 = vpop.permute.xlu0 %2553
    %v2557 = vsel %vm189, %v2552, 0
    %2559 = vmatprep.subr.mxu0 0.0
    %2560 = vmatpush1.msra.mxu0 0.0
    %2561 = vmatprep.subr.mxu0 0.0
    %2562 = vmatpush1.msra.mxu0 0.0
    %2563 = vmatprep.subr.mxu0 0.0
    %2564 = vmatpush1.msra.mxu0 0.0
    %2565 = vmatprep.subr.mxu0 0.0
    %2566 = vmatpush1.msra.mxu0 0.0
    %2567 = vmatprep.subr.mxu0 0.0
    %2568 = vmatpush1.msra.mxu0 0.0
    %2569 = vmatprep.subr.mxu0 0.0
    %2570 = vmatpush1.msra.mxu0 0.0
    %2571 = vmatprep.subr.mxu0 0.0
    %2572 = vmatpush1.msra.mxu0 0.0
    %2573 = vmatprep.subr.mxu0 0.0
    %2574 = vmatpush1.msra.mxu0 0.0
    %2575 = vmatprep.subr.mxu0 0.0
    %2576 = vmatpush1.msra.mxu0 0.0
    %2577 = vmatprep.subr.mxu0 0.0
    %2578 = vmatpush1.msra.mxu0 0.0
    %2579 = vmatprep.subr.mxu0 0.0
    %2580 = vmatpush1.msra.mxu0 0.0
    %2581 = vmatprep.subr.mxu0 0.0
    %2582 = vmatpush1.msra.mxu0 0.0
    %2583 = vmatprep.subr.mxu0 0.0
    %2584 = vmatpush1.msra.mxu0 0.0
    %2585 = vmatprep.subr.mxu0 0.0
    %2586 = vmatpush1.msra.mxu0 0.0
    %2587 = vmatprep.subr.mxu0 0.0
    %2588 = vmatpush1.msra.mxu0 0.0
    %2589 = vmatprep.subr.mxu0 0.0
    %2590 = vmatpush1.msra.mxu0 %v2554
    %2591 = vmatprep.subr.mxu0 0.0
    %2592 = vmatpush2.msra.mxu0 0.0
    %2593 = vmatprep.subr.mxu0 0.0
    %2594 = vmatpush2.msra.mxu0 0.0
    %2595 = vmatprep.subr.mxu0 0.0
    %2596 = vmatpush2.msra.mxu0 0.0
    %2597 = vmatprep.subr.mxu0 0.0
    %2598 = vmatpush2.msra.mxu0 0.0
    %2599 = vmatprep.subr.mxu0 0.0
    %2600 = vmatpush2.msra.mxu0 0.0
    %2601 = vmatprep.subr.mxu0 0.0
    %2602 = vmatpush2.msra.mxu0 0.0
    %2603 = vmatprep.subr.mxu0 0.0
    %2604 = vmatpush2.msra.mxu0 0.0
    %2605 = vmatprep.subr.mxu0 0.0
    %2606 = vmatpush2.msra.mxu0 0.0
    %2607 = vmatprep.subr.mxu0 0.0
    %2608 = vmatpush2.msra.mxu0 0.0
    %2609 = vmatprep.subr.mxu0 0.0
    %2610 = vmatpush2.msra.mxu0 0.0
    %2611 = vmatprep.subr.mxu0 0.0
    %2612 = vmatpush2.msra.mxu0 0.0
    %2613 = vmatprep.subr.mxu0 0.0
    %2614 = vmatpush2.msra.mxu0 0.0
    %2615 = vmatprep.subr.mxu0 0.0
    %2616 = vmatpush2.msra.mxu0 0.0
    %2617 = vmatprep.subr.mxu0 0.0
    %2618 = vmatpush2.msra.mxu0 0.0
    %2619 = vmatprep.subr.mxu0 0.0
    %2620 = vmatpush2.msra.mxu0 0.0
    %2621 = vmatprep.subr.mxu0 0.0
    %2622 = vmatpush2.msra.mxu0 0.0
    %2623 = vmatprep.mubr.f32.mxu0 0.0
    %2624 = vmatmul.mubr.f32.gmra.mxu0 %v2557
    %v2625 = vpop.f32.mrf.mxu0
    %v2626 = vadd.f32 0.0, %v2625
    %v2627 = vpop.f32.mrf.mxu0
    %2628 = vdwg.mxu0
    %2630 = vrot.lane.b32.xlu0 %v2292, 8
    %v2631 = vpop.permute.xlu0 %2630
    %2634 = vrot.lane.b32.xlu0 %v2459, 16
    %v2635 = vpop.permute.xlu0 %2634
    %2638 = vrot.lane.b32.xlu0 %v2626, 24
    %v2639 = vpop.permute.xlu0 %2638
    %v2641 = vsel %vm189, %v2125, %v2631
    %v2642 = vsel %vm871, %v2641, %v2635
    %v2643 = vsel %vm873, %v2642, %v2639
    %2645 = vrot.lane.b32.xlu0 %v1959, 96
    %v2646 = vpop.permute.xlu0 %2645
    %v2647 = vsel %vm189, %v1959, 0
    %v2649 = vsel %vm189, %v2646, 0
    %2651 = vmatprep.subr.mxu0 0.0
    %2652 = vmatpush1.xpose.msra.mxu0 0.0
    %2653 = vmatprep.subr.mxu0 0.0
    %2654 = vmatpush1.xpose.msra.mxu0 0.0
    %2655 = vmatprep.subr.mxu0 0.0
    %2656 = vmatpush1.xpose.msra.mxu0 0.0
    %2657 = vmatprep.subr.mxu0 0.0
    %2658 = vmatpush1.xpose.msra.mxu0 0.0
    %2659 = vmatprep.subr.mxu0 0.0
    %2660 = vmatpush1.xpose.msra.mxu0 0.0
    %2661 = vmatprep.subr.mxu0 0.0
    %2662 = vmatpush1.xpose.msra.mxu0 0.0
    %2663 = vmatprep.subr.mxu0 0.0
    %2664 = vmatpush1.xpose.msra.mxu0 0.0
    %2665 = vmatprep.subr.mxu0 0.0
    %2666 = vmatpush1.xpose.msra.mxu0 0.0
    %2667 = vmatprep.subr.mxu0 0.0
    %2668 = vmatpush1.xpose.msra.mxu0 0.0
    %2669 = vmatprep.subr.mxu0 0.0
    %2670 = vmatpush1.xpose.msra.mxu0 0.0
    %2671 = vmatprep.subr.mxu0 0.0
    %2672 = vmatpush1.xpose.msra.mxu0 0.0
    %2673 = vmatprep.subr.mxu0 0.0
    %2674 = vmatpush1.xpose.msra.mxu0 0.0
    %2675 = vmatprep.subr.mxu0 0.0
    %2676 = vmatpush1.xpose.msra.mxu0 0.0
    %2677 = vmatprep.subr.mxu0 0.0
    %2678 = vmatpush1.xpose.msra.mxu0 0.0
    %2679 = vmatprep.subr.mxu0 0.0
    %2680 = vmatpush1.xpose.msra.mxu0 0.0
    %2681 = vmatprep.subr.mxu0 0.0
    %2682 = vmatpush1.xpose.msra.mxu0 %v2649
    %2683 = vmatprep.subr.mxu0 0.0
    %2684 = vmatpush2.xpose.msra.mxu0 0.0
    %2685 = vmatprep.subr.mxu0 0.0
    %2686 = vmatpush2.xpose.msra.mxu0 0.0
    %2687 = vmatprep.subr.mxu0 0.0
    %2688 = vmatpush2.xpose.msra.mxu0 0.0
    %2689 = vmatprep.subr.mxu0 0.0
    %2690 = vmatpush2.xpose.msra.mxu0 0.0
    %2691 = vmatprep.subr.mxu0 0.0
    %2692 = vmatpush2.xpose.msra.mxu0 0.0
    %2693 = vmatprep.subr.mxu0 0.0
    %2694 = vmatpush2.xpose.msra.mxu0 0.0
    %2695 = vmatprep.subr.mxu0 0.0
    %2696 = vmatpush2.xpose.msra.mxu0 0.0
    %2697 = vmatprep.subr.mxu0 0.0
    %2698 = vmatpush2.xpose.msra.mxu0 0.0
    %2699 = vmatprep.subr.mxu0 0.0
    %2700 = vmatpush2.xpose.msra.mxu0 0.0
    %2701 = vmatprep.subr.mxu0 0.0
    %2702 = vmatpush2.xpose.msra.mxu0 0.0
    %2703 = vmatprep.subr.mxu0 0.0
    %2704 = vmatpush2.xpose.msra.mxu0 0.0
    %2705 = vmatprep.subr.mxu0 0.0
    %2706 = vmatpush2.xpose.msra.mxu0 0.0
    %2707 = vmatprep.subr.mxu0 0.0
    %2708 = vmatpush2.xpose.msra.mxu0 0.0
    %2709 = vmatprep.subr.mxu0 0.0
    %2710 = vmatpush2.xpose.msra.mxu0 0.0
    %2711 = vmatprep.subr.mxu0 0.0
    %2712 = vmatpush2.xpose.msra.mxu0 0.0
    %2713 = vmatprep.subr.mxu0 0.0
    %2714 = vmatpush2.xpose.msra.mxu0 0.0
    %2715 = vmatprep.mubr.f32.mxu0 0.0
    %2716 = vmatmul.mubr.f32.gmra.mxu0 %v2647
    %v2717 = vpop.f32.mrf.mxu0
    %v2718 = vadd.f32 0.0, %v2717
    %v2719 = vpop.f32.mrf.mxu0
    %2720 = vdwg.mxu0
    %v2721 = vmul.f32 %v2718, 0.35355338
    %v2722 = vadd.f32 %v2721, %v956
    %v2723 = vsel %vm189, %v2722, -inf
    %2724 = vmax.xlane.f32.xlu0 %v2723
    %v2725 = vpop.xlane.xlu0 %2724
    %v2726 = vsub.f32 %v2722, %v2725
    %v2727 = vmul.f32 %v2726, 1.442695
    %v2728 = vpow.pop %v2727
    %v2729 = vsel %vm189, %v2728, 0.0
    %2730 = vadd.xlane.f32.xlu0 %v2729
    %v2731 = vpop.xlane.xlu0 %2730
    %v2732 = vrcp.pop %v2731
    %v2733 = vmul.f32 %v2728, %v2732
    %2734 = vrot.lane.b32.xlu0 %v1959, 64
    %v2735 = vpop.permute.xlu0 %2734
    %v2738 = vsel %vm189, %v2733, 0
    %2740 = vmatprep.subr.mxu0 0.0
    %2741 = vmatpush1.msra.mxu0 0.0
    %2742 = vmatprep.subr.mxu0 0.0
    %2743 = vmatpush1.msra.mxu0 0.0
    %2744 = vmatprep.subr.mxu0 0.0
    %2745 = vmatpush1.msra.mxu0 0.0
    %2746 = vmatprep.subr.mxu0 0.0
    %2747 = vmatpush1.msra.mxu0 0.0
    %2748 = vmatprep.subr.mxu0 0.0
    %2749 = vmatpush1.msra.mxu0 0.0
    %2750 = vmatprep.subr.mxu0 0.0
    %2751 = vmatpush1.msra.mxu0 0.0
    %2752 = vmatprep.subr.mxu0 0.0
    %2753 = vmatpush1.msra.mxu0 0.0
    %2754 = vmatprep.subr.mxu0 0.0
    %2755 = vmatpush1.msra.mxu0 0.0
    %2756 = vmatprep.subr.mxu0 0.0
    %2757 = vmatpush1.msra.mxu0 0.0
    %2758 = vmatprep.subr.mxu0 0.0
    %2759 = vmatpush1.msra.mxu0 0.0
    %2760 = vmatprep.subr.mxu0 0.0
    %2761 = vmatpush1.msra.mxu0 0.0
    %2762 = vmatprep.subr.mxu0 0.0
    %2763 = vmatpush1.msra.mxu0 0.0
    %2764 = vmatprep.subr.mxu0 0.0
    %2765 = vmatpush1.msra.mxu0 0.0
    %2766 = vmatprep.subr.mxu0 0.0
    %2767 = vmatpush1.msra.mxu0 0.0
    %2768 = vmatprep.subr.mxu0 0.0
    %2769 = vmatpush1.msra.mxu0 0.0
    %2770 = vmatprep.subr.mxu0 0.0
    %2771 = vmatpush1.msra.mxu0 %v2735
    %2772 = vmatprep.subr.mxu0 0.0
    %2773 = vmatpush2.msra.mxu0 0.0
    %2774 = vmatprep.subr.mxu0 0.0
    %2775 = vmatpush2.msra.mxu0 0.0
    %2776 = vmatprep.subr.mxu0 0.0
    %2777 = vmatpush2.msra.mxu0 0.0
    %2778 = vmatprep.subr.mxu0 0.0
    %2779 = vmatpush2.msra.mxu0 0.0
    %2780 = vmatprep.subr.mxu0 0.0
    %2781 = vmatpush2.msra.mxu0 0.0
    %2782 = vmatprep.subr.mxu0 0.0
    %2783 = vmatpush2.msra.mxu0 0.0
    %2784 = vmatprep.subr.mxu0 0.0
    %2785 = vmatpush2.msra.mxu0 0.0
    %2786 = vmatprep.subr.mxu0 0.0
    %2787 = vmatpush2.msra.mxu0 0.0
    %2788 = vmatprep.subr.mxu0 0.0
    %2789 = vmatpush2.msra.mxu0 0.0
    %2790 = vmatprep.subr.mxu0 0.0
    %2791 = vmatpush2.msra.mxu0 0.0
    %2792 = vmatprep.subr.mxu0 0.0
    %2793 = vmatpush2.msra.mxu0 0.0
    %2794 = vmatprep.subr.mxu0 0.0
    %2795 = vmatpush2.msra.mxu0 0.0
    %2796 = vmatprep.subr.mxu0 0.0
    %2797 = vmatpush2.msra.mxu0 0.0
    %2798 = vmatprep.subr.mxu0 0.0
    %2799 = vmatpush2.msra.mxu0 0.0
    %2800 = vmatprep.subr.mxu0 0.0
    %2801 = vmatpush2.msra.mxu0 0.0
    %2802 = vmatprep.subr.mxu0 0.0
    %2803 = vmatpush2.msra.mxu0 0.0
    %2804 = vmatprep.mubr.f32.mxu0 0.0
    %2805 = vmatmul.mubr.f32.gmra.mxu0 %v2738
    %v2806 = vpop.f32.mrf.mxu0
    %v2807 = vadd.f32 0.0, %v2806
    %v2808 = vpop.f32.mrf.mxu0
    %2809 = vdwg.mxu0
    %2810 = vrot.lane.b32.xlu0 %v1959, 120
    %v2811 = vpop.permute.xlu0 %2810
    %2812 = vrot.lane.b32.xlu0 %v1959, 88
    %v2813 = vpop.permute.xlu0 %2812
    %v2814 = vsel %vm189, %v2811, 0
    %v2816 = vsel %vm189, %v2813, 0
    %2818 = vmatprep.subr.mxu0 0.0
    %2819 = vmatpush1.xpose.msra.mxu0 0.0
    %2820 = vmatprep.subr.mxu0 0.0
    %2821 = vmatpush1.xpose.msra.mxu0 0.0
    %2822 = vmatprep.subr.mxu0 0.0
    %2823 = vmatpush1.xpose.msra.mxu0 0.0
    %2824 = vmatprep.subr.mxu0 0.0
    %2825 = vmatpush1.xpose.msra.mxu0 0.0
    %2826 = vmatprep.subr.mxu0 0.0
    %2827 = vmatpush1.xpose.msra.mxu0 0.0
    %2828 = vmatprep.subr.mxu0 0.0
    %2829 = vmatpush1.xpose.msra.mxu0 0.0
    %2830 = vmatprep.subr.mxu0 0.0
    %2831 = vmatpush1.xpose.msra.mxu0 0.0
    %2832 = vmatprep.subr.mxu0 0.0
    %2833 = vmatpush1.xpose.msra.mxu0 0.0
    %2834 = vmatprep.subr.mxu0 0.0
    %2835 = vmatpush1.xpose.msra.mxu0 0.0
    %2836 = vmatprep.subr.mxu0 0.0
    %2837 = vmatpush1.xpose.msra.mxu0 0.0
    %2838 = vmatprep.subr.mxu0 0.0
    %2839 = vmatpush1.xpose.msra.mxu0 0.0
    %2840 = vmatprep.subr.mxu0 0.0
    %2841 = vmatpush1.xpose.msra.mxu0 0.0
    %2842 = vmatprep.subr.mxu0 0.0
    %2843 = vmatpush1.xpose.msra.mxu0 0.0
    %2844 = vmatprep.subr.mxu0 0.0
    %2845 = vmatpush1.xpose.msra.mxu0 0.0
    %2846 = vmatprep.subr.mxu0 0.0
    %2847 = vmatpush1.xpose.msra.mxu0 0.0
    %2848 = vmatprep.subr.mxu0 0.0
    %2849 = vmatpush1.xpose.msra.mxu0 %v2816
    %2850 = vmatprep.subr.mxu0 0.0
    %2851 = vmatpush2.xpose.msra.mxu0 0.0
    %2852 = vmatprep.subr.mxu0 0.0
    %2853 = vmatpush2.xpose.msra.mxu0 0.0
    %2854 = vmatprep.subr.mxu0 0.0
    %2855 = vmatpush2.xpose.msra.mxu0 0.0
    %2856 = vmatprep.subr.mxu0 0.0
    %2857 = vmatpush2.xpose.msra.mxu0 0.0
    %2858 = vmatprep.subr.mxu0 0.0
    %2859 = vmatpush2.xpose.msra.mxu0 0.0
    %2860 = vmatprep.subr.mxu0 0.0
    %2861 = vmatpush2.xpose.msra.mxu0 0.0
    %2862 = vmatprep.subr.mxu0 0.0
    %2863 = vmatpush2.xpose.msra.mxu0 0.0
    %2864 = vmatprep.subr.mxu0 0.0
    %2865 = vmatpush2.xpose.msra.mxu0 0.0
    %2866 = vmatprep.subr.mxu0 0.0
    %2867 = vmatpush2.xpose.msra.mxu0 0.0
    %2868 = vmatprep.subr.mxu0 0.0
    %2869 = vmatpush2.xpose.msra.mxu0 0.0
    %2870 = vmatprep.subr.mxu0 0.0
    %2871 = vmatpush2.xpose.msra.mxu0 0.0
    %2872 = vmatprep.subr.mxu0 0.0
    %2873 = vmatpush2.xpose.msra.mxu0 0.0
    %2874 = vmatprep.subr.mxu0 0.0
    %2875 = vmatpush2.xpose.msra.mxu0 0.0
    %2876 = vmatprep.subr.mxu0 0.0
    %2877 = vmatpush2.xpose.msra.mxu0 0.0
    %2878 = vmatprep.subr.mxu0 0.0
    %2879 = vmatpush2.xpose.msra.mxu0 0.0
    %2880 = vmatprep.subr.mxu0 0.0
    %2881 = vmatpush2.xpose.msra.mxu0 0.0
    %2882 = vmatprep.mubr.f32.mxu0 0.0
    %2883 = vmatmul.mubr.f32.gmra.mxu0 %v2814
    %v2884 = vpop.f32.mrf.mxu0
    %v2885 = vadd.f32 0.0, %v2884
    %v2886 = vpop.f32.mrf.mxu0
    %2887 = vdwg.mxu0
    %v2888 = vmul.f32 %v2885, 0.35355338
    %v2889 = vadd.f32 %v2888, %v956
    %v2890 = vsel %vm189, %v2889, -inf
    %2891 = vmax.xlane.f32.xlu0 %v2890
    %v2892 = vpop.xlane.xlu0 %2891
    %v2893 = vsub.f32 %v2889, %v2892
    %v2894 = vmul.f32 %v2893, 1.442695
    %v2895 = vpow.pop %v2894
    %v2896 = vsel %vm189, %v2895, 0.0
    %2897 = vadd.xlane.f32.xlu0 %v2896
    %v2898 = vpop.xlane.xlu0 %2897
    %v2899 = vrcp.pop %v2898
    %v2900 = vmul.f32 %v2895, %v2899
    %2901 = vrot.lane.b32.xlu0 %v1959, 56
    %v2902 = vpop.permute.xlu0 %2901
    %v2905 = vsel %vm189, %v2900, 0
    %2907 = vmatprep.subr.mxu0 0.0
    %2908 = vmatpush1.msra.mxu0 0.0
    %2909 = vmatprep.subr.mxu0 0.0
    %2910 = vmatpush1.msra.mxu0 0.0
    %2911 = vmatprep.subr.mxu0 0.0
    %2912 = vmatpush1.msra.mxu0 0.0
    %2913 = vmatprep.subr.mxu0 0.0
    %2914 = vmatpush1.msra.mxu0 0.0
    %2915 = vmatprep.subr.mxu0 0.0
    %2916 = vmatpush1.msra.mxu0 0.0
    %2917 = vmatprep.subr.mxu0 0.0
    %2918 = vmatpush1.msra.mxu0 0.0
    %2919 = vmatprep.subr.mxu0 0.0
    %2920 = vmatpush1.msra.mxu0 0.0
    %2921 = vmatprep.subr.mxu0 0.0
    %2922 = vmatpush1.msra.mxu0 0.0
    %2923 = vmatprep.subr.mxu0 0.0
    %2924 = vmatpush1.msra.mxu0 0.0
    %2925 = vmatprep.subr.mxu0 0.0
    %2926 = vmatpush1.msra.mxu0 0.0
    %2927 = vmatprep.subr.mxu0 0.0
    %2928 = vmatpush1.msra.mxu0 0.0
    %2929 = vmatprep.subr.mxu0 0.0
    %2930 = vmatpush1.msra.mxu0 0.0
    %2931 = vmatprep.subr.mxu0 0.0
    %2932 = vmatpush1.msra.mxu0 0.0
    %2933 = vmatprep.subr.mxu0 0.0
    %2934 = vmatpush1.msra.mxu0 0.0
    %2935 = vmatprep.subr.mxu0 0.0
    %2936 = vmatpush1.msra.mxu0 0.0
    %2937 = vmatprep.subr.mxu0 0.0
    %2938 = vmatpush1.msra.mxu0 %v2902
    %2939 = vmatprep.subr.mxu0 0.0
    %2940 = vmatpush2.msra.mxu0 0.0
    %2941 = vmatprep.subr.mxu0 0.0
    %2942 = vmatpush2.msra.mxu0 0.0
    %2943 = vmatprep.subr.mxu0 0.0
    %2944 = vmatpush2.msra.mxu0 0.0
    %2945 = vmatprep.subr.mxu0 0.0
    %2946 = vmatpush2.msra.mxu0 0.0
    %2947 = vmatprep.subr.mxu0 0.0
    %2948 = vmatpush2.msra.mxu0 0.0
    %2949 = vmatprep.subr.mxu0 0.0
    %2950 = vmatpush2.msra.mxu0 0.0
    %2951 = vmatprep.subr.mxu0 0.0
    %2952 = vmatpush2.msra.mxu0 0.0
    %2953 = vmatprep.subr.mxu0 0.0
    %2954 = vmatpush2.msra.mxu0 0.0
    %2955 = vmatprep.subr.mxu0 0.0
    %2956 = vmatpush2.msra.mxu0 0.0
    %2957 = vmatprep.subr.mxu0 0.0
    %2958 = vmatpush2.msra.mxu0 0.0
    %2959 = vmatprep.subr.mxu0 0.0
    %2960 = vmatpush2.msra.mxu0 0.0
    %2961 = vmatprep.subr.mxu0 0.0
    %2962 = vmatpush2.msra.mxu0 0.0
    %2963 = vmatprep.subr.mxu0 0.0
    %2964 = vmatpush2.msra.mxu0 0.0
    %2965 = vmatprep.subr.mxu0 0.0
    %2966 = vmatpush2.msra.mxu0 0.0
    %2967 = vmatprep.subr.mxu0 0.0
    %2968 = vmatpush2.msra.mxu0 0.0
    %2969 = vmatprep.subr.mxu0 0.0
    %2970 = vmatpush2.msra.mxu0 0.0
    %2971 = vmatprep.mubr.f32.mxu0 0.0
    %2972 = vmatmul.mubr.f32.gmra.mxu0 %v2905
    %v2973 = vpop.f32.mrf.mxu0
    %v2974 = vadd.f32 0.0, %v2973
    %v2975 = vpop.f32.mrf.mxu0
    %2976 = vdwg.mxu0
    %2977 = vrot.lane.b32.xlu0 %v1959, 112
    %v2978 = vpop.permute.xlu0 %2977
    %2979 = vrot.lane.b32.xlu0 %v1959, 80
    %v2980 = vpop.permute.xlu0 %2979
    %v2981 = vsel %vm189, %v2978, 0
    %v2983 = vsel %vm189, %v2980, 0
    %2985 = vmatprep.subr.mxu0 0.0
    %2986 = vmatpush1.xpose.msra.mxu0 0.0
    %2987 = vmatprep.subr.mxu0 0.0
    %2988 = vmatpush1.xpose.msra.mxu0 0.0
    %2989 = vmatprep.subr.mxu0 0.0
    %2990 = vmatpush1.xpose.msra.mxu0 0.0
    %2991 = vmatprep.subr.mxu0 0.0
    %2992 = vmatpush1.xpose.msra.mxu0 0.0
    %2993 = vmatprep.subr.mxu0 0.0
    %2994 = vmatpush1.xpose.msra.mxu0 0.0
    %2995 = vmatprep.subr.mxu0 0.0
    %2996 = vmatpush1.xpose.msra.mxu0 0.0
    %2997 = vmatprep.subr.mxu0 0.0
    %2998 = vmatpush1.xpose.msra.mxu0 0.0
    %2999 = vmatprep.subr.mxu0 0.0
    %3000 = vmatpush1.xpose.msra.mxu0 0.0
    %3001 = vmatprep.subr.mxu0 0.0
    %3002 = vmatpush1.xpose.msra.mxu0 0.0
    %3003 = vmatprep.subr.mxu0 0.0
    %3004 = vmatpush1.xpose.msra.mxu0 0.0
    %3005 = vmatprep.subr.mxu0 0.0
    %3006 = vmatpush1.xpose.msra.mxu0 0.0
    %3007 = vmatprep.subr.mxu0 0.0
    %3008 = vmatpush1.xpose.msra.mxu0 0.0
    %3009 = vmatprep.subr.mxu0 0.0
    %3010 = vmatpush1.xpose.msra.mxu0 0.0
    %3011 = vmatprep.subr.mxu0 0.0
    %3012 = vmatpush1.xpose.msra.mxu0 0.0
    %3013 = vmatprep.subr.mxu0 0.0
    %3014 = vmatpush1.xpose.msra.mxu0 0.0
    %3015 = vmatprep.subr.mxu0 0.0
    %3016 = vmatpush1.xpose.msra.mxu0 %v2983
    %3017 = vmatprep.subr.mxu0 0.0
    %3018 = vmatpush2.xpose.msra.mxu0 0.0
    %3019 = vmatprep.subr.mxu0 0.0
    %3020 = vmatpush2.xpose.msra.mxu0 0.0
    %3021 = vmatprep.subr.mxu0 0.0
    %3022 = vmatpush2.xpose.msra.mxu0 0.0
    %3023 = vmatprep.subr.mxu0 0.0
    %3024 = vmatpush2.xpose.msra.mxu0 0.0
    %3025 = vmatprep.subr.mxu0 0.0
    %3026 = vmatpush2.xpose.msra.mxu0 0.0
    %3027 = vmatprep.subr.mxu0 0.0
    %3028 = vmatpush2.xpose.msra.mxu0 0.0
    %3029 = vmatprep.subr.mxu0 0.0
    %3030 = vmatpush2.xpose.msra.mxu0 0.0
    %3031 = vmatprep.subr.mxu0 0.0
    %3032 = vmatpush2.xpose.msra.mxu0 0.0
    %3033 = vmatprep.subr.mxu0 0.0
    %3034 = vmatpush2.xpose.msra.mxu0 0.0
    %3035 = vmatprep.subr.mxu0 0.0
    %3036 = vmatpush2.xpose.msra.mxu0 0.0
    %3037 = vmatprep.subr.mxu0 0.0
    %3038 = vmatpush2.xpose.msra.mxu0 0.0
    %3039 = vmatprep.subr.mxu0 0.0
    %3040 = vmatpush2.xpose.msra.mxu0 0.0
    %3041 = vmatprep.subr.mxu0 0.0
    %3042 = vmatpush2.xpose.msra.mxu0 0.0
    %3043 = vmatprep.subr.mxu0 0.0
    %3044 = vmatpush2.xpose.msra.mxu0 0.0
    %3045 = vmatprep.subr.mxu0 0.0
    %3046 = vmatpush2.xpose.msra.mxu0 0.0
    %3047 = vmatprep.subr.mxu0 0.0
    %3048 = vmatpush2.xpose.msra.mxu0 0.0
    %3049 = vmatprep.mubr.f32.mxu0 0.0
    %3050 = vmatmul.mubr.f32.gmra.mxu0 %v2981
    %v3051 = vpop.f32.mrf.mxu0
    %v3052 = vadd.f32 0.0, %v3051
    %v3053 = vpop.f32.mrf.mxu0
    %3054 = vdwg.mxu0
    %v3055 = vmul.f32 %v3052, 0.35355338
    %v3056 = vadd.f32 %v3055, %v956
    %v3057 = vsel %vm189, %v3056, -inf
    %3058 = vmax.xlane.f32.xlu0 %v3057
    %v3059 = vpop.xlane.xlu0 %3058
    %v3060 = vsub.f32 %v3056, %v3059
    %v3061 = vmul.f32 %v3060, 1.442695
    %v3062 = vpow.pop %v3061
    %v3063 = vsel %vm189, %v3062, 0.0
    %3064 = vadd.xlane.f32.xlu0 %v3063
    %v3065 = vpop.xlane.xlu0 %3064
    %v3066 = vrcp.pop %v3065
    %v3067 = vmul.f32 %v3062, %v3066
    %3068 = vrot.lane.b32.xlu0 %v1959, 48
    %v3069 = vpop.permute.xlu0 %3068
    %v3072 = vsel %vm189, %v3067, 0
    %3074 = vmatprep.subr.mxu0 0.0
    %3075 = vmatpush1.msra.mxu0 0.0
    %3076 = vmatprep.subr.mxu0 0.0
    %3077 = vmatpush1.msra.mxu0 0.0
    %3078 = vmatprep.subr.mxu0 0.0
    %3079 = vmatpush1.msra.mxu0 0.0
    %3080 = vmatprep.subr.mxu0 0.0
    %3081 = vmatpush1.msra.mxu0 0.0
    %3082 = vmatprep.subr.mxu0 0.0
    %3083 = vmatpush1.msra.mxu0 0.0
    %3084 = vmatprep.subr.mxu0 0.0
    %3085 = vmatpush1.msra.mxu0 0.0
    %3086 = vmatprep.subr.mxu0 0.0
    %3087 = vmatpush1.msra.mxu0 0.0
    %3088 = vmatprep.subr.mxu0 0.0
    %3089 = vmatpush1.msra.mxu0 0.0
    %3090 = vmatprep.subr.mxu0 0.0
    %3091 = vmatpush1.msra.mxu0 0.0
    %3092 = vmatprep.subr.mxu0 0.0
    %3093 = vmatpush1.msra.mxu0 0.0
    %3094 = vmatprep.subr.mxu0 0.0
    %3095 = vmatpush1.msra.mxu0 0.0
    %3096 = vmatprep.subr.mxu0 0.0
    %3097 = vmatpush1.msra.mxu0 0.0
    %3098 = vmatprep.subr.mxu0 0.0
    %3099 = vmatpush1.msra.mxu0 0.0
    %3100 = vmatprep.subr.mxu0 0.0
    %3101 = vmatpush1.msra.mxu0 0.0
    %3102 = vmatprep.subr.mxu0 0.0
    %3103 = vmatpush1.msra.mxu0 0.0
    %3104 = vmatprep.subr.mxu0 0.0
    %3105 = vmatpush1.msra.mxu0 %v3069
    %3106 = vmatprep.subr.mxu0 0.0
    %3107 = vmatpush2.msra.mxu0 0.0
    %3108 = vmatprep.subr.mxu0 0.0
    %3109 = vmatpush2.msra.mxu0 0.0
    %3110 = vmatprep.subr.mxu0 0.0
    %3111 = vmatpush2.msra.mxu0 0.0
    %3112 = vmatprep.subr.mxu0 0.0
    %3113 = vmatpush2.msra.mxu0 0.0
    %3114 = vmatprep.subr.mxu0 0.0
    %3115 = vmatpush2.msra.mxu0 0.0
    %3116 = vmatprep.subr.mxu0 0.0
    %3117 = vmatpush2.msra.mxu0 0.0
    %3118 = vmatprep.subr.mxu0 0.0
    %3119 = vmatpush2.msra.mxu0 0.0
    %3120 = vmatprep.subr.mxu0 0.0
    %3121 = vmatpush2.msra.mxu0 0.0
    %3122 = vmatprep.subr.mxu0 0.0
    %3123 = vmatpush2.msra.mxu0 0.0
    %3124 = vmatprep.subr.mxu0 0.0
    %3125 = vmatpush2.msra.mxu0 0.0
    %3126 = vmatprep.subr.mxu0 0.0
    %3127 = vmatpush2.msra.mxu0 0.0
    %3128 = vmatprep.subr.mxu0 0.0
    %3129 = vmatpush2.msra.mxu0 0.0
    %3130 = vmatprep.subr.mxu0 0.0
    %3131 = vmatpush2.msra.mxu0 0.0
    %3132 = vmatprep.subr.mxu0 0.0
    %3133 = vmatpush2.msra.mxu0 0.0
    %3134 = vmatprep.subr.mxu0 0.0
    %3135 = vmatpush2.msra.mxu0 0.0
    %3136 = vmatprep.subr.mxu0 0.0
    %3137 = vmatpush2.msra.mxu0 0.0
    %3138 = vmatprep.mubr.f32.mxu0 0.0
    %3139 = vmatmul.mubr.f32.gmra.mxu0 %v3072
    %v3140 = vpop.f32.mrf.mxu0
    %v3141 = vadd.f32 0.0, %v3140
    %v3142 = vpop.f32.mrf.mxu0
    %3143 = vdwg.mxu0
    %3144 = vrot.lane.b32.xlu0 %v1959, 104
    %v3145 = vpop.permute.xlu0 %3144
    %3146 = vrot.lane.b32.xlu0 %v1959, 72
    %v3147 = vpop.permute.xlu0 %3146
    %v3148 = vsel %vm189, %v3145, 0
    %v3150 = vsel %vm189, %v3147, 0
    %3152 = vmatprep.subr.mxu0 0.0
    %3153 = vmatpush1.xpose.msra.mxu0 0.0
    %3154 = vmatprep.subr.mxu0 0.0
    %3155 = vmatpush1.xpose.msra.mxu0 0.0
    %3156 = vmatprep.subr.mxu0 0.0
    %3157 = vmatpush1.xpose.msra.mxu0 0.0
    %3158 = vmatprep.subr.mxu0 0.0
    %3159 = vmatpush1.xpose.msra.mxu0 0.0
    %3160 = vmatprep.subr.mxu0 0.0
    %3161 = vmatpush1.xpose.msra.mxu0 0.0
    %3162 = vmatprep.subr.mxu0 0.0
    %3163 = vmatpush1.xpose.msra.mxu0 0.0
    %3164 = vmatprep.subr.mxu0 0.0
    %3165 = vmatpush1.xpose.msra.mxu0 0.0
    %3166 = vmatprep.subr.mxu0 0.0
    %3167 = vmatpush1.xpose.msra.mxu0 0.0
    %3168 = vmatprep.subr.mxu0 0.0
    %3169 = vmatpush1.xpose.msra.mxu0 0.0
    %3170 = vmatprep.subr.mxu0 0.0
    %3171 = vmatpush1.xpose.msra.mxu0 0.0
    %3172 = vmatprep.subr.mxu0 0.0
    %3173 = vmatpush1.xpose.msra.mxu0 0.0
    %3174 = vmatprep.subr.mxu0 0.0
    %3175 = vmatpush1.xpose.msra.mxu0 0.0
    %3176 = vmatprep.subr.mxu0 0.0
    %3177 = vmatpush1.xpose.msra.mxu0 0.0
    %3178 = vmatprep.subr.mxu0 0.0
    %3179 = vmatpush1.xpose.msra.mxu0 0.0
    %3180 = vmatprep.subr.mxu0 0.0
    %3181 = vmatpush1.xpose.msra.mxu0 0.0
    %3182 = vmatprep.subr.mxu0 0.0
    %3183 = vmatpush1.xpose.msra.mxu0 %v3150
    %3184 = vmatprep.subr.mxu0 0.0
    %3185 = vmatpush2.xpose.msra.mxu0 0.0
    %3186 = vmatprep.subr.mxu0 0.0
    %3187 = vmatpush2.xpose.msra.mxu0 0.0
    %3188 = vmatprep.subr.mxu0 0.0
    %3189 = vmatpush2.xpose.msra.mxu0 0.0
    %3190 = vmatprep.subr.mxu0 0.0
    %3191 = vmatpush2.xpose.msra.mxu0 0.0
    %3192 = vmatprep.subr.mxu0 0.0
    %3193 = vmatpush2.xpose.msra.mxu0 0.0
    %3194 = vmatprep.subr.mxu0 0.0
    %3195 = vmatpush2.xpose.msra.mxu0 0.0
    %3196 = vmatprep.subr.mxu0 0.0
    %3197 = vmatpush2.xpose.msra.mxu0 0.0
    %3198 = vmatprep.subr.mxu0 0.0
    %3199 = vmatpush2.xpose.msra.mxu0 0.0
    %3200 = vmatprep.subr.mxu0 0.0
    %3201 = vmatpush2.xpose.msra.mxu0 0.0
    %3202 = vmatprep.subr.mxu0 0.0
    %3203 = vmatpush2.xpose.msra.mxu0 0.0
    %3204 = vmatprep.subr.mxu0 0.0
    %3205 = vmatpush2.xpose.msra.mxu0 0.0
    %3206 = vmatprep.subr.mxu0 0.0
    %3207 = vmatpush2.xpose.msra.mxu0 0.0
    %3208 = vmatprep.subr.mxu0 0.0
    %3209 = vmatpush2.xpose.msra.mxu0 0.0
    %3210 = vmatprep.subr.mxu0 0.0
    %3211 = vmatpush2.xpose.msra.mxu0 0.0
    %3212 = vmatprep.subr.mxu0 0.0
    %3213 = vmatpush2.xpose.msra.mxu0 0.0
    %3214 = vmatprep.subr.mxu0 0.0
    %3215 = vmatpush2.xpose.msra.mxu0 0.0
    %3216 = vmatprep.mubr.f32.mxu0 0.0
    %3217 = vmatmul.mubr.f32.gmra.mxu0 %v3148
    %v3218 = vpop.f32.mrf.mxu0
    %v3219 = vadd.f32 0.0, %v3218
    %v3220 = vpop.f32.mrf.mxu0
    %3221 = vdwg.mxu0
    %v3222 = vmul.f32 %v3219, 0.35355338
    %v3223 = vadd.f32 %v3222, %v956
    %v3224 = vsel %vm189, %v3223, -inf
    %3225 = vmax.xlane.f32.xlu0 %v3224
    %v3226 = vpop.xlane.xlu0 %3225
    %v3227 = vsub.f32 %v3223, %v3226
    %v3228 = vmul.f32 %v3227, 1.442695
    %v3229 = vpow.pop %v3228
    %v3230 = vsel %vm189, %v3229, 0.0
    %3231 = vadd.xlane.f32.xlu0 %v3230
    %v3232 = vpop.xlane.xlu0 %3231
    %v3233 = vrcp.pop %v3232
    %v3234 = vmul.f32 %v3229, %v3233
    %3235 = vrot.lane.b32.xlu0 %v1959, 40
    %v3236 = vpop.permute.xlu0 %3235
    %v3239 = vsel %vm189, %v3234, 0
    %3241 = vmatprep.subr.mxu0 0.0
    %3242 = vmatpush1.msra.mxu0 0.0
    %3243 = vmatprep.subr.mxu0 0.0
    %3244 = vmatpush1.msra.mxu0 0.0
    %3245 = vmatprep.subr.mxu0 0.0
    %3246 = vmatpush1.msra.mxu0 0.0
    %3247 = vmatprep.subr.mxu0 0.0
    %3248 = vmatpush1.msra.mxu0 0.0
    %3249 = vmatprep.subr.mxu0 0.0
    %3250 = vmatpush1.msra.mxu0 0.0
    %3251 = vmatprep.subr.mxu0 0.0
    %3252 = vmatpush1.msra.mxu0 0.0
    %3253 = vmatprep.subr.mxu0 0.0
    %3254 = vmatpush1.msra.mxu0 0.0
    %3255 = vmatprep.subr.mxu0 0.0
    %3256 = vmatpush1.msra.mxu0 0.0
    %3257 = vmatprep.subr.mxu0 0.0
    %3258 = vmatpush1.msra.mxu0 0.0
    %3259 = vmatprep.subr.mxu0 0.0
    %3260 = vmatpush1.msra.mxu0 0.0
    %3261 = vmatprep.subr.mxu0 0.0
    %3262 = vmatpush1.msra.mxu0 0.0
    %3263 = vmatprep.subr.mxu0 0.0
    %3264 = vmatpush1.msra.mxu0 0.0
    %3265 = vmatprep.subr.mxu0 0.0
    %3266 = vmatpush1.msra.mxu0 0.0
    %3267 = vmatprep.subr.mxu0 0.0
    %3268 = vmatpush1.msra.mxu0 0.0
    %3269 = vmatprep.subr.mxu0 0.0
    %3270 = vmatpush1.msra.mxu0 0.0
    %3271 = vmatprep.subr.mxu0 0.0
    %3272 = vmatpush1.msra.mxu0 %v3236
    %3273 = vmatprep.subr.mxu0 0.0
    %3274 = vmatpush2.msra.mxu0 0.0
    %3275 = vmatprep.subr.mxu0 0.0
    %3276 = vmatpush2.msra.mxu0 0.0
    %3277 = vmatprep.subr.mxu0 0.0
    %3278 = vmatpush2.msra.mxu0 0.0
    %3279 = vmatprep.subr.mxu0 0.0
    %3280 = vmatpush2.msra.mxu0 0.0
    %3281 = vmatprep.subr.mxu0 0.0
    %3282 = vmatpush2.msra.mxu0 0.0
    %3283 = vmatprep.subr.mxu0 0.0
    %3284 = vmatpush2.msra.mxu0 0.0
    %3285 = vmatprep.subr.mxu0 0.0
    %3286 = vmatpush2.msra.mxu0 0.0
    %3287 = vmatprep.subr.mxu0 0.0
    %3288 = vmatpush2.msra.mxu0 0.0
    %3289 = vmatprep.subr.mxu0 0.0
    %3290 = vmatpush2.msra.mxu0 0.0
    %3291 = vmatprep.subr.mxu0 0.0
    %3292 = vmatpush2.msra.mxu0 0.0
    %3293 = vmatprep.subr.mxu0 0.0
    %3294 = vmatpush2.msra.mxu0 0.0
    %3295 = vmatprep.subr.mxu0 0.0
    %3296 = vmatpush2.msra.mxu0 0.0
    %3297 = vmatprep.subr.mxu0 0.0
    %3298 = vmatpush2.msra.mxu0 0.0
    %3299 = vmatprep.subr.mxu0 0.0
    %3300 = vmatpush2.msra.mxu0 0.0
    %3301 = vmatprep.subr.mxu0 0.0
    %3302 = vmatpush2.msra.mxu0 0.0
    %3303 = vmatprep.subr.mxu0 0.0
    %3304 = vmatpush2.msra.mxu0 0.0
    %3305 = vmatprep.mubr.f32.mxu0 0.0
    %3306 = vmatmul.mubr.f32.gmra.mxu0 %v3239
    %v3307 = vpop.f32.mrf.mxu0
    %v3308 = vadd.f32 0.0, %v3307
    %v3309 = vpop.f32.mrf.mxu0
    %3310 = vdwg.mxu0
    %3312 = vrot.lane.b32.xlu0 %v2974, 8
    %v3313 = vpop.permute.xlu0 %3312
    %3316 = vrot.lane.b32.xlu0 %v3141, 16
    %v3317 = vpop.permute.xlu0 %3316
    %3320 = vrot.lane.b32.xlu0 %v3308, 24
    %v3321 = vpop.permute.xlu0 %3320
    %v3323 = vsel %vm189, %v2807, %v3313
    %v3324 = vsel %vm871, %v3323, %v3317
    %v3325 = vsel %vm873, %v3324, %v3321
    %s3326 = scalar_lea.vmem %s6, 16
    %v3327 = vld [vmem:[%s3326] sm:$0xf]
    %v3328 = vld [vmem:[%s3326 + $0x4] sm:$0xf]
    %v3329 = vld [vmem:[%s3326 + $0x8] sm:$0xf]
    %v3330 = vld [vmem:[%s3326 + $0xc] sm:$0xf]
    %v3331 = vpack.c.bf16 %v3325, %v2643
    %s3332 = scalar_lea.vmem %s7, 1
    %v3333 = vld [vmem:[%s3332] sm:$0x1]
    %v3335 = vlaneseq
    %v3336 = vshrl.u32 %v3335, 7
    %v3337 = vsub.s32 0, %v3336
    %v3338 = vrot.slane %v3333, %v3337
    %v3344 = vunpack.c.l.b16 %v3327
    %v3345 = vunpack.c.l.b16 %v3328
    %v3346 = vunpack.c.l.b16 %v3329
    %v3347 = vunpack.c.l.b16 %v3330
    %v3348 = vpack.c.b16 %v3345, %v3344
    %v3349 = vpack.c.b16 %v3347, %v3346
    %v3353 = vsel %vm74, %v3331, 0
    %3355 = vmatprep.subr.bf16.mxu0 0
    %3356 = vmatpush1.bf16.msra.mxu0 0
    %3357 = vmatprep.subr.bf16.mxu0 0
    %3358 = vmatpush1.bf16.msra.mxu0 0
    %3359 = vmatprep.subr.bf16.mxu0 0
    %3360 = vmatpush1.bf16.msra.mxu0 0
    %3361 = vmatprep.subr.bf16.mxu0 0
    %3362 = vmatpush1.bf16.msra.mxu0 0
    %3363 = vmatprep.subr.bf16.mxu0 0
    %3364 = vmatpush1.bf16.msra.mxu0 0
    %3365 = vmatprep.subr.bf16.mxu0 0
    %3366 = vmatpush1.bf16.msra.mxu0 0
    %3367 = vmatprep.subr.bf16.mxu0 0
    %3368 = vmatpush1.bf16.msra.mxu0 %v3349
    %3369 = vmatprep.subr.bf16.mxu0 0
    %3370 = vmatpush1.bf16.msra.mxu0 %v3348
    %3371 = vmatprep.subr.bf16.mxu0 0
    %3372 = vmatpush2.bf16.msra.mxu0 0
    %3373 = vmatprep.subr.bf16.mxu0 0
    %3374 = vmatpush2.bf16.msra.mxu0 0
    %3375 = vmatprep.subr.bf16.mxu0 0
    %3376 = vmatpush2.bf16.msra.mxu0 0
    %3377 = vmatprep.subr.bf16.mxu0 0
    %3378 = vmatpush2.bf16.msra.mxu0 0
    %3379 = vmatprep.subr.bf16.mxu0 0
    %3380 = vmatpush2.bf16.msra.mxu0 0
    %3381 = vmatprep.subr.bf16.mxu0 0
    %3382 = vmatpush2.bf16.msra.mxu0 0
    %3383 = vmatprep.subr.bf16.mxu0 0
    %3384 = vmatpush2.bf16.msra.mxu0 0
    %3385 = vmatprep.subr.bf16.mxu0 0
    %3386 = vmatpush2.bf16.msra.mxu0 0
    %3387 = vmatprep.mubr.bf16.mxu0 0
    %3388 = vmatmul.mubr.bf16.gmra.mxu0 %v3353
    %v3389 = vpop.f32.mrf.mxu0
    %v3390 = vadd.f32 %v3338, %v3389
    %v3391 = vpop.f32.mrf.mxu0
    %v3392 = vpop.f32.mrf.mxu0
    %v3393 = vadd.f32 %v3338, %v3392
    %v3394 = vpop.f32.mrf.mxu0
    %3395 = vdwg.mxu0
    %v3396 = vadd.f32 %v3390, %v1890
    %v3397 = vadd.f32 %v3393, %v1891
    %s3398 = scalar_lea.vmem %s8, 1
    %v3399 = vld [vmem:[%s3398] sm:$0x1]
    %s3400 = scalar_lea.vmem %s9, 1
    %v3401 = vld [vmem:[%s3400] sm:$0x1]
    %v3402 = vsel %vm74, %v3396, 0.0
    %3403 = vadd.xlane.f32.xlu0 %v3402
    %v3404 = vpop.xlane.xlu0 %3403
    %v3405 = vsel %vm74, %v3397, 0.0
    %3406 = vadd.xlane.f32.xlu0 %v3405
    %v3407 = vpop.xlane.xlu0 %3406
    %v3408 = vmul.f32 %v3404, %v81
    %v3409 = vmul.f32 %v3407, %v81
    %v3410 = vsub.f32 %v3396, %v3408
    %v3411 = vsub.f32 %v3397, %v3409
    %v3412 = vmul.f32 %v3410, %v3410
    %v3413 = vmul.f32 %v3411, %v3411
    %v3414 = vsel %vm74, %v3412, 0.0
    %3415 = vadd.xlane.f32.xlu0 %v3414
    %v3416 = vpop.xlane.xlu0 %3415
    %v3417 = vsel %vm74, %v3413, 0.0
    %3418 = vadd.xlane.f32.xlu0 %v3417
    %v3419 = vpop.xlane.xlu0 %3418
    %v3420 = vmul.f32 %v3416, %v81
    %v3421 = vmul.f32 %v3419, %v81
    %v3422 = vadd.f32 %v3420, 1e-12
    %v3423 = vadd.f32 %v3421, 1e-12
    %v3424 = vrsqrt.pop %v3422
    %v3425 = vrsqrt.pop %v3423
    %v3426 = vmul.f32 %v3410, %v3424
    %v3427 = vmul.f32 %v3411, %v3425
    %v3429 = vlaneseq
    %v3430 = vshrl.u32 %v3429, 7
    %v3431 = vsub.s32 0, %v3430
    %v3432 = vrot.slane %v3399, %v3431
    %v3434 = vmul.f32 %v3426, %v3432
    %v3435 = vmul.f32 %v3427, %v3432
    %v3437 = vlaneseq
    %v3438 = vshrl.u32 %v3437, 7
    %v3439 = vsub.s32 0, %v3438
    %v3440 = vrot.slane %v3401, %v3439
    %v3442 = vadd.f32 %v3434, %v3440
    %v3443 = vadd.f32 %v3435, %v3440
    %s3444 = scalar_lea.vmem %s10, 16
    %v3445 = vld [vmem:[%s3444] sm:$0xf]
    %v3446 = vld [vmem:[%s3444 + $0x4] sm:$0xf]
    %v3447 = vld [vmem:[%s3444 + $0x8] sm:$0xf]
    %v3448 = vld [vmem:[%s3444 + $0xc] sm:$0xf]
    %v3449 = vpack.c.bf16 %v3443, %v3442
    %s3450 = scalar_lea.vmem %s11, 1
    %v3451 = vld [vmem:[%s3450] sm:$0x1]
    %v3453 = vlaneseq
    %v3454 = vshrl.u32 %v3453, 7
    %v3455 = vsub.s32 0, %v3454
    %v3456 = vrot.slane %v3451, %v3455
    %v3462 = vunpack.c.l.b16 %v3445
    %v3463 = vunpack.c.l.b16 %v3446
    %v3464 = vunpack.c.l.b16 %v3447
    %v3465 = vunpack.c.l.b16 %v3448
    %v3466 = vpack.c.b16 %v3463, %v3462
    %v3467 = vpack.c.b16 %v3465, %v3464
    %v3471 = vsel %vm74, %v3449, 0
    %3473 = vmatprep.subr.bf16.mxu0 0
    %3474 = vmatpush1.bf16.msra.mxu0 0
    %3475 = vmatprep.subr.bf16.mxu0 0
    %3476 = vmatpush1.bf16.msra.mxu0 0
    %3477 = vmatprep.subr.bf16.mxu0 0
    %3478 = vmatpush1.bf16.msra.mxu0 0
    %3479 = vmatprep.subr.bf16.mxu0 0
    %3480 = vmatpush1.bf16.msra.mxu0 0
    %3481 = vmatprep.subr.bf16.mxu0 0
    %3482 = vmatpush1.bf16.msra.mxu0 0
    %3483 = vmatprep.subr.bf16.mxu0 0
    %3484 = vmatpush1.bf16.msra.mxu0 0
    %3485 = vmatprep.subr.bf16.mxu0 0
    %3486 = vmatpush1.bf16.msra.mxu0 %v3467
    %3487 = vmatprep.subr.bf16.mxu0 0
    %3488 = vmatpush1.bf16.msra.mxu0 %v3466
    %3489 = vmatprep.subr.bf16.mxu0 0
    %3490 = vmatpush2.bf16.msra.mxu0 0
    %3491 = vmatprep.subr.bf16.mxu0 0
    %3492 = vmatpush2.bf16.msra.mxu0 0
    %3493 = vmatprep.subr.bf16.mxu0 0
    %3494 = vmatpush2.bf16.msra.mxu0 0
    %3495 = vmatprep.subr.bf16.mxu0 0
    %3496 = vmatpush2.bf16.msra.mxu0 0
    %3497 = vmatprep.subr.bf16.mxu0 0
    %3498 = vmatpush2.bf16.msra.mxu0 0
    %3499 = vmatprep.subr.bf16.mxu0 0
    %3500 = vmatpush2.bf16.msra.mxu0 0
    %3501 = vmatprep.subr.bf16.mxu0 0
    %3502 = vmatpush2.bf16.msra.mxu0 0
    %3503 = vmatprep.subr.bf16.mxu0 0
    %3504 = vmatpush2.bf16.msra.mxu0 0
    %3505 = vmatprep.mubr.bf16.mxu0 0
    %3506 = vmatmul.mubr.bf16.gmra.mxu0 %v3471
    %v3507 = vpop.f32.mrf.mxu0
    %v3508 = vadd.f32 %v3456, %v3507
    %v3509 = vpop.f32.mrf.mxu0
    %v3510 = vpop.f32.mrf.mxu0
    %v3511 = vadd.f32 %v3456, %v3510
    %v3512 = vpop.f32.mrf.mxu0
    %3513 = vdwg.mxu0
    %v3514 = vmul.f32 %v3508, 0.5
    %v3515 = vmul.f32 %v3511, 0.5
    %v3516 = vmul.f32 %v3508, 0.044715
    %v3517 = vmul.f32 %v3511, 0.044715
    %v3518 = vmul.f32 %v3516, %v3508
    %v3519 = vmul.f32 %v3517, %v3511
    %v3520 = vmul.f32 %v3518, %v3508
    %v3521 = vmul.f32 %v3519, %v3511
    %v3522 = vadd.f32 %v3508, %v3520
    %v3523 = vadd.f32 %v3511, %v3521
    %v3524 = vmul.f32 %v3522, 0.7978846
    %v3525 = vmul.f32 %v3523, 0.7978846
    %v3526 = vtanh.pop %v3524
    %v3527 = vtanh.pop %v3525
    %v3528 = vadd.f32 %v3526, 1.0
    %v3529 = vadd.f32 %v3527, 1.0
    %v3530 = vmul.f32 %v3514, %v3528
    %v3531 = vmul.f32 %v3515, %v3529
    %s3532 = scalar_lea.vmem %s12, 32
    %v3533 = vld [vmem:[%s3532] sm:$0xf]
    %v3534 = vld [vmem:[%s3532 + $0x4] sm:$0xf]
    %v3535 = vld [vmem:[%s3532 + $0x8] sm:$0xf]
    %v3536 = vld [vmem:[%s3532 + $0xc] sm:$0xf]
    %v3537 = vld [vmem:[%s3532 + $0x10] sm:$0xf]
    %v3538 = vld [vmem:[%s3532 + $0x14] sm:$0xf]
    %v3539 = vld [vmem:[%s3532 + $0x18] sm:$0xf]
    %v3540 = vld [vmem:[%s3532 + $0x1c] sm:$0xf]
    %v3541 = vpack.c.bf16 %v3531, %v3530
    %s3542 = scalar_lea.vmem %s13, 1
    %v3543 = vld [vmem:[%s3542] sm:$0x1]
    %v3545 = vlaneseq
    %v3546 = vshrl.u32 %v3545, 7
    %v3547 = vsub.s32 0, %v3546
    %v3548 = vrot.slane %v3543, %v3547
    %v3558 = vunpack.c.l.b16 %v3533
    %v3559 = vunpack.c.l.b16 %v3534
    %v3560 = vunpack.c.l.b16 %v3535
    %v3561 = vunpack.c.l.b16 %v3536
    %v3562 = vunpack.c.l.b16 %v3537
    %v3563 = vunpack.c.l.b16 %v3538
    %v3564 = vunpack.c.l.b16 %v3539
    %v3565 = vunpack.c.l.b16 %v3540
    %v3566 = vpack.c.b16 %v3559, %v3558
    %v3567 = vpack.c.b16 %v3561, %v3560
    %v3568 = vpack.c.b16 %v3563, %v3562
    %v3569 = vpack.c.b16 %v3565, %v3564
    %v3575 = vsel %vm1801, %v3541, 0
    %3577 = vmatprep.subr.bf16.mxu0 0
    %3578 = vmatpush1.bf16.msra.mxu0 0
    %3579 = vmatprep.subr.bf16.mxu0 0
    %3580 = vmatpush1.bf16.msra.mxu0 0
    %3581 = vmatprep.subr.bf16.mxu0 0
    %3582 = vmatpush1.bf16.msra.mxu0 0
    %3583 = vmatprep.subr.bf16.mxu0 0
    %3584 = vmatpush1.bf16.msra.mxu0 0
    %3585 = vmatprep.subr.bf16.mxu0 0
    %3586 = vmatpush1.bf16.msra.mxu0 %v3569
    %3587 = vmatprep.subr.bf16.mxu0 0
    %3588 = vmatpush1.bf16.msra.mxu0 %v3568
    %3589 = vmatprep.subr.bf16.mxu0 0
    %3590 = vmatpush1.bf16.msra.mxu0 %v3567
    %3591 = vmatprep.subr.bf16.mxu0 0
    %3592 = vmatpush1.bf16.msra.mxu0 %v3566
    %3593 = vmatprep.subr.bf16.mxu0 0
    %3594 = vmatpush2.bf16.msra.mxu0 0
    %3595 = vmatprep.subr.bf16.mxu0 0
    %3596 = vmatpush2.bf16.msra.mxu0 0
    %3597 = vmatprep.subr.bf16.mxu0 0
    %3598 = vmatpush2.bf16.msra.mxu0 0
    %3599 = vmatprep.subr.bf16.mxu0 0
    %3600 = vmatpush2.bf16.msra.mxu0 0
    %3601 = vmatprep.subr.bf16.mxu0 0
    %3602 = vmatpush2.bf16.msra.mxu0 0
    %3603 = vmatprep.subr.bf16.mxu0 0
    %3604 = vmatpush2.bf16.msra.mxu0 0
    %3605 = vmatprep.subr.bf16.mxu0 0
    %3606 = vmatpush2.bf16.msra.mxu0 0
    %3607 = vmatprep.subr.bf16.mxu0 0
    %3608 = vmatpush2.bf16.msra.mxu0 0
    %3609 = vmatprep.mubr.bf16.mxu0 0
    %3610 = vmatmul.mubr.bf16.gmra.mxu0 %v3575
    %v3611 = vpop.f32.mrf.mxu0
    %v3612 = vadd.f32 %v3548, %v3611
    %v3613 = vpop.f32.mrf.mxu0
    %v3614 = vpop.f32.mrf.mxu0
    %v3615 = vadd.f32 %v3548, %v3614
    %v3616 = vpop.f32.mrf.mxu0
    %3617 = vdwg.mxu0
    %v3618 = vadd.f32 %v3612, %v3442
    %v3619 = vadd.f32 %v3615, %v3443
    %s3620 = scalar_lea.vmem %s14, 1
    %v3621 = vld [vmem:[%s3620] sm:$0x1]
    %s3622 = scalar_lea.vmem %s15, 1
    %v3623 = vld [vmem:[%s3622] sm:$0x1]
    %v3624 = vsel %vm74, %v3618, 0.0
    %3625 = vadd.xlane.f32.xlu0 %v3624
    %v3626 = vpop.xlane.xlu0 %3625
    %v3627 = vsel %vm74, %v3619, 0.0
    %3628 = vadd.xlane.f32.xlu0 %v3627
    %v3629 = vpop.xlane.xlu0 %3628
    %v3630 = vmul.f32 %v3626, %v81
    %v3631 = vmul.f32 %v3629, %v81
    %v3632 = vsub.f32 %v3618, %v3630
    %v3633 = vsub.f32 %v3619, %v3631
    %v3634 = vmul.f32 %v3632, %v3632
    %v3635 = vmul.f32 %v3633, %v3633
    %v3636 = vsel %vm74, %v3634, 0.0
    %3637 = vadd.xlane.f32.xlu0 %v3636
    %v3638 = vpop.xlane.xlu0 %3637
    %v3639 = vsel %vm74, %v3635, 0.0
    %3640 = vadd.xlane.f32.xlu0 %v3639
    %v3641 = vpop.xlane.xlu0 %3640
    %v3642 = vmul.f32 %v3638, %v81
    %v3643 = vmul.f32 %v3641, %v81
    %v3644 = vadd.f32 %v3642, 1e-12
    %v3645 = vadd.f32 %v3643, 1e-12
    %v3646 = vrsqrt.pop %v3644
    %v3647 = vrsqrt.pop %v3645
    %v3648 = vmul.f32 %v3632, %v3646
    %v3649 = vmul.f32 %v3633, %v3647
    %v3651 = vlaneseq
    %v3652 = vshrl.u32 %v3651, 7
    %v3653 = vsub.s32 0, %v3652
    %v3654 = vrot.slane %v3621, %v3653
    %v3656 = vmul.f32 %v3648, %v3654
    %v3657 = vmul.f32 %v3649, %v3654
    %v3659 = vlaneseq
    %v3660 = vshrl.u32 %v3659, 7
    %v3661 = vsub.s32 0, %v3660
    %v3662 = vrot.slane %v3623, %v3661
    %v3664 = vadd.f32 %v3656, %v3662
    %v3665 = vadd.f32 %v3657, %v3662
    %v3667 = vrot.slane %v3665, 7
    %vm3669 = vcmask 1040384
    %v3670 = vsel %vm3669, %v3664, %v3667
    %v3671 = vld [vmem:[%s16] sm:$0xf]
    %v3672 = vld [vmem:[%s16 + $0x4] sm:$0xf]
    %v3673 = vld [vmem:[%s16 + $0x8] sm:$0xf]
    %v3674 = vld [vmem:[%s16 + $0xc] sm:$0xf]
    %v3675 = vpack.c.bf16 %v3670, %v3670
    %v3676 = vld [vmem:[%s17] sm:$0x1]
    %v3678 = vlaneseq
    %v3679 = vshrl.u32 %v3678, 7
    %v3680 = vsub.s32 0, %v3679
    %v3681 = vrot.slane %v3676, %v3680
    %v3687 = vunpack.c.l.b16 %v3671
    %v3688 = vunpack.c.l.b16 %v3672
    %v3689 = vunpack.c.l.b16 %v3673
    %v3690 = vunpack.c.l.b16 %v3674
    %v3691 = vpack.c.b16 %v3688, %v3687
    %v3692 = vpack.c.b16 %v3690, %v3689
    %v3696 = vsel %vm74, %v3675, 0
    %3698 = vmatprep.subr.bf16.mxu0 0
    %3699 = vmatpush1.bf16.msra.mxu0 0
    %3700 = vmatprep.subr.bf16.mxu0 0
    %3701 = vmatpush1.bf16.msra.mxu0 0
    %3702 = vmatprep.subr.bf16.mxu0 0
    %3703 = vmatpush1.bf16.msra.mxu0 0
    %3704 = vmatprep.subr.bf16.mxu0 0
    %3705 = vmatpush1.bf16.msra.mxu0 0
    %3706 = vmatprep.subr.bf16.mxu0 0
    %3707 = vmatpush1.bf16.msra.mxu0 0
    %3708 = vmatprep.subr.bf16.mxu0 0
    %3709 = vmatpush1.bf16.msra.mxu0 0
    %3710 = vmatprep.subr.bf16.mxu0 0
    %3711 = vmatpush1.bf16.msra.mxu0 %v3692
    %3712 = vmatprep.subr.bf16.mxu0 0
    %3713 = vmatpush1.bf16.msra.mxu0 %v3691
    %3714 = vmatprep.subr.bf16.mxu0 0
    %3715 = vmatpush2.bf16.msra.mxu0 0
    %3716 = vmatprep.subr.bf16.mxu0 0
    %3717 = vmatpush2.bf16.msra.mxu0 0
    %3718 = vmatprep.subr.bf16.mxu0 0
    %3719 = vmatpush2.bf16.msra.mxu0 0
    %3720 = vmatprep.subr.bf16.mxu0 0
    %3721 = vmatpush2.bf16.msra.mxu0 0
    %3722 = vmatprep.subr.bf16.mxu0 0
    %3723 = vmatpush2.bf16.msra.mxu0 0
    %3724 = vmatprep.subr.bf16.mxu0 0
    %3725 = vmatpush2.bf16.msra.mxu0 0
    %3726 = vmatprep.subr.bf16.mxu0 0
    %3727 = vmatpush2.bf16.msra.mxu0 0
    %3728 = vmatprep.subr.bf16.mxu0 0
    %3729 = vmatpush2.bf16.msra.mxu0 0
    %3730 = vmatprep.mubr.bf16.mxu0 0
    %3731 = vmatmul.mubr.bf16.gmra.mxu0 %v3696
    %v3732 = vpop.f32.mrf.mxu0
    %v3733 = vadd.f32 %v3681, %v3732
    %v3734 = vpop.f32.mrf.mxu0
    %v3735 = vpop.f32.mrf.mxu0
    %v3736 = vpop.f32.mrf.mxu0
    %3737 = vdwg.mxu0
    %v3738 = vtanh.pop %v3733
    %v3739 = vld [vmem:[%s18] sm:$0xf]
    %v3740 = vld [vmem:[%s18 + $0x4] sm:$0xf]
    %v3741 = vld [vmem:[%s18 + $0x8] sm:$0xf]
    %v3742 = vld [vmem:[%s18 + $0xc] sm:$0xf]
    %v3743 = vpack.c.bf16 %v3738, %v3738
    %v3744 = vld [vmem:[%s19] sm:$0x1]
    %v3746 = vlaneseq
    %v3747 = vshrl.u32 %v3746, 7
    %v3748 = vsub.s32 0, %v3747
    %v3749 = vrot.slane %v3744, %v3748
    %v3755 = vunpack.c.l.b16 %v3739
    %v3756 = vunpack.c.l.b16 %v3740
    %v3757 = vunpack.c.l.b16 %v3741
    %v3758 = vunpack.c.l.b16 %v3742
    %v3759 = vpack.c.b16 %v3756, %v3755
    %v3760 = vpack.c.b16 %v3758, %v3757
    %v3764 = vsel %vm74, %v3743, 0
    %3766 = vmatprep.subr.bf16.mxu0 0
    %3767 = vmatpush1.bf16.msra.mxu0 0
    %3768 = vmatprep.subr.bf16.mxu0 0
    %3769 = vmatpush1.bf16.msra.mxu0 0
    %3770 = vmatprep.subr.bf16.mxu0 0
    %3771 = vmatpush1.bf16.msra.mxu0 0
    %3772 = vmatprep.subr.bf16.mxu0 0
    %3773 = vmatpush1.bf16.msra.mxu0 0
    %3774 = vmatprep.subr.bf16.mxu0 0
    %3775 = vmatpush1.bf16.msra.mxu0 0
    %3776 = vmatprep.subr.bf16.mxu0 0
    %3777 = vmatpush1.bf16.msra.mxu0 0
    %3778 = vmatprep.subr.bf16.mxu0 0
    %3779 = vmatpush1.bf16.msra.mxu0 %v3760
    %3780 = vmatprep.subr.bf16.mxu0 0
    %3781 = vmatpush1.bf16.msra.mxu0 %v3759
    %3782 = vmatprep.subr.bf16.mxu0 0
    %3783 = vmatpush2.bf16.msra.mxu0 0
    %3784 = vmatprep.subr.bf16.mxu0 0
    %3785 = vmatpush2.bf16.msra.mxu0 0
    %3786 = vmatprep.subr.bf16.mxu0 0
    %3787 = vmatpush2.bf16.msra.mxu0 0
    %3788 = vmatprep.subr.bf16.mxu0 0
    %3789 = vmatpush2.bf16.msra.mxu0 0
    %3790 = vmatprep.subr.bf16.mxu0 0
    %3791 = vmatpush2.bf16.msra.mxu0 0
    %3792 = vmatprep.subr.bf16.mxu0 0
    %3793 = vmatpush2.bf16.msra.mxu0 0
    %3794 = vmatprep.subr.bf16.mxu0 0
    %3795 = vmatpush2.bf16.msra.mxu0 0
    %3796 = vmatprep.subr.bf16.mxu0 0
    %3797 = vmatpush2.bf16.msra.mxu0 0
    %3798 = vmatprep.mubr.bf16.mxu0 0
    %3799 = vmatmul.mubr.bf16.gmra.mxu0 %v3764
    %v3800 = vpop.f32.mrf.mxu0
    %v3801 = vadd.f32 %v3749, %v3800
    %v3802 = vpop.f32.mrf.mxu0
    %v3803 = vpop.f32.mrf.mxu0
    %v3804 = vpop.f32.mrf.mxu0
    %3805 = vdwg.mxu0
    %vm3806 = vcmask 58368
    %3807 = vst.msk [vmem:[#allocation2] sm:$0x3] %vm3806, %v3801
    // Predicated region
    $region82: #{classification_model.1} parent=1 // pred_check
      _
    $region83: #{classification_model.1} parent=1 // pred_check_branch
      %3809 = sbr.rel (0) target = $region85
    $region84: #{classification_model.1} parent=1 // pred_region
      %s3811 = ssub.s32 32, 32
      %3812 = vsyncadd [#allocation3], %s3811
      %s3814 = sshll.u32 [#allocation2], 4
      %s3815 = int_to_ptr.vmem [resolvable:$true] %s3814
      %3817 = dma.vmem_to_hbm [thread:$0]  %s3815, 32, %s20, [#allocation3]
    $region85: #{classification_model.1} parent=1 // pred_fallthru
      _
    // Predicated region
    $region86: #{classification_model.1} parent=1 // pred_check
      _
    $region87: #{classification_model.1} parent=1 // pred_check_branch
      %3819 = sbr.rel (0) target = $region89
    $region88: #{classification_model.1} parent=1 // pred_region
      %3820 = dma.done [#allocation3], 32
    $region89: #{classification_model.1} parent=1 // pred_fallthru
      _
    %3821 = vsyncpa [#allocation3], 1

</llo_original>
